<compile_context>
chip_gen: v7x
topology: tpu7x:2x2x1
jax: 0.10.0
libtpu: 0.0.40
codegen_flags: <defaults>
</compile_context>

<pallas_src>
from functools import partial

import numpy as np
import jax
import jax.numpy as jnp
from jax import lax
from jax.experimental import pallas as pl
from jax.experimental.pallas import tpu as pltpu


LN_EPS = 1e-5
NEG_INF = -1e9   # cross-window logits; exp underflows to exactly 0 in f32


def _layernorm(x, g, b):
    mu = jnp.mean(x, axis=-1, keepdims=True)
    var = jnp.mean((x - mu) * (x - mu), axis=-1, keepdims=True)
    return (x - mu) * lax.rsqrt(var + LN_EPS) * g + b


# ----------------------------------------------------------------------------
# Fused whole-layer kernel (one image per grid step)
# ----------------------------------------------------------------------------
def _basic_layer_kernel(x_ref, ln1g_ref, ln1b_ref, wqkv_ref, bqkv_ref,
                        projw_ref, projb_ref, bias_ref, ln2g_ref, ln2b_ref,
                        fc1w_ref, fc1b_ref, fc2w_ref, fc2b_ref, o_ref,
                        *, depth, num_heads):
    L, C = x_ref.shape[1], x_ref.shape[2]
    hd = C // num_heads

    # Tiny per-block vectors: load once, slice statically (stay 2-D).
    ln1g = ln1g_ref[...]; ln1b = ln1b_ref[...]
    ln2g = ln2g_ref[...]; ln2b = ln2b_ref[...]
    bqkv = bqkv_ref[...]; projb = projb_ref[...]
    fc1b = fc1b_ref[...]; fc2b = fc2b_ref[...]

    x = x_ref[0]                                          # (L, C) f32 residual stream

    for d in range(depth):                                # static unroll over blocks
        # ---- LayerNorm1 (per-token; commutes with the window permutation) ----
        xn = _layernorm(x, ln1g[d:d + 1, :], ln1b[d:d + 1, :])

        # ---- fused QKV projection (scale already folded into the q third) ----
        qkv = jnp.dot(xn.astype(jnp.bfloat16), wqkv_ref[d],
                      preferred_element_type=jnp.float32) + bqkv[d:d + 1, :]
        qkv = qkv.astype(jnp.bfloat16)                    # one cast for q, k and v

        # ---- dense masked multi-head attention over all L tokens ----
        # Shift / window partition / window reverse live entirely inside the
        # precomputed additive bias (cross-window logits are -1e9).
        attn = None
        for h in range(num_heads):                        # static unroll over heads
            qh = qkv[:, h * hd:(h + 1) * hd]
            kh = qkv[:, C + h * hd:C + (h + 1) * hd]
            vh = qkv[:, 2 * C + h * hd:2 * C + (h + 1) * hd]

            s = lax.dot_general(qh, kh, (((1,), (1,)), ((), ())),
                                preferred_element_type=jnp.float32)   # (L, L)
            s = s + bias_ref[d * num_heads + h]           # rel-pos bias + shift mask

            # softmax in f32; reciprocal on the EUP
            # TODO(synk): IntSoftmax (log-int-softmax) integer approximation.
            m = jnp.max(s, axis=-1, keepdims=True)
            e = jnp.exp(s - m)
            p = e * pl.reciprocal(jnp.sum(e, axis=-1, keepdims=True), approx=True)

            oh = jnp.dot(p.astype(jnp.bfloat16), vh,
                         preferred_element_type=jnp.float32)          # (L, hd)
            # head-concat folded into per-head partial output projection
            t = jnp.dot(oh.astype(jnp.bfloat16), projw_ref[d * num_heads + h],
                        preferred_element_type=jnp.float32)           # (L, C)
            attn = t if attn is None else attn + t
        attn = attn + projb[d:d + 1, :]

        # ---- residual 1 (qact2 add) ----
        x2 = x + attn

        # ---- LayerNorm2 + MLP (fc1 / GELU / fc2) + residual 2 ----
        xn2 = _layernorm(x2, ln2g[d:d + 1, :], ln2b[d:d + 1, :])
        h1 = jnp.dot(xn2.astype(jnp.bfloat16), fc1w_ref[d],
                     preferred_element_type=jnp.float32) + fc1b[d:d + 1, :]
        h1 = jax.nn.gelu(h1, approximate=True)            # TODO(synk): IntGELU integer approx
        y = jnp.dot(h1.astype(jnp.bfloat16), fc2w_ref[d],
                    preferred_element_type=jnp.float32) + fc2b[d:d + 1, :]
        x = x2 + y                                        # residual 2 (qact4 add)

    o_ref[0] = x.astype(o_ref.dtype)


def basic_layer_forward(x, act_scaling_factor, params, num_heads):
    """Whole BasicLayer (depth blocks) in a single pallas_call, grid=(B,)."""
    B, L, C = x.shape
    depth = params["wqkv"].shape[0]

    order = ["ln1_g", "ln1_b", "wqkv", "bqkv", "proj_w", "proj_b", "bias",
             "ln2_g", "ln2_b", "fc1_w", "fc1_b", "fc2_w", "fc2_b"]
    operands = [params[k] for k in order]

    def _const_spec(a):
        nd = a.ndim
        return pl.BlockSpec(a.shape, lambda b, _nd=nd: (0,) * _nd)

    out = pl.pallas_call(
        partial(_basic_layer_kernel, depth=depth, num_heads=num_heads),
        out_shape=jax.ShapeDtypeStruct((B, L, C), x.dtype),
        grid=(B,),
        in_specs=[pl.BlockSpec((1, L, C), lambda b: (b, 0, 0))]
                 + [_const_spec(a) for a in operands],
        out_specs=pl.BlockSpec((1, L, C), lambda b: (b, 0, 0)),
        compiler_params=pltpu.CompilerParams(
            dimension_semantics=("parallel",)),           # v7x: images across 2 TCs
    )(x, *operands)

    # downsample=None in this configuration; scaling factor threaded through.
    # TODO(synk): propagate real QuantAct scaling factors once quant math is added.
    return out, act_scaling_factor


# ----------------------------------------------------------------------------
# Static (numpy) helpers: rel-pos index, shift mask, windowed-token permutation
# ----------------------------------------------------------------------------
def make_relative_position_index(ws):
    coords = np.stack(np.meshgrid(np.arange(ws), np.arange(ws), indexing="ij"))
    coords_flatten = coords.reshape(2, -1)
    rel = coords_flatten[:, :, None] - coords_flatten[:, None, :]
    rel = rel.transpose(1, 2, 0).astype(np.int64)
    rel[:, :, 0] += ws - 1
    rel[:, :, 1] += ws - 1
    rel[:, :, 0] *= 2 * ws - 1
    return rel.sum(-1)                                    # (N, N)


def make_shift_attn_mask(H, W, ws, shift):
    img_mask = np.zeros((1, H, W, 1), dtype=np.float32)
    h_slices = (slice(0, -ws), slice(-ws, -shift), slice(-shift, None))
    w_slices = (slice(0, -ws), slice(-ws, -shift), slice(-shift, None))
    cnt = 0
    for h in h_slices:
        for w in w_slices:
            img_mask[:, h, w, :] = cnt
            cnt += 1
    m = img_mask.reshape(1, H // ws, ws, W // ws, ws, 1)
    m = m.transpose(0, 1, 3, 2, 4, 5).reshape(-1, ws * ws)        # (nW, N)
    attn_mask = m[:, None, :] - m[:, :, None]                     # (nW, N, N)
    return np.where(attn_mask != 0, -100.0, 0.0).astype(np.float32)


def windowed_token_index(H, W, ws, shift):
    """perm[wi, p] = original (row-major) token index sitting at window wi,
    local position p after torch.roll(-shift) + window_partition."""
    idx = np.arange(H * W).reshape(H, W)
    if shift > 0:
        idx = np.roll(idx, (-shift, -shift), axis=(0, 1))
    idx = idx.reshape(H // ws, ws, W // ws, ws).transpose(0, 2, 1, 3)
    return idx.reshape(-1, ws * ws)                               # (nW, N)


# ----------------------------------------------------------------------------
# Deterministic parameter construction (stacked along the depth axis)
# ----------------------------------------------------------------------------
def init_layer_params(key, dim, depth, num_heads, ws, mlp_ratio, H, W):
    hidden = int(dim * mlp_ratio)
    N = ws * ws
    nW = (H // ws) * (W // ws)
    L = H * W
    hd = dim // num_heads
    scale = hd ** (-0.5)
    rel_idx = make_relative_position_index(ws).reshape(-1)

    per_block, ref_blocks = [], []
    for i in range(depth):
        shift = 0 if i % 2 == 0 else ws // 2
        keys = jax.random.split(jax.random.fold_in(key, i), 11)

        table = 0.02 * jax.random.normal(
            keys[0], ((2 * ws - 1) * (2 * ws - 1), num_heads), jnp.float32)
        rel_bias = table[rel_idx].reshape(N, N, num_heads).transpose(2, 0, 1)  # (nh,N,N)

        # Dense per-image additive bias in ORIGINAL token order: rel-pos bias
        # (+ shift mask) inside each shifted window, -1e9 across windows.
        perm = windowed_token_index(H, W, ws, shift)              # (nW, N) np
        mwin = (make_shift_attn_mask(H, W, ws, shift) if shift > 0
                else np.zeros((nW, N, N), np.float32))
        dense = jnp.full((num_heads, L, L), NEG_INF, jnp.float32)
        for wi in range(nW):
            rows = perm[wi]
            dense = dense.at[:, rows[:, None], rows[None, :]].set(
                rel_bias + jnp.asarray(mwin[wi])[None])

        wq = 0.05 * jax.random.normal(keys[1], (dim, dim), jnp.float32)
        wk = 0.05 * jax.random.normal(keys[2], (dim, dim), jnp.float32)
        wv = 0.05 * jax.random.normal(keys[3], (dim, dim), jnp.float32)
        bq = 0.01 * jax.random.normal(keys[4], (dim,), jnp.float32)
        bk = 0.01 * jax.random.normal(keys[5], (dim,), jnp.float32)
        bv = 0.01 * jax.random.normal(keys[6], (dim,), jnp.float32)
        proj_w = 0.05 * jax.random.normal(keys[7], (dim, dim), jnp.float32)
        proj_b = 0.01 * jax.random.normal(keys[8], (dim,), jnp.float32)
        fc1_w = 0.05 * jax.random.normal(keys[9], (dim, hidden), jnp.float32)
        fc2_w = 0.05 * jax.random.normal(keys[10], (hidden, dim), jnp.float32)

        # Attention scale folded into the q part of the fused QKV weight/bias.
        wqkv = jnp.concatenate([wq * scale, wk, wv], axis=1).astype(jnp.bfloat16)
        bqkv = jnp.concatenate([bq * scale, bk, bv], axis=0)
        proj_w_bf = proj_w.astype(jnp.bfloat16)

        blk = dict(
            ln1_g=jnp.ones((dim,), jnp.float32), ln1_b=jnp.zeros((dim,), jnp.float32),
            wqkv=wqkv, bqkv=bqkv,
            proj_w=proj_w_bf.reshape(num_heads, hd, dim),          # per-head split
            proj_b=proj_b, bias=dense,
            ln2_g=jnp.ones((dim,), jnp.float32), ln2_b=jnp.zeros((dim,), jnp.float32),
            fc1_w=fc1_w.astype(jnp.bfloat16), fc1_b=jnp.zeros((hidden,), jnp.float32),
            fc2_w=fc2_w.astype(jnp.bfloat16), fc2_b=jnp.zeros((dim,), jnp.float32),
        )
        per_block.append(blk)
        ref_blocks.append(dict(
            shift=shift, wqkv=wqkv, bqkv=bqkv, proj_w=proj_w_bf, proj_b=proj_b,
            rel_bias=rel_bias, mask=jnp.asarray(mwin) if shift > 0 else None,
            ln1_g=blk["ln1_g"], ln1_b=blk["ln1_b"],
            ln2_g=blk["ln2_g"], ln2_b=blk["ln2_b"],
            fc1_w=blk["fc1_w"], fc1_b=blk["fc1_b"],
            fc2_w=blk["fc2_w"], fc2_b=blk["fc2_b"],
        ))

    stack = lambda name: jnp.stack([pb[name] for pb in per_block], axis=0)
    params = {name: stack(name) for name in per_block[0]}
    # flatten (depth, nh, ...) -> (depth*nh, ...) for single-int ref indexing
    params["bias"] = params["bias"].reshape(depth * num_heads, L, L)
    params["proj_w"] = params["proj_w"].reshape(depth * num_heads, hd, dim)
    return params, ref_blocks


# ----------------------------------------------------------------------------
# Pure-JAX reference (PyTorch-style roll / window partition) for a sanity check
# ----------------------------------------------------------------------------
def _window_partition(x, ws):
    B, H, W, C = x.shape
    x = x.reshape(B, H // ws, ws, W // ws, ws, C)
    return x.transpose(0, 1, 3, 2, 4, 5).reshape(-1, ws * ws, C)


def _window_reverse(win, ws, H, W):
    C = win.shape[-1]
    B = win.shape[0] // ((H // ws) * (W // ws))
    x = win.reshape(B, H // ws, W // ws, ws, ws, C)
    return x.transpose(0, 1, 3, 2, 4, 5).reshape(B, H, W, C)


def _reference_block(x, rp, H, W, ws, num_heads):
    B, L, C = x.shape
    N = ws * ws
    hd = C // num_heads
    shift = rp["shift"]

    xn = _layernorm(x, rp["ln1_g"], rp["ln1_b"])
    xr = xn.reshape(B, H, W, C)
    if shift > 0:
        xr = jnp.roll(xr, shift=(-shift, -shift), axis=(1, 2))
    xw = _window_partition(xr, ws)                                  # (Bw, N, C)
    Bw = xw.shape[0]

    qkv = jnp.dot(xw.astype(jnp.bfloat16), rp["wqkv"],
                  preferred_element_type=jnp.float32) + rp["bqkv"]
    qkv = qkv.astype(jnp.bfloat16)
    qkv = qkv.reshape(Bw, N, 3, num_heads, hd).transpose(2, 0, 3, 1, 4)
    q, k, v = qkv[0], qkv[1], qkv[2]                                # (Bw, nh, N, hd)

    attn = jnp.einsum("bhnd,bhmd->bhnm", q, k, preferred_element_type=jnp.float32)
    attn = attn + rp["rel_bias"][None]
    if shift > 0:
        nW = rp["mask"].shape[0]
        attn = attn.reshape(Bw // nW, nW, num_heads, N, N) + rp["mask"][None, :, None]
        attn = attn.reshape(Bw, num_heads, N, N)
    p = jax.nn.softmax(attn, axis=-1)
    o = jnp.einsum("bhnm,bhmd->bhnd", p.astype(jnp.bfloat16), v,
                   preferred_element_type=jnp.float32)
    o = o.transpose(0, 2, 1, 3).reshape(Bw, N, C)
    o = jnp.dot(o.astype(jnp.bfloat16), rp["proj_w"],
                preferred_element_type=jnp.float32) + rp["proj_b"]

    o = _window_reverse(o, ws, H, W)
    if shift > 0:
        o = jnp.roll(o, shift=(shift, shift), axis=(1, 2))
    x2 = x + o.reshape(B, L, C)

    xn2 = _layernorm(x2, rp["ln2_g"], rp["ln2_b"])
    h1 = jnp.dot(xn2.astype(jnp.bfloat16), rp["fc1_w"],
                 preferred_element_type=jnp.float32) + rp["fc1_b"]
    h1 = jax.nn.gelu(h1, approximate=True)
    y = jnp.dot(h1.astype(jnp.bfloat16), rp["fc2_w"],
                preferred_element_type=jnp.float32) + rp["fc2_b"]
    return x2 + y


def reference_forward(x, ref_blocks, H, W, ws, num_heads):
    for rp in ref_blocks:
        x = _reference_block(x, rp, H, W, ws, num_heads)
    return x


# ----------------------------------------------------------------------------
if __name__ == "__main__":
    # BasicLayer(dim=32, input_resolution=(8, 8), depth=2, num_heads=4, window_size=4)
    dim, H, W, depth, num_heads, ws, mlp_ratio = 32, 8, 8, 2, 4, 4, 4.0
    B = 2
    L = H * W

    key = jax.random.PRNGKey(0)
    kx, kp = jax.random.split(key)
    x = jax.random.normal(kx, (B, L, dim), jnp.float32)
    act_scaling_factor = jnp.float32(1.0)  # QuantAct scaling factor (passthrough here)

    params, ref_blocks = init_layer_params(kp, dim, depth, num_heads, ws, mlp_ratio, H, W)

    out, out_sf = basic_layer_forward(x, act_scaling_factor, params, num_heads)
    out = jax.block_until_ready(out)
    assert out.shape == (B, L, dim)
    assert jnp.all(jnp.isfinite(out))

    # Sanity check against a pure-JAX reference using the PyTorch-style
    # roll / window_partition / window_reverse path (loose tolerance: the kernel
    # uses pl.reciprocal(approx=True) and partial-sum head projections).
    ref = jax.block_until_ready(reference_forward(x, ref_blocks, H, W, ws, num_heads))
    np.testing.assert_allclose(np.asarray(out), np.asarray(ref), rtol=5e-2, atol=5e-2)

    print("KERNEL_OK")
</pallas_src>

<mosaic_0001>
module attributes {stable_mosaic.version = 11 : i64} {
  func.func @_basic_layer_kernel(%arg0: i32, %arg1: memref<1x64x32xf32, #tpu.memory_space<vmem>>, %arg2: memref<2x32xf32, #tpu.memory_space<vmem>>, %arg3: memref<2x32xf32, #tpu.memory_space<vmem>>, %arg4: memref<2x32x96xbf16, #tpu.memory_space<vmem>>, %arg5: memref<2x96xf32, #tpu.memory_space<vmem>>, %arg6: memref<8x8x32xbf16, #tpu.memory_space<vmem>>, %arg7: memref<2x32xf32, #tpu.memory_space<vmem>>, %arg8: memref<8x64x64xf32, #tpu.memory_space<vmem>>, %arg9: memref<2x32xf32, #tpu.memory_space<vmem>>, %arg10: memref<2x32xf32, #tpu.memory_space<vmem>>, %arg11: memref<2x32x128xbf16, #tpu.memory_space<vmem>>, %arg12: memref<2x128xf32, #tpu.memory_space<vmem>>, %arg13: memref<2x128x32xbf16, #tpu.memory_space<vmem>>, %arg14: memref<2x32xf32, #tpu.memory_space<vmem>>, %arg15: memref<1x64x32xf32, #tpu.memory_space<vmem>>) attributes {dimension_semantics = [#tpu.dimension_semantics<parallel>], iteration_bounds = array<i64: 2>, scalar_prefetch = 0 : i64, scratch_operands = 0 : i64, tpu.core_type = #tpu.core_type<tc>, window_params = [{transform_indices = @transform_0, window_bounds = array<i64: 1, 64, 32>}, {pipeline_mode = #tpu.pipeline_mode<synchronous>, transform_indices = @transform_1, window_bounds = array<i64: 2, 32>}, {pipeline_mode = #tpu.pipeline_mode<synchronous>, transform_indices = @transform_2, window_bounds = array<i64: 2, 32>}, {pipeline_mode = #tpu.pipeline_mode<synchronous>, transform_indices = @transform_3, window_bounds = array<i64: 2, 32, 96>}, {pipeline_mode = #tpu.pipeline_mode<synchronous>, transform_indices = @transform_4, window_bounds = array<i64: 2, 96>}, {pipeline_mode = #tpu.pipeline_mode<synchronous>, transform_indices = @transform_5, window_bounds = array<i64: 8, 8, 32>}, {pipeline_mode = #tpu.pipeline_mode<synchronous>, transform_indices = @transform_6, window_bounds = array<i64: 2, 32>}, {pipeline_mode = #tpu.pipeline_mode<synchronous>, transform_indices = @transform_7, window_bounds = array<i64: 8, 64, 64>}, {pipeline_mode = #tpu.pipeline_mode<synchronous>, transform_indices = @transform_8, window_bounds = array<i64: 2, 32>}, {pipeline_mode = #tpu.pipeline_mode<synchronous>, transform_indices = @transform_9, window_bounds = array<i64: 2, 32>}, {pipeline_mode = #tpu.pipeline_mode<synchronous>, transform_indices = @transform_10, window_bounds = array<i64: 2, 32, 128>}, {pipeline_mode = #tpu.pipeline_mode<synchronous>, transform_indices = @transform_11, window_bounds = array<i64: 2, 128>}, {pipeline_mode = #tpu.pipeline_mode<synchronous>, transform_indices = @transform_12, window_bounds = array<i64: 2, 128, 32>}, {pipeline_mode = #tpu.pipeline_mode<synchronous>, transform_indices = @transform_13, window_bounds = array<i64: 2, 32>}, {transform_indices = @transform_14, window_bounds = array<i64: 1, 64, 32>}]} {
    %c0 = arith.constant 0 : index
    %c0_0 = arith.constant 0 : index
    %0 = vector.load %arg2[%c0, %c0_0] : memref<2x32xf32, #tpu.memory_space<vmem>>, vector<2x32xf32>
    %c0_1 = arith.constant 0 : index
    %c0_2 = arith.constant 0 : index
    %1 = vector.load %arg3[%c0_1, %c0_2] : memref<2x32xf32, #tpu.memory_space<vmem>>, vector<2x32xf32>
    %c0_3 = arith.constant 0 : index
    %c0_4 = arith.constant 0 : index
    %2 = vector.load %arg9[%c0_3, %c0_4] : memref<2x32xf32, #tpu.memory_space<vmem>>, vector<2x32xf32>
    %c0_5 = arith.constant 0 : index
    %c0_6 = arith.constant 0 : index
    %3 = vector.load %arg10[%c0_5, %c0_6] : memref<2x32xf32, #tpu.memory_space<vmem>>, vector<2x32xf32>
    %c0_7 = arith.constant 0 : index
    %c0_8 = arith.constant 0 : index
    %4 = vector.load %arg5[%c0_7, %c0_8] : memref<2x96xf32, #tpu.memory_space<vmem>>, vector<2x96xf32>
    %c0_9 = arith.constant 0 : index
    %c0_10 = arith.constant 0 : index
    %5 = vector.load %arg7[%c0_9, %c0_10] : memref<2x32xf32, #tpu.memory_space<vmem>>, vector<2x32xf32>
    %c0_11 = arith.constant 0 : index
    %c0_12 = arith.constant 0 : index
    %6 = vector.load %arg12[%c0_11, %c0_12] : memref<2x128xf32, #tpu.memory_space<vmem>>, vector<2x128xf32>
    %c0_13 = arith.constant 0 : index
    %c0_14 = arith.constant 0 : index
    %7 = vector.load %arg14[%c0_13, %c0_14] : memref<2x32xf32, #tpu.memory_space<vmem>>, vector<2x32xf32>
    %c0_15 = arith.constant 0 : index
    %c0_16 = arith.constant 0 : index
    %c0_17 = arith.constant 0 : index
    %8 = vector.load %arg1[%c0_15, %c0_16, %c0_17] : memref<1x64x32xf32, #tpu.memory_space<vmem>>, vector<1x64x32xf32>
    %9 = vector.shape_cast %8 : vector<1x64x32xf32> to vector<64x32xf32>
    %10 = vector.extract_strided_slice %0 {offsets = [0, 0], sizes = [1, 32], strides = [1, 1]} : vector<2x32xf32> to vector<1x32xf32>
    %11 = vector.extract_strided_slice %1 {offsets = [0, 0], sizes = [1, 32], strides = [1, 1]} : vector<2x32xf32> to vector<1x32xf32>
    %cst = arith.constant dense<0.000000e+00> : vector<64xf32>
    %12 = vector.multi_reduction <add>, %9, %cst [1] : vector<64x32xf32> to vector<64xf32>
    %13 = vector.shape_cast %12 : vector<64xf32> to vector<64x1xf32>
    %cst_18 = arith.constant 3.200000e+01 : f32
    %14 = vector.broadcast %cst_18 : f32 to vector<64x1xf32>
    %15 = arith.divf %13, %14 : vector<64x1xf32>
    %16 = vector.broadcast %15 : vector<64x1xf32> to vector<64x32xf32>
    %17 = arith.subf %9, %16 : vector<64x32xf32>
    %18 = vector.broadcast %15 : vector<64x1xf32> to vector<64x32xf32>
    %19 = arith.subf %9, %18 : vector<64x32xf32>
    %20 = arith.mulf %17, %19 : vector<64x32xf32>
    %cst_19 = arith.constant dense<0.000000e+00> : vector<64xf32>
    %21 = vector.multi_reduction <add>, %20, %cst_19 [1] : vector<64x32xf32> to vector<64xf32>
    %22 = vector.shape_cast %21 : vector<64xf32> to vector<64x1xf32>
    %cst_20 = arith.constant 3.200000e+01 : f32
    %23 = vector.broadcast %cst_20 : f32 to vector<64x1xf32>
    %24 = arith.divf %22, %23 : vector<64x1xf32>
    %25 = vector.broadcast %15 : vector<64x1xf32> to vector<64x32xf32>
    %26 = arith.subf %9, %25 : vector<64x32xf32>
    %cst_21 = arith.constant 9.99999974E-6 : f32
    %27 = vector.broadcast %cst_21 : f32 to vector<64x1xf32>
    %28 = arith.addf %24, %27 : vector<64x1xf32>
    %29 = math.rsqrt %28 : vector<64x1xf32>
    %30 = vector.broadcast %29 : vector<64x1xf32> to vector<64x32xf32>
    %31 = arith.mulf %26, %30 : vector<64x32xf32>
    %32 = vector.broadcast %10 : vector<1x32xf32> to vector<64x32xf32>
    %33 = arith.mulf %31, %32 : vector<64x32xf32>
    %34 = vector.broadcast %11 : vector<1x32xf32> to vector<64x32xf32>
    %35 = arith.addf %33, %34 : vector<64x32xf32>
    %36 = arith.truncf %35 : vector<64x32xf32> to vector<64x32xbf16>
    %c0_22 = arith.constant 0 : index
    %c0_23 = arith.constant 0 : index
    %c0_24 = arith.constant 0 : index
    %37 = vector.load %arg4[%c0_22, %c0_23, %c0_24] : memref<2x32x96xbf16, #tpu.memory_space<vmem>>, vector<1x32x96xbf16>
    %38 = vector.shape_cast %37 : vector<1x32x96xbf16> to vector<32x96xbf16>
    %cst_25 = arith.constant dense<0.000000e+00> : vector<64x96xf32>
    %39 = tpu.matmul %36, %38, %cst_25 {dimension_numbers = #tpu.dot_dimension_numbers<[1], [0], [0], [1], [0, 0, 1, 1], [], []>} : vector<64x32xbf16>, vector<32x96xbf16>, vector<64x96xf32> -> vector<64x96xf32>
    %40 = vector.extract_strided_slice %4 {offsets = [0, 0], sizes = [1, 96], strides = [1, 1]} : vector<2x96xf32> to vector<1x96xf32>
    %41 = vector.broadcast %40 : vector<1x96xf32> to vector<64x96xf32>
    %42 = arith.addf %39, %41 : vector<64x96xf32>
    %43 = arith.truncf %42 : vector<64x96xf32> to vector<64x96xbf16>
    %44 = vector.extract_strided_slice %43 {offsets = [0, 0], sizes = [64, 8], strides = [1, 1]} : vector<64x96xbf16> to vector<64x8xbf16>
    %45 = vector.extract_strided_slice %43 {offsets = [0, 32], sizes = [64, 8], strides = [1, 1]} : vector<64x96xbf16> to vector<64x8xbf16>
    %46 = vector.extract_strided_slice %43 {offsets = [0, 64], sizes = [64, 8], strides = [1, 1]} : vector<64x96xbf16> to vector<64x8xbf16>
    %cst_26 = arith.constant dense<0.000000e+00> : vector<64x64xf32>
    %47 = tpu.matmul %44, %45, %cst_26 {dimension_numbers = #tpu.dot_dimension_numbers<[1], [1], [0], [0], [0, 0, 1, 0], [], []>} : vector<64x8xbf16>, vector<64x8xbf16>, vector<64x64xf32> -> vector<64x64xf32>
    %c0_27 = arith.constant 0 : index
    %c0_28 = arith.constant 0 : index
    %c0_29 = arith.constant 0 : index
    %48 = vector.load %arg8[%c0_27, %c0_28, %c0_29] : memref<8x64x64xf32, #tpu.memory_space<vmem>>, vector<1x64x64xf32>
    %49 = vector.shape_cast %48 : vector<1x64x64xf32> to vector<64x64xf32>
    %50 = arith.addf %47, %49 : vector<64x64xf32>
    %cst_30 = arith.constant dense<0xFF800000> : vector<64xf32>
    %51 = vector.multi_reduction <maximumf>, %50, %cst_30 [1] : vector<64x64xf32> to vector<64xf32>
    %52 = vector.shape_cast %51 : vector<64xf32> to vector<64x1xf32>
    %53 = vector.broadcast %52 : vector<64x1xf32> to vector<64x64xf32>
    %54 = arith.subf %50, %53 : vector<64x64xf32>
    %55 = math.exp %54 : vector<64x64xf32>
    %cst_31 = arith.constant dense<0.000000e+00> : vector<64xf32>
    %56 = vector.multi_reduction <add>, %55, %cst_31 [1] : vector<64x64xf32> to vector<64xf32>
    %57 = vector.shape_cast %56 : vector<64xf32> to vector<64x1xf32>
    %58 = tpu.reciprocal %57 {approx = true} : vector<64x1xf32> -> vector<64x1xf32>
    %59 = vector.broadcast %58 : vector<64x1xf32> to vector<64x64xf32>
    %60 = arith.mulf %55, %59 : vector<64x64xf32>
    %61 = arith.truncf %60 : vector<64x64xf32> to vector<64x64xbf16>
    %cst_32 = arith.constant dense<0.000000e+00> : vector<64x8xf32>
    %62 = tpu.matmul %61, %46, %cst_32 {dimension_numbers = #tpu.dot_dimension_numbers<[1], [0], [0], [1], [0, 0, 1, 1], [], []>} : vector<64x64xbf16>, vector<64x8xbf16>, vector<64x8xf32> -> vector<64x8xf32>
    %63 = arith.truncf %62 : vector<64x8xf32> to vector<64x8xbf16>
    %c0_33 = arith.constant 0 : index
    %c0_34 = arith.constant 0 : index
    %c0_35 = arith.constant 0 : index
    %64 = vector.load %arg6[%c0_33, %c0_34, %c0_35] : memref<8x8x32xbf16, #tpu.memory_space<vmem>>, vector<1x8x32xbf16>
    %65 = vector.shape_cast %64 : vector<1x8x32xbf16> to vector<8x32xbf16>
    %cst_36 = arith.constant dense<0.000000e+00> : vector<64x32xf32>
    %66 = tpu.matmul %63, %65, %cst_36 {dimension_numbers = #tpu.dot_dimension_numbers<[1], [0], [0], [1], [0, 0, 1, 1], [], []>} : vector<64x8xbf16>, vector<8x32xbf16>, vector<64x32xf32> -> vector<64x32xf32>
    %67 = vector.extract_strided_slice %43 {offsets = [0, 8], sizes = [64, 8], strides = [1, 1]} : vector<64x96xbf16> to vector<64x8xbf16>
    %68 = vector.extract_strided_slice %43 {offsets = [0, 40], sizes = [64, 8], strides = [1, 1]} : vector<64x96xbf16> to vector<64x8xbf16>
    %69 = vector.extract_strided_slice %43 {offsets = [0, 72], sizes = [64, 8], strides = [1, 1]} : vector<64x96xbf16> to vector<64x8xbf16>
    %cst_37 = arith.constant dense<0.000000e+00> : vector<64x64xf32>
    %70 = tpu.matmul %67, %68, %cst_37 {dimension_numbers = #tpu.dot_dimension_numbers<[1], [1], [0], [0], [0, 0, 1, 0], [], []>} : vector<64x8xbf16>, vector<64x8xbf16>, vector<64x64xf32> -> vector<64x64xf32>
    %c1 = arith.constant 1 : index
    %c0_38 = arith.constant 0 : index
    %c0_39 = arith.constant 0 : index
    %71 = vector.load %arg8[%c1, %c0_38, %c0_39] : memref<8x64x64xf32, #tpu.memory_space<vmem>>, vector<1x64x64xf32>
    %72 = vector.shape_cast %71 : vector<1x64x64xf32> to vector<64x64xf32>
    %73 = arith.addf %70, %72 : vector<64x64xf32>
    %cst_40 = arith.constant dense<0xFF800000> : vector<64xf32>
    %74 = vector.multi_reduction <maximumf>, %73, %cst_40 [1] : vector<64x64xf32> to vector<64xf32>
    %75 = vector.shape_cast %74 : vector<64xf32> to vector<64x1xf32>
    %76 = vector.broadcast %75 : vector<64x1xf32> to vector<64x64xf32>
    %77 = arith.subf %73, %76 : vector<64x64xf32>
    %78 = math.exp %77 : vector<64x64xf32>
    %cst_41 = arith.constant dense<0.000000e+00> : vector<64xf32>
    %79 = vector.multi_reduction <add>, %78, %cst_41 [1] : vector<64x64xf32> to vector<64xf32>
    %80 = vector.shape_cast %79 : vector<64xf32> to vector<64x1xf32>
    %81 = tpu.reciprocal %80 {approx = true} : vector<64x1xf32> -> vector<64x1xf32>
    %82 = vector.broadcast %81 : vector<64x1xf32> to vector<64x64xf32>
    %83 = arith.mulf %78, %82 : vector<64x64xf32>
    %84 = arith.truncf %83 : vector<64x64xf32> to vector<64x64xbf16>
    %cst_42 = arith.constant dense<0.000000e+00> : vector<64x8xf32>
    %85 = tpu.matmul %84, %69, %cst_42 {dimension_numbers = #tpu.dot_dimension_numbers<[1], [0], [0], [1], [0, 0, 1, 1], [], []>} : vector<64x64xbf16>, vector<64x8xbf16>, vector<64x8xf32> -> vector<64x8xf32>
    %86 = arith.truncf %85 : vector<64x8xf32> to vector<64x8xbf16>
    %c1_43 = arith.constant 1 : index
    %c0_44 = arith.constant 0 : index
    %c0_45 = arith.constant 0 : index
    %87 = vector.load %arg6[%c1_43, %c0_44, %c0_45] : memref<8x8x32xbf16, #tpu.memory_space<vmem>>, vector<1x8x32xbf16>
    %88 = vector.shape_cast %87 : vector<1x8x32xbf16> to vector<8x32xbf16>
    %cst_46 = arith.constant dense<0.000000e+00> : vector<64x32xf32>
    %89 = tpu.matmul %86, %88, %cst_46 {dimension_numbers = #tpu.dot_dimension_numbers<[1], [0], [0], [1], [0, 0, 1, 1], [], []>} : vector<64x8xbf16>, vector<8x32xbf16>, vector<64x32xf32> -> vector<64x32xf32>
    %90 = arith.addf %66, %89 : vector<64x32xf32>
    %91 = vector.extract_strided_slice %43 {offsets = [0, 16], sizes = [64, 8], strides = [1, 1]} : vector<64x96xbf16> to vector<64x8xbf16>
    %92 = vector.extract_strided_slice %43 {offsets = [0, 48], sizes = [64, 8], strides = [1, 1]} : vector<64x96xbf16> to vector<64x8xbf16>
    %93 = vector.extract_strided_slice %43 {offsets = [0, 80], sizes = [64, 8], strides = [1, 1]} : vector<64x96xbf16> to vector<64x8xbf16>
    %cst_47 = arith.constant dense<0.000000e+00> : vector<64x64xf32>
    %94 = tpu.matmul %91, %92, %cst_47 {dimension_numbers = #tpu.dot_dimension_numbers<[1], [1], [0], [0], [0, 0, 1, 0], [], []>} : vector<64x8xbf16>, vector<64x8xbf16>, vector<64x64xf32> -> vector<64x64xf32>
    %c2 = arith.constant 2 : index
    %c0_48 = arith.constant 0 : index
    %c0_49 = arith.constant 0 : index
    %95 = vector.load %arg8[%c2, %c0_48, %c0_49] : memref<8x64x64xf32, #tpu.memory_space<vmem>>, vector<1x64x64xf32>
    %96 = vector.shape_cast %95 : vector<1x64x64xf32> to vector<64x64xf32>
    %97 = arith.addf %94, %96 : vector<64x64xf32>
    %cst_50 = arith.constant dense<0xFF800000> : vector<64xf32>
    %98 = vector.multi_reduction <maximumf>, %97, %cst_50 [1] : vector<64x64xf32> to vector<64xf32>
    %99 = vector.shape_cast %98 : vector<64xf32> to vector<64x1xf32>
    %100 = vector.broadcast %99 : vector<64x1xf32> to vector<64x64xf32>
    %101 = arith.subf %97, %100 : vector<64x64xf32>
    %102 = math.exp %101 : vector<64x64xf32>
    %cst_51 = arith.constant dense<0.000000e+00> : vector<64xf32>
    %103 = vector.multi_reduction <add>, %102, %cst_51 [1] : vector<64x64xf32> to vector<64xf32>
    %104 = vector.shape_cast %103 : vector<64xf32> to vector<64x1xf32>
    %105 = tpu.reciprocal %104 {approx = true} : vector<64x1xf32> -> vector<64x1xf32>
    %106 = vector.broadcast %105 : vector<64x1xf32> to vector<64x64xf32>
    %107 = arith.mulf %102, %106 : vector<64x64xf32>
    %108 = arith.truncf %107 : vector<64x64xf32> to vector<64x64xbf16>
    %cst_52 = arith.constant dense<0.000000e+00> : vector<64x8xf32>
    %109 = tpu.matmul %108, %93, %cst_52 {dimension_numbers = #tpu.dot_dimension_numbers<[1], [0], [0], [1], [0, 0, 1, 1], [], []>} : vector<64x64xbf16>, vector<64x8xbf16>, vector<64x8xf32> -> vector<64x8xf32>
    %110 = arith.truncf %109 : vector<64x8xf32> to vector<64x8xbf16>
    %c2_53 = arith.constant 2 : index
    %c0_54 = arith.constant 0 : index
    %c0_55 = arith.constant 0 : index
    %111 = vector.load %arg6[%c2_53, %c0_54, %c0_55] : memref<8x8x32xbf16, #tpu.memory_space<vmem>>, vector<1x8x32xbf16>
    %112 = vector.shape_cast %111 : vector<1x8x32xbf16> to vector<8x32xbf16>
    %cst_56 = arith.constant dense<0.000000e+00> : vector<64x32xf32>
    %113 = tpu.matmul %110, %112, %cst_56 {dimension_numbers = #tpu.dot_dimension_numbers<[1], [0], [0], [1], [0, 0, 1, 1], [], []>} : vector<64x8xbf16>, vector<8x32xbf16>, vector<64x32xf32> -> vector<64x32xf32>
    %114 = arith.addf %90, %113 : vector<64x32xf32>
    %115 = vector.extract_strided_slice %43 {offsets = [0, 24], sizes = [64, 8], strides = [1, 1]} : vector<64x96xbf16> to vector<64x8xbf16>
    %116 = vector.extract_strided_slice %43 {offsets = [0, 56], sizes = [64, 8], strides = [1, 1]} : vector<64x96xbf16> to vector<64x8xbf16>
    %117 = vector.extract_strided_slice %43 {offsets = [0, 88], sizes = [64, 8], strides = [1, 1]} : vector<64x96xbf16> to vector<64x8xbf16>
    %cst_57 = arith.constant dense<0.000000e+00> : vector<64x64xf32>
    %118 = tpu.matmul %115, %116, %cst_57 {dimension_numbers = #tpu.dot_dimension_numbers<[1], [1], [0], [0], [0, 0, 1, 0], [], []>} : vector<64x8xbf16>, vector<64x8xbf16>, vector<64x64xf32> -> vector<64x64xf32>
    %c3 = arith.constant 3 : index
    %c0_58 = arith.constant 0 : index
    %c0_59 = arith.constant 0 : index
    %119 = vector.load %arg8[%c3, %c0_58, %c0_59] : memref<8x64x64xf32, #tpu.memory_space<vmem>>, vector<1x64x64xf32>
    %120 = vector.shape_cast %119 : vector<1x64x64xf32> to vector<64x64xf32>
    %121 = arith.addf %118, %120 : vector<64x64xf32>
    %cst_60 = arith.constant dense<0xFF800000> : vector<64xf32>
    %122 = vector.multi_reduction <maximumf>, %121, %cst_60 [1] : vector<64x64xf32> to vector<64xf32>
    %123 = vector.shape_cast %122 : vector<64xf32> to vector<64x1xf32>
    %124 = vector.broadcast %123 : vector<64x1xf32> to vector<64x64xf32>
    %125 = arith.subf %121, %124 : vector<64x64xf32>
    %126 = math.exp %125 : vector<64x64xf32>
    %cst_61 = arith.constant dense<0.000000e+00> : vector<64xf32>
    %127 = vector.multi_reduction <add>, %126, %cst_61 [1] : vector<64x64xf32> to vector<64xf32>
    %128 = vector.shape_cast %127 : vector<64xf32> to vector<64x1xf32>
    %129 = tpu.reciprocal %128 {approx = true} : vector<64x1xf32> -> vector<64x1xf32>
    %130 = vector.broadcast %129 : vector<64x1xf32> to vector<64x64xf32>
    %131 = arith.mulf %126, %130 : vector<64x64xf32>
    %132 = arith.truncf %131 : vector<64x64xf32> to vector<64x64xbf16>
    %cst_62 = arith.constant dense<0.000000e+00> : vector<64x8xf32>
    %133 = tpu.matmul %132, %117, %cst_62 {dimension_numbers = #tpu.dot_dimension_numbers<[1], [0], [0], [1], [0, 0, 1, 1], [], []>} : vector<64x64xbf16>, vector<64x8xbf16>, vector<64x8xf32> -> vector<64x8xf32>
    %134 = arith.truncf %133 : vector<64x8xf32> to vector<64x8xbf16>
    %c3_63 = arith.constant 3 : index
    %c0_64 = arith.constant 0 : index
    %c0_65 = arith.constant 0 : index
    %135 = vector.load %arg6[%c3_63, %c0_64, %c0_65] : memref<8x8x32xbf16, #tpu.memory_space<vmem>>, vector<1x8x32xbf16>
    %136 = vector.shape_cast %135 : vector<1x8x32xbf16> to vector<8x32xbf16>
    %cst_66 = arith.constant dense<0.000000e+00> : vector<64x32xf32>
    %137 = tpu.matmul %134, %136, %cst_66 {dimension_numbers = #tpu.dot_dimension_numbers<[1], [0], [0], [1], [0, 0, 1, 1], [], []>} : vector<64x8xbf16>, vector<8x32xbf16>, vector<64x32xf32> -> vector<64x32xf32>
    %138 = arith.addf %114, %137 : vector<64x32xf32>
    %139 = vector.extract_strided_slice %5 {offsets = [0, 0], sizes = [1, 32], strides = [1, 1]} : vector<2x32xf32> to vector<1x32xf32>
    %140 = vector.broadcast %139 : vector<1x32xf32> to vector<64x32xf32>
    %141 = arith.addf %138, %140 : vector<64x32xf32>
    %142 = arith.addf %9, %141 : vector<64x32xf32>
    %143 = vector.extract_strided_slice %2 {offsets = [0, 0], sizes = [1, 32], strides = [1, 1]} : vector<2x32xf32> to vector<1x32xf32>
    %144 = vector.extract_strided_slice %3 {offsets = [0, 0], sizes = [1, 32], strides = [1, 1]} : vector<2x32xf32> to vector<1x32xf32>
    %cst_67 = arith.constant dense<0.000000e+00> : vector<64xf32>
    %145 = vector.multi_reduction <add>, %142, %cst_67 [1] : vector<64x32xf32> to vector<64xf32>
    %146 = vector.shape_cast %145 : vector<64xf32> to vector<64x1xf32>
    %cst_68 = arith.constant 3.200000e+01 : f32
    %147 = vector.broadcast %cst_68 : f32 to vector<64x1xf32>
    %148 = arith.divf %146, %147 : vector<64x1xf32>
    %149 = vector.broadcast %148 : vector<64x1xf32> to vector<64x32xf32>
    %150 = arith.subf %142, %149 : vector<64x32xf32>
    %151 = vector.broadcast %148 : vector<64x1xf32> to vector<64x32xf32>
    %152 = arith.subf %142, %151 : vector<64x32xf32>
    %153 = arith.mulf %150, %152 : vector<64x32xf32>
    %cst_69 = arith.constant dense<0.000000e+00> : vector<64xf32>
    %154 = vector.multi_reduction <add>, %153, %cst_69 [1] : vector<64x32xf32> to vector<64xf32>
    %155 = vector.shape_cast %154 : vector<64xf32> to vector<64x1xf32>
    %cst_70 = arith.constant 3.200000e+01 : f32
    %156 = vector.broadcast %cst_70 : f32 to vector<64x1xf32>
    %157 = arith.divf %155, %156 : vector<64x1xf32>
    %158 = vector.broadcast %148 : vector<64x1xf32> to vector<64x32xf32>
    %159 = arith.subf %142, %158 : vector<64x32xf32>
    %cst_71 = arith.constant 9.99999974E-6 : f32
    %160 = vector.broadcast %cst_71 : f32 to vector<64x1xf32>
    %161 = arith.addf %157, %160 : vector<64x1xf32>
    %162 = math.rsqrt %161 : vector<64x1xf32>
    %163 = vector.broadcast %162 : vector<64x1xf32> to vector<64x32xf32>
    %164 = arith.mulf %159, %163 : vector<64x32xf32>
    %165 = vector.broadcast %143 : vector<1x32xf32> to vector<64x32xf32>
    %166 = arith.mulf %164, %165 : vector<64x32xf32>
    %167 = vector.broadcast %144 : vector<1x32xf32> to vector<64x32xf32>
    %168 = arith.addf %166, %167 : vector<64x32xf32>
    %169 = arith.truncf %168 : vector<64x32xf32> to vector<64x32xbf16>
    %c0_72 = arith.constant 0 : index
    %c0_73 = arith.constant 0 : index
    %c0_74 = arith.constant 0 : index
    %170 = vector.load %arg11[%c0_72, %c0_73, %c0_74] : memref<2x32x128xbf16, #tpu.memory_space<vmem>>, vector<1x32x128xbf16>
    %171 = vector.shape_cast %170 : vector<1x32x128xbf16> to vector<32x128xbf16>
    %cst_75 = arith.constant dense<0.000000e+00> : vector<64x128xf32>
    %172 = tpu.matmul %169, %171, %cst_75 {dimension_numbers = #tpu.dot_dimension_numbers<[1], [0], [0], [1], [0, 0, 1, 1], [], []>} : vector<64x32xbf16>, vector<32x128xbf16>, vector<64x128xf32> -> vector<64x128xf32>
    %173 = vector.extract_strided_slice %6 {offsets = [0, 0], sizes = [1, 128], strides = [1, 1]} : vector<2x128xf32> to vector<1x128xf32>
    %174 = vector.broadcast %173 : vector<1x128xf32> to vector<64x128xf32>
    %175 = arith.addf %172, %174 : vector<64x128xf32>
    %176 = arith.mulf %175, %175 : vector<64x128xf32>
    %177 = arith.mulf %175, %176 : vector<64x128xf32>
    %cst_76 = arith.constant 4.471500e-02 : f32
    %178 = vector.broadcast %cst_76 : f32 to vector<64x128xf32>
    %179 = arith.mulf %178, %177 : vector<64x128xf32>
    %180 = arith.addf %175, %179 : vector<64x128xf32>
    %cst_77 = arith.constant 0.797884583 : f32
    %181 = vector.broadcast %cst_77 : f32 to vector<64x128xf32>
    %182 = arith.mulf %181, %180 : vector<64x128xf32>
    %183 = math.tanh %182 : vector<64x128xf32>
    %cst_78 = arith.constant 1.000000e+00 : f32
    %184 = vector.broadcast %cst_78 : f32 to vector<64x128xf32>
    %185 = arith.addf %184, %183 : vector<64x128xf32>
    %cst_79 = arith.constant 5.000000e-01 : f32
    %186 = vector.broadcast %cst_79 : f32 to vector<64x128xf32>
    %187 = arith.mulf %186, %185 : vector<64x128xf32>
    %188 = arith.mulf %175, %187 : vector<64x128xf32>
    %189 = arith.truncf %188 : vector<64x128xf32> to vector<64x128xbf16>
    %c0_80 = arith.constant 0 : index
    %c0_81 = arith.constant 0 : index
    %c0_82 = arith.constant 0 : index
    %190 = vector.load %arg13[%c0_80, %c0_81, %c0_82] : memref<2x128x32xbf16, #tpu.memory_space<vmem>>, vector<1x128x32xbf16>
    %191 = vector.shape_cast %190 : vector<1x128x32xbf16> to vector<128x32xbf16>
    %cst_83 = arith.constant dense<0.000000e+00> : vector<64x32xf32>
    %192 = tpu.matmul %189, %191, %cst_83 {dimension_numbers = #tpu.dot_dimension_numbers<[1], [0], [0], [1], [0, 0, 1, 1], [], []>} : vector<64x128xbf16>, vector<128x32xbf16>, vector<64x32xf32> -> vector<64x32xf32>
    %193 = vector.extract_strided_slice %7 {offsets = [0, 0], sizes = [1, 32], strides = [1, 1]} : vector<2x32xf32> to vector<1x32xf32>
    %194 = vector.broadcast %193 : vector<1x32xf32> to vector<64x32xf32>
    %195 = arith.addf %192, %194 : vector<64x32xf32>
    %196 = arith.addf %142, %195 : vector<64x32xf32>
    %197 = vector.extract_strided_slice %0 {offsets = [1, 0], sizes = [1, 32], strides = [1, 1]} : vector<2x32xf32> to vector<1x32xf32>
    %198 = vector.extract_strided_slice %1 {offsets = [1, 0], sizes = [1, 32], strides = [1, 1]} : vector<2x32xf32> to vector<1x32xf32>
    %cst_84 = arith.constant dense<0.000000e+00> : vector<64xf32>
    %199 = vector.multi_reduction <add>, %196, %cst_84 [1] : vector<64x32xf32> to vector<64xf32>
    %200 = vector.shape_cast %199 : vector<64xf32> to vector<64x1xf32>
    %cst_85 = arith.constant 3.200000e+01 : f32
    %201 = vector.broadcast %cst_85 : f32 to vector<64x1xf32>
    %202 = arith.divf %200, %201 : vector<64x1xf32>
    %203 = vector.broadcast %202 : vector<64x1xf32> to vector<64x32xf32>
    %204 = arith.subf %196, %203 : vector<64x32xf32>
    %205 = vector.broadcast %202 : vector<64x1xf32> to vector<64x32xf32>
    %206 = arith.subf %196, %205 : vector<64x32xf32>
    %207 = arith.mulf %204, %206 : vector<64x32xf32>
    %cst_86 = arith.constant dense<0.000000e+00> : vector<64xf32>
    %208 = vector.multi_reduction <add>, %207, %cst_86 [1] : vector<64x32xf32> to vector<64xf32>
    %209 = vector.shape_cast %208 : vector<64xf32> to vector<64x1xf32>
    %cst_87 = arith.constant 3.200000e+01 : f32
    %210 = vector.broadcast %cst_87 : f32 to vector<64x1xf32>
    %211 = arith.divf %209, %210 : vector<64x1xf32>
    %212 = vector.broadcast %202 : vector<64x1xf32> to vector<64x32xf32>
    %213 = arith.subf %196, %212 : vector<64x32xf32>
    %cst_88 = arith.constant 9.99999974E-6 : f32
    %214 = vector.broadcast %cst_88 : f32 to vector<64x1xf32>
    %215 = arith.addf %211, %214 : vector<64x1xf32>
    %216 = math.rsqrt %215 : vector<64x1xf32>
    %217 = vector.broadcast %216 : vector<64x1xf32> to vector<64x32xf32>
    %218 = arith.mulf %213, %217 : vector<64x32xf32>
    %219 = vector.broadcast %197 : vector<1x32xf32> to vector<64x32xf32>
    %220 = arith.mulf %218, %219 : vector<64x32xf32>
    %221 = vector.broadcast %198 : vector<1x32xf32> to vector<64x32xf32>
    %222 = arith.addf %220, %221 : vector<64x32xf32>
    %223 = arith.truncf %222 : vector<64x32xf32> to vector<64x32xbf16>
    %c1_89 = arith.constant 1 : index
    %c0_90 = arith.constant 0 : index
    %c0_91 = arith.constant 0 : index
    %224 = vector.load %arg4[%c1_89, %c0_90, %c0_91] : memref<2x32x96xbf16, #tpu.memory_space<vmem>>, vector<1x32x96xbf16>
    %225 = vector.shape_cast %224 : vector<1x32x96xbf16> to vector<32x96xbf16>
    %cst_92 = arith.constant dense<0.000000e+00> : vector<64x96xf32>
    %226 = tpu.matmul %223, %225, %cst_92 {dimension_numbers = #tpu.dot_dimension_numbers<[1], [0], [0], [1], [0, 0, 1, 1], [], []>} : vector<64x32xbf16>, vector<32x96xbf16>, vector<64x96xf32> -> vector<64x96xf32>
    %227 = vector.extract_strided_slice %4 {offsets = [1, 0], sizes = [1, 96], strides = [1, 1]} : vector<2x96xf32> to vector<1x96xf32>
    %228 = vector.broadcast %227 : vector<1x96xf32> to vector<64x96xf32>
    %229 = arith.addf %226, %228 : vector<64x96xf32>
    %230 = arith.truncf %229 : vector<64x96xf32> to vector<64x96xbf16>
    %231 = vector.extract_strided_slice %230 {offsets = [0, 0], sizes = [64, 8], strides = [1, 1]} : vector<64x96xbf16> to vector<64x8xbf16>
    %232 = vector.extract_strided_slice %230 {offsets = [0, 32], sizes = [64, 8], strides = [1, 1]} : vector<64x96xbf16> to vector<64x8xbf16>
    %233 = vector.extract_strided_slice %230 {offsets = [0, 64], sizes = [64, 8], strides = [1, 1]} : vector<64x96xbf16> to vector<64x8xbf16>
    %cst_93 = arith.constant dense<0.000000e+00> : vector<64x64xf32>
    %234 = tpu.matmul %231, %232, %cst_93 {dimension_numbers = #tpu.dot_dimension_numbers<[1], [1], [0], [0], [0, 0, 1, 0], [], []>} : vector<64x8xbf16>, vector<64x8xbf16>, vector<64x64xf32> -> vector<64x64xf32>
    %c4 = arith.constant 4 : index
    %c0_94 = arith.constant 0 : index
    %c0_95 = arith.constant 0 : index
    %235 = vector.load %arg8[%c4, %c0_94, %c0_95] : memref<8x64x64xf32, #tpu.memory_space<vmem>>, vector<1x64x64xf32>
    %236 = vector.shape_cast %235 : vector<1x64x64xf32> to vector<64x64xf32>
    %237 = arith.addf %234, %236 : vector<64x64xf32>
    %cst_96 = arith.constant dense<0xFF800000> : vector<64xf32>
    %238 = vector.multi_reduction <maximumf>, %237, %cst_96 [1] : vector<64x64xf32> to vector<64xf32>
    %239 = vector.shape_cast %238 : vector<64xf32> to vector<64x1xf32>
    %240 = vector.broadcast %239 : vector<64x1xf32> to vector<64x64xf32>
    %241 = arith.subf %237, %240 : vector<64x64xf32>
    %242 = math.exp %241 : vector<64x64xf32>
    %cst_97 = arith.constant dense<0.000000e+00> : vector<64xf32>
    %243 = vector.multi_reduction <add>, %242, %cst_97 [1] : vector<64x64xf32> to vector<64xf32>
    %244 = vector.shape_cast %243 : vector<64xf32> to vector<64x1xf32>
    %245 = tpu.reciprocal %244 {approx = true} : vector<64x1xf32> -> vector<64x1xf32>
    %246 = vector.broadcast %245 : vector<64x1xf32> to vector<64x64xf32>
    %247 = arith.mulf %242, %246 : vector<64x64xf32>
    %248 = arith.truncf %247 : vector<64x64xf32> to vector<64x64xbf16>
    %cst_98 = arith.constant dense<0.000000e+00> : vector<64x8xf32>
    %249 = tpu.matmul %248, %233, %cst_98 {dimension_numbers = #tpu.dot_dimension_numbers<[1], [0], [0], [1], [0, 0, 1, 1], [], []>} : vector<64x64xbf16>, vector<64x8xbf16>, vector<64x8xf32> -> vector<64x8xf32>
    %250 = arith.truncf %249 : vector<64x8xf32> to vector<64x8xbf16>
    %c4_99 = arith.constant 4 : index
    %c0_100 = arith.constant 0 : index
    %c0_101 = arith.constant 0 : index
    %251 = vector.load %arg6[%c4_99, %c0_100, %c0_101] : memref<8x8x32xbf16, #tpu.memory_space<vmem>>, vector<1x8x32xbf16>
    %252 = vector.shape_cast %251 : vector<1x8x32xbf16> to vector<8x32xbf16>
    %cst_102 = arith.constant dense<0.000000e+00> : vector<64x32xf32>
    %253 = tpu.matmul %250, %252, %cst_102 {dimension_numbers = #tpu.dot_dimension_numbers<[1], [0], [0], [1], [0, 0, 1, 1], [], []>} : vector<64x8xbf16>, vector<8x32xbf16>, vector<64x32xf32> -> vector<64x32xf32>
    %254 = vector.extract_strided_slice %230 {offsets = [0, 8], sizes = [64, 8], strides = [1, 1]} : vector<64x96xbf16> to vector<64x8xbf16>
    %255 = vector.extract_strided_slice %230 {offsets = [0, 40], sizes = [64, 8], strides = [1, 1]} : vector<64x96xbf16> to vector<64x8xbf16>
    %256 = vector.extract_strided_slice %230 {offsets = [0, 72], sizes = [64, 8], strides = [1, 1]} : vector<64x96xbf16> to vector<64x8xbf16>
    %cst_103 = arith.constant dense<0.000000e+00> : vector<64x64xf32>
    %257 = tpu.matmul %254, %255, %cst_103 {dimension_numbers = #tpu.dot_dimension_numbers<[1], [1], [0], [0], [0, 0, 1, 0], [], []>} : vector<64x8xbf16>, vector<64x8xbf16>, vector<64x64xf32> -> vector<64x64xf32>
    %c5 = arith.constant 5 : index
    %c0_104 = arith.constant 0 : index
    %c0_105 = arith.constant 0 : index
    %258 = vector.load %arg8[%c5, %c0_104, %c0_105] : memref<8x64x64xf32, #tpu.memory_space<vmem>>, vector<1x64x64xf32>
    %259 = vector.shape_cast %258 : vector<1x64x64xf32> to vector<64x64xf32>
    %260 = arith.addf %257, %259 : vector<64x64xf32>
    %cst_106 = arith.constant dense<0xFF800000> : vector<64xf32>
    %261 = vector.multi_reduction <maximumf>, %260, %cst_106 [1] : vector<64x64xf32> to vector<64xf32>
    %262 = vector.shape_cast %261 : vector<64xf32> to vector<64x1xf32>
    %263 = vector.broadcast %262 : vector<64x1xf32> to vector<64x64xf32>
    %264 = arith.subf %260, %263 : vector<64x64xf32>
    %265 = math.exp %264 : vector<64x64xf32>
    %cst_107 = arith.constant dense<0.000000e+00> : vector<64xf32>
    %266 = vector.multi_reduction <add>, %265, %cst_107 [1] : vector<64x64xf32> to vector<64xf32>
    %267 = vector.shape_cast %266 : vector<64xf32> to vector<64x1xf32>
    %268 = tpu.reciprocal %267 {approx = true} : vector<64x1xf32> -> vector<64x1xf32>
    %269 = vector.broadcast %268 : vector<64x1xf32> to vector<64x64xf32>
    %270 = arith.mulf %265, %269 : vector<64x64xf32>
    %271 = arith.truncf %270 : vector<64x64xf32> to vector<64x64xbf16>
    %cst_108 = arith.constant dense<0.000000e+00> : vector<64x8xf32>
    %272 = tpu.matmul %271, %256, %cst_108 {dimension_numbers = #tpu.dot_dimension_numbers<[1], [0], [0], [1], [0, 0, 1, 1], [], []>} : vector<64x64xbf16>, vector<64x8xbf16>, vector<64x8xf32> -> vector<64x8xf32>
    %273 = arith.truncf %272 : vector<64x8xf32> to vector<64x8xbf16>
    %c5_109 = arith.constant 5 : index
    %c0_110 = arith.constant 0 : index
    %c0_111 = arith.constant 0 : index
    %274 = vector.load %arg6[%c5_109, %c0_110, %c0_111] : memref<8x8x32xbf16, #tpu.memory_space<vmem>>, vector<1x8x32xbf16>
    %275 = vector.shape_cast %274 : vector<1x8x32xbf16> to vector<8x32xbf16>
    %cst_112 = arith.constant dense<0.000000e+00> : vector<64x32xf32>
    %276 = tpu.matmul %273, %275, %cst_112 {dimension_numbers = #tpu.dot_dimension_numbers<[1], [0], [0], [1], [0, 0, 1, 1], [], []>} : vector<64x8xbf16>, vector<8x32xbf16>, vector<64x32xf32> -> vector<64x32xf32>
    %277 = arith.addf %253, %276 : vector<64x32xf32>
    %278 = vector.extract_strided_slice %230 {offsets = [0, 16], sizes = [64, 8], strides = [1, 1]} : vector<64x96xbf16> to vector<64x8xbf16>
    %279 = vector.extract_strided_slice %230 {offsets = [0, 48], sizes = [64, 8], strides = [1, 1]} : vector<64x96xbf16> to vector<64x8xbf16>
    %280 = vector.extract_strided_slice %230 {offsets = [0, 80], sizes = [64, 8], strides = [1, 1]} : vector<64x96xbf16> to vector<64x8xbf16>
    %cst_113 = arith.constant dense<0.000000e+00> : vector<64x64xf32>
    %281 = tpu.matmul %278, %279, %cst_113 {dimension_numbers = #tpu.dot_dimension_numbers<[1], [1], [0], [0], [0, 0, 1, 0], [], []>} : vector<64x8xbf16>, vector<64x8xbf16>, vector<64x64xf32> -> vector<64x64xf32>
    %c6 = arith.constant 6 : index
    %c0_114 = arith.constant 0 : index
    %c0_115 = arith.constant 0 : index
    %282 = vector.load %arg8[%c6, %c0_114, %c0_115] : memref<8x64x64xf32, #tpu.memory_space<vmem>>, vector<1x64x64xf32>
    %283 = vector.shape_cast %282 : vector<1x64x64xf32> to vector<64x64xf32>
    %284 = arith.addf %281, %283 : vector<64x64xf32>
    %cst_116 = arith.constant dense<0xFF800000> : vector<64xf32>
    %285 = vector.multi_reduction <maximumf>, %284, %cst_116 [1] : vector<64x64xf32> to vector<64xf32>
    %286 = vector.shape_cast %285 : vector<64xf32> to vector<64x1xf32>
    %287 = vector.broadcast %286 : vector<64x1xf32> to vector<64x64xf32>
    %288 = arith.subf %284, %287 : vector<64x64xf32>
    %289 = math.exp %288 : vector<64x64xf32>
    %cst_117 = arith.constant dense<0.000000e+00> : vector<64xf32>
    %290 = vector.multi_reduction <add>, %289, %cst_117 [1] : vector<64x64xf32> to vector<64xf32>
    %291 = vector.shape_cast %290 : vector<64xf32> to vector<64x1xf32>
    %292 = tpu.reciprocal %291 {approx = true} : vector<64x1xf32> -> vector<64x1xf32>
    %293 = vector.broadcast %292 : vector<64x1xf32> to vector<64x64xf32>
    %294 = arith.mulf %289, %293 : vector<64x64xf32>
    %295 = arith.truncf %294 : vector<64x64xf32> to vector<64x64xbf16>
    %cst_118 = arith.constant dense<0.000000e+00> : vector<64x8xf32>
    %296 = tpu.matmul %295, %280, %cst_118 {dimension_numbers = #tpu.dot_dimension_numbers<[1], [0], [0], [1], [0, 0, 1, 1], [], []>} : vector<64x64xbf16>, vector<64x8xbf16>, vector<64x8xf32> -> vector<64x8xf32>
    %297 = arith.truncf %296 : vector<64x8xf32> to vector<64x8xbf16>
    %c6_119 = arith.constant 6 : index
    %c0_120 = arith.constant 0 : index
    %c0_121 = arith.constant 0 : index
    %298 = vector.load %arg6[%c6_119, %c0_120, %c0_121] : memref<8x8x32xbf16, #tpu.memory_space<vmem>>, vector<1x8x32xbf16>
    %299 = vector.shape_cast %298 : vector<1x8x32xbf16> to vector<8x32xbf16>
    %cst_122 = arith.constant dense<0.000000e+00> : vector<64x32xf32>
    %300 = tpu.matmul %297, %299, %cst_122 {dimension_numbers = #tpu.dot_dimension_numbers<[1], [0], [0], [1], [0, 0, 1, 1], [], []>} : vector<64x8xbf16>, vector<8x32xbf16>, vector<64x32xf32> -> vector<64x32xf32>
    %301 = arith.addf %277, %300 : vector<64x32xf32>
    %302 = vector.extract_strided_slice %230 {offsets = [0, 24], sizes = [64, 8], strides = [1, 1]} : vector<64x96xbf16> to vector<64x8xbf16>
    %303 = vector.extract_strided_slice %230 {offsets = [0, 56], sizes = [64, 8], strides = [1, 1]} : vector<64x96xbf16> to vector<64x8xbf16>
    %304 = vector.extract_strided_slice %230 {offsets = [0, 88], sizes = [64, 8], strides = [1, 1]} : vector<64x96xbf16> to vector<64x8xbf16>
    %cst_123 = arith.constant dense<0.000000e+00> : vector<64x64xf32>
    %305 = tpu.matmul %302, %303, %cst_123 {dimension_numbers = #tpu.dot_dimension_numbers<[1], [1], [0], [0], [0, 0, 1, 0], [], []>} : vector<64x8xbf16>, vector<64x8xbf16>, vector<64x64xf32> -> vector<64x64xf32>
    %c7 = arith.constant 7 : index
    %c0_124 = arith.constant 0 : index
    %c0_125 = arith.constant 0 : index
    %306 = vector.load %arg8[%c7, %c0_124, %c0_125] : memref<8x64x64xf32, #tpu.memory_space<vmem>>, vector<1x64x64xf32>
    %307 = vector.shape_cast %306 : vector<1x64x64xf32> to vector<64x64xf32>
    %308 = arith.addf %305, %307 : vector<64x64xf32>
    %cst_126 = arith.constant dense<0xFF800000> : vector<64xf32>
    %309 = vector.multi_reduction <maximumf>, %308, %cst_126 [1] : vector<64x64xf32> to vector<64xf32>
    %310 = vector.shape_cast %309 : vector<64xf32> to vector<64x1xf32>
    %311 = vector.broadcast %310 : vector<64x1xf32> to vector<64x64xf32>
    %312 = arith.subf %308, %311 : vector<64x64xf32>
    %313 = math.exp %312 : vector<64x64xf32>
    %cst_127 = arith.constant dense<0.000000e+00> : vector<64xf32>
    %314 = vector.multi_reduction <add>, %313, %cst_127 [1] : vector<64x64xf32> to vector<64xf32>
    %315 = vector.shape_cast %314 : vector<64xf32> to vector<64x1xf32>
    %316 = tpu.reciprocal %315 {approx = true} : vector<64x1xf32> -> vector<64x1xf32>
    %317 = vector.broadcast %316 : vector<64x1xf32> to vector<64x64xf32>
    %318 = arith.mulf %313, %317 : vector<64x64xf32>
    %319 = arith.truncf %318 : vector<64x64xf32> to vector<64x64xbf16>
    %cst_128 = arith.constant dense<0.000000e+00> : vector<64x8xf32>
    %320 = tpu.matmul %319, %304, %cst_128 {dimension_numbers = #tpu.dot_dimension_numbers<[1], [0], [0], [1], [0, 0, 1, 1], [], []>} : vector<64x64xbf16>, vector<64x8xbf16>, vector<64x8xf32> -> vector<64x8xf32>
    %321 = arith.truncf %320 : vector<64x8xf32> to vector<64x8xbf16>
    %c7_129 = arith.constant 7 : index
    %c0_130 = arith.constant 0 : index
    %c0_131 = arith.constant 0 : index
    %322 = vector.load %arg6[%c7_129, %c0_130, %c0_131] : memref<8x8x32xbf16, #tpu.memory_space<vmem>>, vector<1x8x32xbf16>
    %323 = vector.shape_cast %322 : vector<1x8x32xbf16> to vector<8x32xbf16>
    %cst_132 = arith.constant dense<0.000000e+00> : vector<64x32xf32>
    %324 = tpu.matmul %321, %323, %cst_132 {dimension_numbers = #tpu.dot_dimension_numbers<[1], [0], [0], [1], [0, 0, 1, 1], [], []>} : vector<64x8xbf16>, vector<8x32xbf16>, vector<64x32xf32> -> vector<64x32xf32>
    %325 = arith.addf %301, %324 : vector<64x32xf32>
    %326 = vector.extract_strided_slice %5 {offsets = [1, 0], sizes = [1, 32], strides = [1, 1]} : vector<2x32xf32> to vector<1x32xf32>
    %327 = vector.broadcast %326 : vector<1x32xf32> to vector<64x32xf32>
    %328 = arith.addf %325, %327 : vector<64x32xf32>
    %329 = arith.addf %196, %328 : vector<64x32xf32>
    %330 = vector.extract_strided_slice %2 {offsets = [1, 0], sizes = [1, 32], strides = [1, 1]} : vector<2x32xf32> to vector<1x32xf32>
    %331 = vector.extract_strided_slice %3 {offsets = [1, 0], sizes = [1, 32], strides = [1, 1]} : vector<2x32xf32> to vector<1x32xf32>
    %cst_133 = arith.constant dense<0.000000e+00> : vector<64xf32>
    %332 = vector.multi_reduction <add>, %329, %cst_133 [1] : vector<64x32xf32> to vector<64xf32>
    %333 = vector.shape_cast %332 : vector<64xf32> to vector<64x1xf32>
    %cst_134 = arith.constant 3.200000e+01 : f32
    %334 = vector.broadcast %cst_134 : f32 to vector<64x1xf32>
    %335 = arith.divf %333, %334 : vector<64x1xf32>
    %336 = vector.broadcast %335 : vector<64x1xf32> to vector<64x32xf32>
    %337 = arith.subf %329, %336 : vector<64x32xf32>
    %338 = vector.broadcast %335 : vector<64x1xf32> to vector<64x32xf32>
    %339 = arith.subf %329, %338 : vector<64x32xf32>
    %340 = arith.mulf %337, %339 : vector<64x32xf32>
    %cst_135 = arith.constant dense<0.000000e+00> : vector<64xf32>
    %341 = vector.multi_reduction <add>, %340, %cst_135 [1] : vector<64x32xf32> to vector<64xf32>
    %342 = vector.shape_cast %341 : vector<64xf32> to vector<64x1xf32>
    %cst_136 = arith.constant 3.200000e+01 : f32
    %343 = vector.broadcast %cst_136 : f32 to vector<64x1xf32>
    %344 = arith.divf %342, %343 : vector<64x1xf32>
    %345 = vector.broadcast %335 : vector<64x1xf32> to vector<64x32xf32>
    %346 = arith.subf %329, %345 : vector<64x32xf32>
    %cst_137 = arith.constant 9.99999974E-6 : f32
    %347 = vector.broadcast %cst_137 : f32 to vector<64x1xf32>
    %348 = arith.addf %344, %347 : vector<64x1xf32>
    %349 = math.rsqrt %348 : vector<64x1xf32>
    %350 = vector.broadcast %349 : vector<64x1xf32> to vector<64x32xf32>
    %351 = arith.mulf %346, %350 : vector<64x32xf32>
    %352 = vector.broadcast %330 : vector<1x32xf32> to vector<64x32xf32>
    %353 = arith.mulf %351, %352 : vector<64x32xf32>
    %354 = vector.broadcast %331 : vector<1x32xf32> to vector<64x32xf32>
    %355 = arith.addf %353, %354 : vector<64x32xf32>
    %356 = arith.truncf %355 : vector<64x32xf32> to vector<64x32xbf16>
    %c1_138 = arith.constant 1 : index
    %c0_139 = arith.constant 0 : index
    %c0_140 = arith.constant 0 : index
    %357 = vector.load %arg11[%c1_138, %c0_139, %c0_140] : memref<2x32x128xbf16, #tpu.memory_space<vmem>>, vector<1x32x128xbf16>
    %358 = vector.shape_cast %357 : vector<1x32x128xbf16> to vector<32x128xbf16>
    %cst_141 = arith.constant dense<0.000000e+00> : vector<64x128xf32>
    %359 = tpu.matmul %356, %358, %cst_141 {dimension_numbers = #tpu.dot_dimension_numbers<[1], [0], [0], [1], [0, 0, 1, 1], [], []>} : vector<64x32xbf16>, vector<32x128xbf16>, vector<64x128xf32> -> vector<64x128xf32>
    %360 = vector.extract_strided_slice %6 {offsets = [1, 0], sizes = [1, 128], strides = [1, 1]} : vector<2x128xf32> to vector<1x128xf32>
    %361 = vector.broadcast %360 : vector<1x128xf32> to vector<64x128xf32>
    %362 = arith.addf %359, %361 : vector<64x128xf32>
    %363 = arith.mulf %362, %362 : vector<64x128xf32>
    %364 = arith.mulf %362, %363 : vector<64x128xf32>
    %cst_142 = arith.constant 4.471500e-02 : f32
    %365 = vector.broadcast %cst_142 : f32 to vector<64x128xf32>
    %366 = arith.mulf %365, %364 : vector<64x128xf32>
    %367 = arith.addf %362, %366 : vector<64x128xf32>
    %cst_143 = arith.constant 0.797884583 : f32
    %368 = vector.broadcast %cst_143 : f32 to vector<64x128xf32>
    %369 = arith.mulf %368, %367 : vector<64x128xf32>
    %370 = math.tanh %369 : vector<64x128xf32>
    %cst_144 = arith.constant 1.000000e+00 : f32
    %371 = vector.broadcast %cst_144 : f32 to vector<64x128xf32>
    %372 = arith.addf %371, %370 : vector<64x128xf32>
    %cst_145 = arith.constant 5.000000e-01 : f32
    %373 = vector.broadcast %cst_145 : f32 to vector<64x128xf32>
    %374 = arith.mulf %373, %372 : vector<64x128xf32>
    %375 = arith.mulf %362, %374 : vector<64x128xf32>
    %376 = arith.truncf %375 : vector<64x128xf32> to vector<64x128xbf16>
    %c1_146 = arith.constant 1 : index
    %c0_147 = arith.constant 0 : index
    %c0_148 = arith.constant 0 : index
    %377 = vector.load %arg13[%c1_146, %c0_147, %c0_148] : memref<2x128x32xbf16, #tpu.memory_space<vmem>>, vector<1x128x32xbf16>
    %378 = vector.shape_cast %377 : vector<1x128x32xbf16> to vector<128x32xbf16>
    %cst_149 = arith.constant dense<0.000000e+00> : vector<64x32xf32>
    %379 = tpu.matmul %376, %378, %cst_149 {dimension_numbers = #tpu.dot_dimension_numbers<[1], [0], [0], [1], [0, 0, 1, 1], [], []>} : vector<64x128xbf16>, vector<128x32xbf16>, vector<64x32xf32> -> vector<64x32xf32>
    %380 = vector.extract_strided_slice %7 {offsets = [1, 0], sizes = [1, 32], strides = [1, 1]} : vector<2x32xf32> to vector<1x32xf32>
    %381 = vector.broadcast %380 : vector<1x32xf32> to vector<64x32xf32>
    %382 = arith.addf %379, %381 : vector<64x32xf32>
    %383 = arith.addf %329, %382 : vector<64x32xf32>
    %c0_150 = arith.constant 0 : index
    %c0_151 = arith.constant 0 : index
    %c0_152 = arith.constant 0 : index
    %384 = vector.load %arg15[%c0_150, %c0_151, %c0_152] : memref<1x64x32xf32, #tpu.memory_space<vmem>>, vector<1x64x32xf32>
    %385 = vector.shape_cast %384 : vector<1x64x32xf32> to vector<64x32xf32>
    %386 = vector.shape_cast %383 : vector<64x32xf32> to vector<1x64x32xf32>
    tpu.vector_store %arg15[%c0_150, %c0_151, %c0_152], %386 {strides = array<i32>} : memref<1x64x32xf32, #tpu.memory_space<vmem>>, vector<1x64x32xf32>,
    return
  }
  func.func @transform_0(%arg0: i32) -> (i32, i32, i32) {
    %c0_i32 = arith.constant 0 : i32
    %c0_i32_0 = arith.constant 0 : i32
    %c0_i32_1 = arith.constant 0 : i32
    return %arg0, %c0_i32, %c0_i32_0 : i32, i32, i32
  }
  func.func @transform_1(%arg0: i32) -> (i32, i32) {
    %c0_i32 = arith.constant 0 : i32
    %c0_i32_0 = arith.constant 0 : i32
    %c0_i32_1 = arith.constant 0 : i32
    return %c0_i32, %c0_i32_0 : i32, i32
  }
  func.func @transform_2(%arg0: i32) -> (i32, i32) {
    %c0_i32 = arith.constant 0 : i32
    %c0_i32_0 = arith.constant 0 : i32
    %c0_i32_1 = arith.constant 0 : i32
    return %c0_i32, %c0_i32_0 : i32, i32
  }
  func.func @transform_3(%arg0: i32) -> (i32, i32, i32) {
    %c0_i32 = arith.constant 0 : i32
    %c0_i32_0 = arith.constant 0 : i32
    %c0_i32_1 = arith.constant 0 : i32
    %c0_i32_2 = arith.constant 0 : i32
    return %c0_i32, %c0_i32_0, %c0_i32_1 : i32, i32, i32
  }
  func.func @transform_4(%arg0: i32) -> (i32, i32) {
    %c0_i32 = arith.constant 0 : i32
    %c0_i32_0 = arith.constant 0 : i32
    %c0_i32_1 = arith.constant 0 : i32
    return %c0_i32, %c0_i32_0 : i32, i32
  }
  func.func @transform_5(%arg0: i32) -> (i32, i32, i32) {
    %c0_i32 = arith.constant 0 : i32
    %c0_i32_0 = arith.constant 0 : i32
    %c0_i32_1 = arith.constant 0 : i32
    %c0_i32_2 = arith.constant 0 : i32
    return %c0_i32, %c0_i32_0, %c0_i32_1 : i32, i32, i32
  }
  func.func @transform_6(%arg0: i32) -> (i32, i32) {
    %c0_i32 = arith.constant 0 : i32
    %c0_i32_0 = arith.constant 0 : i32
    %c0_i32_1 = arith.constant 0 : i32
    return %c0_i32, %c0_i32_0 : i32, i32
  }
  func.func @transform_7(%arg0: i32) -> (i32, i32, i32) {
    %c0_i32 = arith.constant 0 : i32
    %c0_i32_0 = arith.constant 0 : i32
    %c0_i32_1 = arith.constant 0 : i32
    %c0_i32_2 = arith.constant 0 : i32
    return %c0_i32, %c0_i32_0, %c0_i32_1 : i32, i32, i32
  }
  func.func @transform_8(%arg0: i32) -> (i32, i32) {
    %c0_i32 = arith.constant 0 : i32
    %c0_i32_0 = arith.constant 0 : i32
    %c0_i32_1 = arith.constant 0 : i32
    return %c0_i32, %c0_i32_0 : i32, i32
  }
  func.func @transform_9(%arg0: i32) -> (i32, i32) {
    %c0_i32 = arith.constant 0 : i32
    %c0_i32_0 = arith.constant 0 : i32
    %c0_i32_1 = arith.constant 0 : i32
    return %c0_i32, %c0_i32_0 : i32, i32
  }
  func.func @transform_10(%arg0: i32) -> (i32, i32, i32) {
    %c0_i32 = arith.constant 0 : i32
    %c0_i32_0 = arith.constant 0 : i32
    %c0_i32_1 = arith.constant 0 : i32
    %c0_i32_2 = arith.constant 0 : i32
    return %c0_i32, %c0_i32_0, %c0_i32_1 : i32, i32, i32
  }
  func.func @transform_11(%arg0: i32) -> (i32, i32) {
    %c0_i32 = arith.constant 0 : i32
    %c0_i32_0 = arith.constant 0 : i32
    %c0_i32_1 = arith.constant 0 : i32
    return %c0_i32, %c0_i32_0 : i32, i32
  }
  func.func @transform_12(%arg0: i32) -> (i32, i32, i32) {
    %c0_i32 = arith.constant 0 : i32
    %c0_i32_0 = arith.constant 0 : i32
    %c0_i32_1 = arith.constant 0 : i32
    %c0_i32_2 = arith.constant 0 : i32
    return %c0_i32, %c0_i32_0, %c0_i32_1 : i32, i32, i32
  }
  func.func @transform_13(%arg0: i32) -> (i32, i32) {
    %c0_i32 = arith.constant 0 : i32
    %c0_i32_0 = arith.constant 0 : i32
    %c0_i32_1 = arith.constant 0 : i32
    return %c0_i32, %c0_i32_0 : i32, i32
  }
  func.func @transform_14(%arg0: i32) -> (i32, i32, i32) {
    %c0_i32 = arith.constant 0 : i32
    %c0_i32_0 = arith.constant 0 : i32
    %c0_i32_1 = arith.constant 0 : i32
    return %arg0, %c0_i32, %c0_i32_0 : i32, i32, i32
  }
}

</mosaic_0001>

<llo_original>
// kernel: tpu_custom_call.1
$region0: #{tpu_custom_call.1}
  #allocation0 [shape = 'u32[]', space=smem, size = 0x4, offset = 0x4, fixed_abs, tag = 'smem constant byte address 0x4 - core index']
  #allocation1 [shape = 'u32[144,128]{1,0:T(1,128)}', space=vmem, size = 0x12000, scoped, tag = 'internal scratch']
  %s0 = inlined_call_operand.vmem [shape: f32[2,64,32], index: 0, kind: input, shape index: {}]
  %s1 = inlined_call_operand.vmem [shape: f32[2,32], index: 1, kind: input, shape index: {}]
  %s2 = inlined_call_operand.vmem [shape: f32[2,32], index: 2, kind: input, shape index: {}]
  %s3 = inlined_call_operand.vmem [shape: bf16[2,32,96], index: 3, kind: input, shape index: {}]
  %s4 = inlined_call_operand.vmem [shape: f32[2,96], index: 4, kind: input, shape index: {}]
  %s5 = inlined_call_operand.vmem [shape: bf16[8,8,32], index: 5, kind: input, shape index: {}]
  %s6 = inlined_call_operand.vmem [shape: f32[2,32], index: 6, kind: input, shape index: {}]
  %s7 = inlined_call_operand.hbm [shape: f32[8,64,64], index: 7, kind: input, shape index: {}]
  %s8 = inlined_call_operand.vmem [shape: f32[2,32], index: 8, kind: input, shape index: {}]
  %s9 = inlined_call_operand.vmem [shape: f32[2,32], index: 9, kind: input, shape index: {}]
  %s10 = inlined_call_operand.vmem [shape: bf16[2,32,128], index: 10, kind: input, shape index: {}]
  %s11 = inlined_call_operand.vmem [shape: f32[2,128], index: 11, kind: input, shape index: {}]
  %s12 = inlined_call_operand.vmem [shape: bf16[2,128,32], index: 12, kind: input, shape index: {}]
  %s13 = inlined_call_operand.vmem [shape: f32[2,32], index: 13, kind: input, shape index: {}]
  %s14 = inlined_call_operand.vmem [shape: f32[2,64,32], index: 14, kind: output, shape index: {}]
  %s15 = sld [smem:[#allocation0]]
  $region93: #{tpu_custom_call.1} parent=0
    _
  %s17 = ssub.s32 1, %s15
  %s18 = scalar_select 0, %s17, %s15
  $region1: #{tpu_custom_call.1} parent=0
    #allocation2 [shape = 'u8[262144]{0}', space=vmem, size = 0x40000, scoped, tag = 'input window, operand 7, single buffered']
    #allocation3 [shape = 's32[2]{0}', space=sflag, size = 0x8, scoped, tag = 'scoped memory for tpu_custom_call.1']
    %19 = vsyncpa [#allocation3], 0
    loop: start=0, step=1, limit=4
    $region2: #{tpu_custom_call.1} parent=1 // loop_pre_header
      _
    $region3: #{tpu_custom_call.1} parent=1 // loop_header
      %s21 = sphi 0, %s25
      %p22 = scmp.ge.s32.totalorder %s21, 4
      %s31 = sphi 0, %s33
      %s34 = sphi 0, %s31
      %s35 = sphi 0, %s34
      %s51 = sphi 0, %s35
      %s55 = sphi 0, %s55
      %s57 = sphi 0, %s55
      %s58 = sphi 0, %s57
      %s72 = sphi 0, %s58
      %s76 = sphi 0, %s76
      %s78 = sphi 0, %s76
      %s79 = sphi 0, %s78
      %s93 = sphi 0, %s79
      %s97 = sphi 0, %s97
      %s99 = sphi 0, %s97
      %s100 = sphi 0, %s99
      %s114 = sphi 0, %s100
      %s118 = sphi 0, %s118
      %s120 = sphi 0, %s118
      %s121 = sphi 0, %s120
      %s135 = sphi 0, %s121
      %s139 = sphi 0, %s139
      %s141 = sphi 0, %s139
      %s142 = sphi 0, %s141
      %s156 = sphi 0, %s142
      %s160 = sphi 0, %s160
      %s162 = sphi 0, %s160
      %s163 = sphi 0, %s162
      %s177 = sphi 0, %s163
      %s181 = sphi 0, %s181
      %s183 = sphi 0, %s181
      %s184 = sphi 0, %s183
      %s198 = sphi 0, %s184
      %s202 = sphi 0, %s202
      %s204 = sphi 0, %s202
      %s205 = sphi 0, %s204
      %s219 = sphi 0, %s205
      %s223 = sphi 0, %s223
      %s225 = sphi 0, %s223
      %s226 = sphi 0, %s225
      %s240 = sphi 0, %s226
      %s244 = sphi 0, %s244
      %s246 = sphi 0, %s244
      %s247 = sphi 0, %s246
      %s261 = sphi 0, %s247
      %s265 = sphi 0, %s265
      %s267 = sphi 0, %s265
      %s268 = sphi 0, %s267
      %s282 = sphi 0, %s268
      %s286 = sphi 0, %s286
      %s288 = sphi 0, %s286
      %s289 = sphi 0, %s288
      %s303 = sphi 0, %s289
      %s307 = sphi 0, %s307
      %s309 = sphi 0, %s307
      %s310 = sphi 0, %s309
      %s324 = sphi 0, %s310
      %s330 = sphi 0, %s332
      %s333 = sphi 0, %s330
      %s334 = sphi 0, %s333
      %s350 = sphi 0, %s334
    $region4: #{tpu_custom_call.1} parent=1 // loop_header_branch
      %24 = sbr.rel (%p22) target = $region8
    $region5: #{tpu_custom_call.1} parent=1 // loop_body
      %s26 = ssub.s32 %s21, 1
      %s27 = ssub.s32 %s21, 2
      %s28 = sadd.s32 %s21, 1
      %s29 = ssub.s32 %s21, %s28
      %p30 = scmp.eq.s32.totalorder %s29, 0
      %s32 = sadd.s32 %s31, 1
      %s33 = scalar_select %p30, %s31, %s32
      %p36 = pneg %p30
      %p37 = scmp.eq.s32.totalorder %s21, 1
      %p38 = por %p36, %p37
      %p39 = scmp.ne.s32.totalorder %s31, %s34
      %p40 = scmp.eq.s32.totalorder %s21, 0
      %p41 = por %p39, %p40
      %p42 = scmp.ne.s32.totalorder %s31, %s34
      %p43 = scmp.eq.s32.totalorder %s26, 1
      %p44 = por %p42, %p43
      %p45 = scmp.ne.s32.totalorder %s34, %s35
      %p46 = scmp.eq.s32.totalorder %s26, 0
      %p47 = por %p45, %p46
      %p48 = scmp.ne.s32.totalorder %s34, %s35
      %p49 = scmp.eq.s32.totalorder %s27, 1
      %p50 = por %p48, %p49
      %p52 = scmp.ne.s32.totalorder %s35, %s51
      %p53 = scmp.eq.s32.totalorder %s27, 0
      %p54 = por %p52, %p53
      %s56 = sadd.s32 %s55, 1
      %p59 = scmp.eq.s32.totalorder %s21, 1
      %p60 = scmp.ne.s32.totalorder %s55, %s57
      %p61 = scmp.eq.s32.totalorder %s21, 0
      %p62 = por %p60, %p61
      %p63 = scmp.ne.s32.totalorder %s55, %s57
      %p64 = scmp.eq.s32.totalorder %s26, 1
      %p65 = por %p63, %p64
      %p66 = scmp.ne.s32.totalorder %s57, %s58
      %p67 = scmp.eq.s32.totalorder %s26, 0
      %p68 = por %p66, %p67
      %p69 = scmp.ne.s32.totalorder %s57, %s58
      %p70 = scmp.eq.s32.totalorder %s27, 1
      %p71 = por %p69, %p70
      %p73 = scmp.ne.s32.totalorder %s58, %s72
      %p74 = scmp.eq.s32.totalorder %s27, 0
      %p75 = por %p73, %p74
      %s77 = sadd.s32 %s76, 1
      %p80 = scmp.eq.s32.totalorder %s21, 1
      %p81 = scmp.ne.s32.totalorder %s76, %s78
      %p82 = scmp.eq.s32.totalorder %s21, 0
      %p83 = por %p81, %p82
      %p84 = scmp.ne.s32.totalorder %s76, %s78
      %p85 = scmp.eq.s32.totalorder %s26, 1
      %p86 = por %p84, %p85
      %p87 = scmp.ne.s32.totalorder %s78, %s79
      %p88 = scmp.eq.s32.totalorder %s26, 0
      %p89 = por %p87, %p88
      %p90 = scmp.ne.s32.totalorder %s78, %s79
      %p91 = scmp.eq.s32.totalorder %s27, 1
      %p92 = por %p90, %p91
      %p94 = scmp.ne.s32.totalorder %s79, %s93
      %p95 = scmp.eq.s32.totalorder %s27, 0
      %p96 = por %p94, %p95
      %s98 = sadd.s32 %s97, 1
      %p101 = scmp.eq.s32.totalorder %s21, 1
      %p102 = scmp.ne.s32.totalorder %s97, %s99
      %p103 = scmp.eq.s32.totalorder %s21, 0
      %p104 = por %p102, %p103
      %p105 = scmp.ne.s32.totalorder %s97, %s99
      %p106 = scmp.eq.s32.totalorder %s26, 1
      %p107 = por %p105, %p106
      %p108 = scmp.ne.s32.totalorder %s99, %s100
      %p109 = scmp.eq.s32.totalorder %s26, 0
      %p110 = por %p108, %p109
      %p111 = scmp.ne.s32.totalorder %s99, %s100
      %p112 = scmp.eq.s32.totalorder %s27, 1
      %p113 = por %p111, %p112
      %p115 = scmp.ne.s32.totalorder %s100, %s114
      %p116 = scmp.eq.s32.totalorder %s27, 0
      %p117 = por %p115, %p116
      %s119 = sadd.s32 %s118, 1
      %p122 = scmp.eq.s32.totalorder %s21, 1
      %p123 = scmp.ne.s32.totalorder %s118, %s120
      %p124 = scmp.eq.s32.totalorder %s21, 0
      %p125 = por %p123, %p124
      %p126 = scmp.ne.s32.totalorder %s118, %s120
      %p127 = scmp.eq.s32.totalorder %s26, 1
      %p128 = por %p126, %p127
      %p129 = scmp.ne.s32.totalorder %s120, %s121
      %p130 = scmp.eq.s32.totalorder %s26, 0
      %p131 = por %p129, %p130
      %p132 = scmp.ne.s32.totalorder %s120, %s121
      %p133 = scmp.eq.s32.totalorder %s27, 1
      %p134 = por %p132, %p133
      %p136 = scmp.ne.s32.totalorder %s121, %s135
      %p137 = scmp.eq.s32.totalorder %s27, 0
      %p138 = por %p136, %p137
      %s140 = sadd.s32 %s139, 1
      %p143 = scmp.eq.s32.totalorder %s21, 1
      %p144 = scmp.ne.s32.totalorder %s139, %s141
      %p145 = scmp.eq.s32.totalorder %s21, 0
      %p146 = por %p144, %p145
      %p147 = scmp.ne.s32.totalorder %s139, %s141
      %p148 = scmp.eq.s32.totalorder %s26, 1
      %p149 = por %p147, %p148
      %p150 = scmp.ne.s32.totalorder %s141, %s142
      %p151 = scmp.eq.s32.totalorder %s26, 0
      %p152 = por %p150, %p151
      %p153 = scmp.ne.s32.totalorder %s141, %s142
      %p154 = scmp.eq.s32.totalorder %s27, 1
      %p155 = por %p153, %p154
      %p157 = scmp.ne.s32.totalorder %s142, %s156
      %p158 = scmp.eq.s32.totalorder %s27, 0
      %p159 = por %p157, %p158
      %s161 = sadd.s32 %s160, 1
      %p164 = scmp.eq.s32.totalorder %s21, 1
      %p165 = scmp.ne.s32.totalorder %s160, %s162
      %p166 = scmp.eq.s32.totalorder %s21, 0
      %p167 = por %p165, %p166
      %p168 = scmp.ne.s32.totalorder %s160, %s162
      %p169 = scmp.eq.s32.totalorder %s26, 1
      %p170 = por %p168, %p169
      %p171 = scmp.ne.s32.totalorder %s162, %s163
      %p172 = scmp.eq.s32.totalorder %s26, 0
      %p173 = por %p171, %p172
      %p174 = scmp.ne.s32.totalorder %s162, %s163
      %p175 = scmp.eq.s32.totalorder %s27, 1
      %p176 = por %p174, %p175
      %p178 = scmp.ne.s32.totalorder %s163, %s177
      %p179 = scmp.eq.s32.totalorder %s27, 0
      %p180 = por %p178, %p179
      %s182 = sadd.s32 %s181, 1
      %p185 = scmp.eq.s32.totalorder %s21, 1
      %p186 = scmp.ne.s32.totalorder %s181, %s183
      %p187 = scmp.eq.s32.totalorder %s21, 0
      %p188 = por %p186, %p187
      %p189 = scmp.ne.s32.totalorder %s181, %s183
      %p190 = scmp.eq.s32.totalorder %s26, 1
      %p191 = por %p189, %p190
      %p192 = scmp.ne.s32.totalorder %s183, %s184
      %p193 = scmp.eq.s32.totalorder %s26, 0
      %p194 = por %p192, %p193
      %p195 = scmp.ne.s32.totalorder %s183, %s184
      %p196 = scmp.eq.s32.totalorder %s27, 1
      %p197 = por %p195, %p196
      %p199 = scmp.ne.s32.totalorder %s184, %s198
      %p200 = scmp.eq.s32.totalorder %s27, 0
      %p201 = por %p199, %p200
      %s203 = sadd.s32 %s202, 1
      %p206 = scmp.eq.s32.totalorder %s21, 1
      %p207 = scmp.ne.s32.totalorder %s202, %s204
      %p208 = scmp.eq.s32.totalorder %s21, 0
      %p209 = por %p207, %p208
      %p210 = scmp.ne.s32.totalorder %s202, %s204
      %p211 = scmp.eq.s32.totalorder %s26, 1
      %p212 = por %p210, %p211
      %p213 = scmp.ne.s32.totalorder %s204, %s205
      %p214 = scmp.eq.s32.totalorder %s26, 0
      %p215 = por %p213, %p214
      %p216 = scmp.ne.s32.totalorder %s204, %s205
      %p217 = scmp.eq.s32.totalorder %s27, 1
      %p218 = por %p216, %p217
      %p220 = scmp.ne.s32.totalorder %s205, %s219
      %p221 = scmp.eq.s32.totalorder %s27, 0
      %p222 = por %p220, %p221
      %s224 = sadd.s32 %s223, 1
      %p227 = scmp.eq.s32.totalorder %s21, 1
      %p228 = scmp.ne.s32.totalorder %s223, %s225
      %p229 = scmp.eq.s32.totalorder %s21, 0
      %p230 = por %p228, %p229
      %p231 = scmp.ne.s32.totalorder %s223, %s225
      %p232 = scmp.eq.s32.totalorder %s26, 1
      %p233 = por %p231, %p232
      %p234 = scmp.ne.s32.totalorder %s225, %s226
      %p235 = scmp.eq.s32.totalorder %s26, 0
      %p236 = por %p234, %p235
      %p237 = scmp.ne.s32.totalorder %s225, %s226
      %p238 = scmp.eq.s32.totalorder %s27, 1
      %p239 = por %p237, %p238
      %p241 = scmp.ne.s32.totalorder %s226, %s240
      %p242 = scmp.eq.s32.totalorder %s27, 0
      %p243 = por %p241, %p242
      %s245 = sadd.s32 %s244, 1
      %p248 = scmp.eq.s32.totalorder %s21, 1
      %p249 = scmp.ne.s32.totalorder %s244, %s246
      %p250 = scmp.eq.s32.totalorder %s21, 0
      %p251 = por %p249, %p250
      %p252 = scmp.ne.s32.totalorder %s244, %s246
      %p253 = scmp.eq.s32.totalorder %s26, 1
      %p254 = por %p252, %p253
      %p255 = scmp.ne.s32.totalorder %s246, %s247
      %p256 = scmp.eq.s32.totalorder %s26, 0
      %p257 = por %p255, %p256
      %p258 = scmp.ne.s32.totalorder %s246, %s247
      %p259 = scmp.eq.s32.totalorder %s27, 1
      %p260 = por %p258, %p259
      %p262 = scmp.ne.s32.totalorder %s247, %s261
      %p263 = scmp.eq.s32.totalorder %s27, 0
      %p264 = por %p262, %p263
      %s266 = sadd.s32 %s265, 1
      %p269 = scmp.eq.s32.totalorder %s21, 1
      %p270 = scmp.ne.s32.totalorder %s265, %s267
      %p271 = scmp.eq.s32.totalorder %s21, 0
      %p272 = por %p270, %p271
      %p273 = scmp.ne.s32.totalorder %s265, %s267
      %p274 = scmp.eq.s32.totalorder %s26, 1
      %p275 = por %p273, %p274
      %p276 = scmp.ne.s32.totalorder %s267, %s268
      %p277 = scmp.eq.s32.totalorder %s26, 0
      %p278 = por %p276, %p277
      %p279 = scmp.ne.s32.totalorder %s267, %s268
      %p280 = scmp.eq.s32.totalorder %s27, 1
      %p281 = por %p279, %p280
      %p283 = scmp.ne.s32.totalorder %s268, %s282
      %p284 = scmp.eq.s32.totalorder %s27, 0
      %p285 = por %p283, %p284
      %s287 = sadd.s32 %s286, 1
      %p290 = scmp.eq.s32.totalorder %s21, 1
      %p291 = scmp.ne.s32.totalorder %s286, %s288
      %p292 = scmp.eq.s32.totalorder %s21, 0
      %p293 = por %p291, %p292
      %p294 = scmp.ne.s32.totalorder %s286, %s288
      %p295 = scmp.eq.s32.totalorder %s26, 1
      %p296 = por %p294, %p295
      %p297 = scmp.ne.s32.totalorder %s288, %s289
      %p298 = scmp.eq.s32.totalorder %s26, 0
      %p299 = por %p297, %p298
      %p300 = scmp.ne.s32.totalorder %s288, %s289
      %p301 = scmp.eq.s32.totalorder %s27, 1
      %p302 = por %p300, %p301
      %p304 = scmp.ne.s32.totalorder %s289, %s303
      %p305 = scmp.eq.s32.totalorder %s27, 0
      %p306 = por %p304, %p305
      %s308 = sadd.s32 %s307, 1
      %p311 = scmp.eq.s32.totalorder %s21, 1
      %p312 = scmp.ne.s32.totalorder %s307, %s309
      %p313 = scmp.eq.s32.totalorder %s21, 0
      %p314 = por %p312, %p313
      %p315 = scmp.ne.s32.totalorder %s307, %s309
      %p316 = scmp.eq.s32.totalorder %s26, 1
      %p317 = por %p315, %p316
      %p318 = scmp.ne.s32.totalorder %s309, %s310
      %p319 = scmp.eq.s32.totalorder %s26, 0
      %p320 = por %p318, %p319
      %p321 = scmp.ne.s32.totalorder %s309, %s310
      %p322 = scmp.eq.s32.totalorder %s27, 1
      %p323 = por %p321, %p322
      %p325 = scmp.ne.s32.totalorder %s310, %s324
      %p326 = scmp.eq.s32.totalorder %s27, 0
      %p327 = por %p325, %p326
      %s328 = ssub.s32 %s21, %s28
      %p329 = scmp.eq.s32.totalorder %s328, 0
      %s331 = sadd.s32 %s330, 1
      %s332 = scalar_select %p329, %s330, %s331
      %p335 = pneg %p329
      %p336 = scmp.eq.s32.totalorder %s21, 1
      %p337 = por %p335, %p336
      %p338 = scmp.ne.s32.totalorder %s330, %s333
      %p339 = scmp.eq.s32.totalorder %s21, 0
      %p340 = por %p338, %p339
      %p341 = scmp.ne.s32.totalorder %s330, %s333
      %p342 = scmp.eq.s32.totalorder %s26, 1
      %p343 = por %p341, %p342
      %p344 = scmp.ne.s32.totalorder %s333, %s334
      %p345 = scmp.eq.s32.totalorder %s26, 0
      %p346 = por %p344, %p345
      %p347 = scmp.ne.s32.totalorder %s333, %s334
      %p348 = scmp.eq.s32.totalorder %s27, 1
      %p349 = por %p347, %p348
      %p351 = scmp.ne.s32.totalorder %s334, %s350
      %p352 = scmp.eq.s32.totalorder %s27, 0
      %p353 = por %p351, %p352
      %p354 = scmp.le.s32.totalorder 1, %s21
      %p355 = scmp.lt.s32.totalorder %s21, 3
      %p356 = pnand %p354, %p355
      %p357 = pneg %p356
      // Predicated region
      $region9: #{tpu_custom_call.1} parent=5 // pred_check
        _
      $region10: #{tpu_custom_call.1} parent=5 // pred_check_branch
        %359 = sbr.rel (%p356) target = $region12
      $region11: #{tpu_custom_call.1} parent=5 // pred_region
        %s360 = ssub.s32 %s21, 1
        // Predicated region
        $region13: #{tpu_custom_call.1} parent=11 // pred_check
          %p361 = pneg %p68
        $region14: #{tpu_custom_call.1} parent=11 // pred_check_branch
          %363 = sbr.rel (%p361) target = $region16
        $region15: #{tpu_custom_call.1} parent=11 // pred_region
          _
        $region16: #{tpu_custom_call.1} parent=11 // pred_fallthru
          _
        // Predicated region
        $region17: #{tpu_custom_call.1} parent=11 // pred_check
          %p364 = pneg %p89
        $region18: #{tpu_custom_call.1} parent=11 // pred_check_branch
          %366 = sbr.rel (%p364) target = $region20
        $region19: #{tpu_custom_call.1} parent=11 // pred_region
          _
        $region20: #{tpu_custom_call.1} parent=11 // pred_fallthru
          _
        // Predicated region
        $region21: #{tpu_custom_call.1} parent=11 // pred_check
          %p367 = pneg %p110
        $region22: #{tpu_custom_call.1} parent=11 // pred_check_branch
          %369 = sbr.rel (%p367) target = $region24
        $region23: #{tpu_custom_call.1} parent=11 // pred_region
          _
        $region24: #{tpu_custom_call.1} parent=11 // pred_fallthru
          _
        // Predicated region
        $region25: #{tpu_custom_call.1} parent=11 // pred_check
          %p370 = pneg %p131
        $region26: #{tpu_custom_call.1} parent=11 // pred_check_branch
          %372 = sbr.rel (%p370) target = $region28
        $region27: #{tpu_custom_call.1} parent=11 // pred_region
          _
        $region28: #{tpu_custom_call.1} parent=11 // pred_fallthru
          _
        // Predicated region
        $region29: #{tpu_custom_call.1} parent=11 // pred_check
          %p373 = pneg %p152
        $region30: #{tpu_custom_call.1} parent=11 // pred_check_branch
          %375 = sbr.rel (%p373) target = $region32
        $region31: #{tpu_custom_call.1} parent=11 // pred_region
          _
        $region32: #{tpu_custom_call.1} parent=11 // pred_fallthru
          _
        // Predicated region
        $region33: #{tpu_custom_call.1} parent=11 // pred_check
          %p376 = pneg %p173
        $region34: #{tpu_custom_call.1} parent=11 // pred_check_branch
          %378 = sbr.rel (%p376) target = $region36
        $region35: #{tpu_custom_call.1} parent=11 // pred_region
          _
        $region36: #{tpu_custom_call.1} parent=11 // pred_fallthru
          _
        // Predicated region
        $region37: #{tpu_custom_call.1} parent=11 // pred_check
          %p379 = pneg %p194
        $region38: #{tpu_custom_call.1} parent=11 // pred_check_branch
          %381 = sbr.rel (%p379) target = $region40
        $region39: #{tpu_custom_call.1} parent=11 // pred_region
          %s383 = ssub.s32 8192, 8192
          %384 = vsyncadd [#allocation3], %s383
          %s385 = sshll.u32 [#allocation2], 4
          %s386 = int_to_ptr.vmem [resolvable:$true] %s385
          %391 = dma.hbm_to_vmem [thread:$0]  %s7, 8192, %s386, [#allocation3], 128, 128, 8
        $region40: #{tpu_custom_call.1} parent=11 // pred_fallthru
          _
        // Predicated region
        $region41: #{tpu_custom_call.1} parent=11 // pred_check
          %p392 = pneg %p215
        $region42: #{tpu_custom_call.1} parent=11 // pred_check_branch
          %394 = sbr.rel (%p392) target = $region44
        $region43: #{tpu_custom_call.1} parent=11 // pred_region
          _
        $region44: #{tpu_custom_call.1} parent=11 // pred_fallthru
          _
        // Predicated region
        $region45: #{tpu_custom_call.1} parent=11 // pred_check
          %p395 = pneg %p236
        $region46: #{tpu_custom_call.1} parent=11 // pred_check_branch
          %397 = sbr.rel (%p395) target = $region48
        $region47: #{tpu_custom_call.1} parent=11 // pred_region
          _
        $region48: #{tpu_custom_call.1} parent=11 // pred_fallthru
          _
        // Predicated region
        $region49: #{tpu_custom_call.1} parent=11 // pred_check
          %p398 = pneg %p257
        $region50: #{tpu_custom_call.1} parent=11 // pred_check_branch
          %400 = sbr.rel (%p398) target = $region52
        $region51: #{tpu_custom_call.1} parent=11 // pred_region
          _
        $region52: #{tpu_custom_call.1} parent=11 // pred_fallthru
          _
        // Predicated region
        $region53: #{tpu_custom_call.1} parent=11 // pred_check
          %p401 = pneg %p278
        $region54: #{tpu_custom_call.1} parent=11 // pred_check_branch
          %403 = sbr.rel (%p401) target = $region56
        $region55: #{tpu_custom_call.1} parent=11 // pred_region
          _
        $region56: #{tpu_custom_call.1} parent=11 // pred_fallthru
          _
        // Predicated region
        $region57: #{tpu_custom_call.1} parent=11 // pred_check
          %p404 = pneg %p299
        $region58: #{tpu_custom_call.1} parent=11 // pred_check_branch
          %406 = sbr.rel (%p404) target = $region60
        $region59: #{tpu_custom_call.1} parent=11 // pred_region
          _
        $region60: #{tpu_custom_call.1} parent=11 // pred_fallthru
          _
        // Predicated region
        $region61: #{tpu_custom_call.1} parent=11 // pred_check
          %p407 = pneg %p320
        $region62: #{tpu_custom_call.1} parent=11 // pred_check_branch
          %409 = sbr.rel (%p407) target = $region64
        $region63: #{tpu_custom_call.1} parent=11 // pred_region
          _
        $region64: #{tpu_custom_call.1} parent=11 // pred_fallthru
          _
      $region12: #{tpu_custom_call.1} parent=5 // pred_fallthru
        _
      %p410 = scmp.lt.s32.totalorder %s21, 2
      // Predicated region
      $region65: #{tpu_custom_call.1} parent=5 // pred_check
        %p411 = pneg %p410
      $region66: #{tpu_custom_call.1} parent=5 // pred_check_branch
        %413 = sbr.rel (%p411) target = $region68
      $region67: #{tpu_custom_call.1} parent=5 // pred_region
        // Predicated region
        $region69: #{tpu_custom_call.1} parent=67 // pred_check
          %p414 = pneg %p41
        $region70: #{tpu_custom_call.1} parent=67 // pred_check_branch
          %416 = sbr.rel (%p414) target = $region72
        $region71: #{tpu_custom_call.1} parent=67 // pred_region
          %p417 = scmp.lt.s32.totalorder %s21, 1
          %s418 = scalar_select %p417, %s21, 1
          %s419 = smul.addr %s418, 8
          %s420 = smul.addr %s419, 8
          %s421 = scalar_lea.vmem %s0, %s420
        $region72: #{tpu_custom_call.1} parent=67 // pred_fallthru
          _
      $region68: #{tpu_custom_call.1} parent=5 // pred_fallthru
        _
      %p422 = scmp.le.s32.totalorder 1, %s21
      %p423 = scmp.lt.s32.totalorder %s21, 3
      %p424 = pnand %p422, %p423
      %p425 = pneg %p424
      // Predicated region
      $region73: #{tpu_custom_call.1} parent=5 // pred_check
        _
      $region74: #{tpu_custom_call.1} parent=5 // pred_check_branch
        %427 = sbr.rel (%p424) target = $region76
      $region75: #{tpu_custom_call.1} parent=5 // pred_region
        %s428 = ssub.s32 %s21, 1
        // Predicated region
        $region77: #{tpu_custom_call.1} parent=75 // pred_check
          %p429 = pneg %p194
        $region78: #{tpu_custom_call.1} parent=75 // pred_check_branch
          %431 = sbr.rel (%p429) target = $region80
        $region79: #{tpu_custom_call.1} parent=75 // pred_region
          %432 = dma.done [#allocation3], 8192
        $region80: #{tpu_custom_call.1} parent=75 // pred_fallthru
          _
        %p433 = scmp.lt.s32.totalorder %s26, 1
        %s434 = scalar_select %p433, %s26, 1
        %s435 = smul.addr %s434, 8
        %s436 = smul.addr %s435, 8
        %s437 = scalar_lea.vmem %s0, %s436
        %p438 = pneg %p47
        %p439 = pneg %p44
        %p440 = pneg %p68
        %p441 = pneg %p65
        %p442 = pneg %p89
        %p443 = pneg %p86
        %p444 = pneg %p110
        %p445 = pneg %p107
        %p446 = pneg %p131
        %p447 = pneg %p128
        %p448 = pneg %p152
        %p449 = pneg %p149
        %p450 = pneg %p173
        %p451 = pneg %p170
        %p452 = pneg %p194
        %p453 = pneg %p191
        %p454 = pneg %p215
        %p455 = pneg %p212
        %p456 = pneg %p236
        %p457 = pneg %p233
        %p458 = pneg %p257
        %p459 = pneg %p254
        %p460 = pneg %p278
        %p461 = pneg %p275
        %p462 = pneg %p299
        %p463 = pneg %p296
        %p464 = pneg %p320
        %p465 = pneg %p317
        %p466 = pneg %p346
        %p467 = pneg %p343
        %p468 = scmp.lt.s32.totalorder %s26, 1
        %s469 = scalar_select %p468, %s26, 1
        %s470 = smul.addr %s469, 8
        %s471 = smul.addr %s470, 8
        %s472 = scalar_lea.vmem %s14, %s471
        %p473 = scmp.lt.s32.totalorder %s26, 1
        %s474 = scalar_select %p473, %s26, 1
        %s475 = smul.addr %s474, 8
        %s476 = smul.addr %s475, 8
        %s477 = scalar_lea.vmem %s0, %s476
        %p478 = scmp.lt.s32.totalorder %s26, 1
        %s479 = scalar_select %p478, %s26, 1
        %s480 = smul.addr %s479, 8
        %s481 = smul.addr %s480, 8
        %s482 = scalar_lea.vmem %s14, %s481
        %v484 = vld [vmem:[%s1] sm:$0x3]
        %v485 = vld [vmem:[%s2] sm:$0x3]
        %v486 = vld [vmem:[%s8] sm:$0x3]
        %v487 = vld [vmem:[%s9] sm:$0x3]
        %v488 = vld [vmem:[%s4] sm:$0x3]
        %v489 = vld [vmem:[%s6] sm:$0x3]
        %v490 = vld [vmem:[%s11] sm:$0x3]
        %v491 = vld [vmem:[%s13] sm:$0x3]
        %v492 = vld [vmem:[%s477] sm:$0xff]
        %v493 = vld [vmem:[%s477 + $0x8] sm:$0xff]
        %v494 = vld [vmem:[%s477 + $0x10] sm:$0xff]
        %v495 = vld [vmem:[%s477 + $0x18] sm:$0xff]
        %v496 = vld [vmem:[%s477 + $0x20] sm:$0xff]
        %v497 = vld [vmem:[%s477 + $0x28] sm:$0xff]
        %v498 = vld [vmem:[%s477 + $0x30] sm:$0xff]
        %v499 = vld [vmem:[%s477 + $0x38] sm:$0xff]
        %vm500 = vcmask 261120
        %v501 = vsel %vm500, %v492, 0.0
        %502 = vadd.xlane.f32.xlu0 %v501
        %v503 = vpop.xlane.xlu0 %502
        %v504 = vsel %vm500, %v493, 0.0
        %505 = vadd.xlane.f32.xlu0 %v504
        %v506 = vpop.xlane.xlu0 %505
        %v507 = vsel %vm500, %v494, 0.0
        %508 = vadd.xlane.f32.xlu0 %v507
        %v509 = vpop.xlane.xlu0 %508
        %v510 = vsel %vm500, %v495, 0.0
        %511 = vadd.xlane.f32.xlu0 %v510
        %v512 = vpop.xlane.xlu0 %511
        %v513 = vsel %vm500, %v496, 0.0
        %514 = vadd.xlane.f32.xlu0 %v513
        %v515 = vpop.xlane.xlu0 %514
        %v516 = vsel %vm500, %v497, 0.0
        %517 = vadd.xlane.f32.xlu0 %v516
        %v518 = vpop.xlane.xlu0 %517
        %v519 = vsel %vm500, %v498, 0.0
        %520 = vadd.xlane.f32.xlu0 %v519
        %v521 = vpop.xlane.xlu0 %520
        %v522 = vsel %vm500, %v499, 0.0
        %523 = vadd.xlane.f32.xlu0 %v522
        %v524 = vpop.xlane.xlu0 %523
        %v525 = vrcp.pop 32.0
        %v526 = vmul.f32 %v503, %v525
        %v527 = vmul.f32 %v506, %v525
        %v528 = vmul.f32 %v509, %v525
        %v529 = vmul.f32 %v512, %v525
        %v530 = vmul.f32 %v515, %v525
        %v531 = vmul.f32 %v518, %v525
        %v532 = vmul.f32 %v521, %v525
        %v533 = vmul.f32 %v524, %v525
        %v534 = vsub.f32 %v492, %v526
        %v535 = vsub.f32 %v493, %v527
        %v536 = vsub.f32 %v494, %v528
        %v537 = vsub.f32 %v495, %v529
        %v538 = vsub.f32 %v496, %v530
        %v539 = vsub.f32 %v497, %v531
        %v540 = vsub.f32 %v498, %v532
        %v541 = vsub.f32 %v499, %v533
        %v542 = vmul.f32 %v534, %v534
        %v543 = vmul.f32 %v535, %v535
        %v544 = vmul.f32 %v536, %v536
        %v545 = vmul.f32 %v537, %v537
        %v546 = vmul.f32 %v538, %v538
        %v547 = vmul.f32 %v539, %v539
        %v548 = vmul.f32 %v540, %v540
        %v549 = vmul.f32 %v541, %v541
        %v550 = vsel %vm500, %v542, 0.0
        %551 = vadd.xlane.f32.xlu0 %v550
        %v552 = vpop.xlane.xlu0 %551
        %v553 = vsel %vm500, %v543, 0.0
        %554 = vadd.xlane.f32.xlu0 %v553
        %v555 = vpop.xlane.xlu0 %554
        %v556 = vsel %vm500, %v544, 0.0
        %557 = vadd.xlane.f32.xlu0 %v556
        %v558 = vpop.xlane.xlu0 %557
        %v559 = vsel %vm500, %v545, 0.0
        %560 = vadd.xlane.f32.xlu0 %v559
        %v561 = vpop.xlane.xlu0 %560
        %v562 = vsel %vm500, %v546, 0.0
        %563 = vadd.xlane.f32.xlu0 %v562
        %v564 = vpop.xlane.xlu0 %563
        %v565 = vsel %vm500, %v547, 0.0
        %566 = vadd.xlane.f32.xlu0 %v565
        %v567 = vpop.xlane.xlu0 %566
        %v568 = vsel %vm500, %v548, 0.0
        %569 = vadd.xlane.f32.xlu0 %v568
        %v570 = vpop.xlane.xlu0 %569
        %v571 = vsel %vm500, %v549, 0.0
        %572 = vadd.xlane.f32.xlu0 %v571
        %v573 = vpop.xlane.xlu0 %572
        %v574 = vmul.f32 %v552, %v525
        %v575 = vmul.f32 %v555, %v525
        %v576 = vmul.f32 %v558, %v525
        %v577 = vmul.f32 %v561, %v525
        %v578 = vmul.f32 %v564, %v525
        %v579 = vmul.f32 %v567, %v525
        %v580 = vmul.f32 %v570, %v525
        %v581 = vmul.f32 %v573, %v525
        %v582 = vadd.f32 %v574, 1e-05
        %v583 = vadd.f32 %v575, 1e-05
        %v584 = vadd.f32 %v576, 1e-05
        %v585 = vadd.f32 %v577, 1e-05
        %v586 = vadd.f32 %v578, 1e-05
        %v587 = vadd.f32 %v579, 1e-05
        %v588 = vadd.f32 %v580, 1e-05
        %v589 = vadd.f32 %v581, 1e-05
        %v590 = vrsqrt.pop %v582
        %v591 = vrsqrt.pop %v583
        %v592 = vrsqrt.pop %v584
        %v593 = vrsqrt.pop %v585
        %v594 = vrsqrt.pop %v586
        %v595 = vrsqrt.pop %v587
        %v596 = vrsqrt.pop %v588
        %v597 = vrsqrt.pop %v589
        %v598 = vmul.f32 %v534, %v590
        %v599 = vmul.f32 %v535, %v591
        %v600 = vmul.f32 %v536, %v592
        %v601 = vmul.f32 %v537, %v593
        %v602 = vmul.f32 %v538, %v594
        %v603 = vmul.f32 %v539, %v595
        %v604 = vmul.f32 %v540, %v596
        %v605 = vmul.f32 %v541, %v597
        %v606 = vlaneseq
        %v607 = vshrl.u32 %v606, 7
        %v608 = vsub.s32 0, %v607
        %v609 = vrot.slane %v484, %v608
        %v610 = vmul.f32 %v598, %v609
        %v611 = vmul.f32 %v599, %v609
        %v612 = vmul.f32 %v600, %v609
        %v613 = vmul.f32 %v601, %v609
        %v614 = vmul.f32 %v602, %v609
        %v615 = vmul.f32 %v603, %v609
        %v616 = vmul.f32 %v604, %v609
        %v617 = vmul.f32 %v605, %v609
        %v618 = vlaneseq
        %v619 = vshrl.u32 %v618, 7
        %v620 = vsub.s32 0, %v619
        %v621 = vrot.slane %v485, %v620
        %v622 = vadd.f32 %v610, %v621
        %v623 = vadd.f32 %v611, %v621
        %v624 = vadd.f32 %v612, %v621
        %v625 = vadd.f32 %v613, %v621
        %v626 = vadd.f32 %v614, %v621
        %v627 = vadd.f32 %v615, %v621
        %v628 = vadd.f32 %v616, %v621
        %v629 = vadd.f32 %v617, %v621
        %v630 = vpack.c.bf16 %v623, %v622
        %v631 = vpack.c.bf16 %v625, %v624
        %v632 = vpack.c.bf16 %v627, %v626
        %v633 = vpack.c.bf16 %v629, %v628
        %v634 = vld [vmem:[%s3] sm:$0xf]
        %v635 = vld [vmem:[%s3 + $0x4] sm:$0xf]
        %v636 = vld [vmem:[%s3 + $0x8] sm:$0xf]
        %v637 = vld [vmem:[%s3 + $0xc] sm:$0xf]
        %v638 = vlaneseq
        %v639 = vshrl.u32 %v638, 7
        %v640 = vsub.s32 0, %v639
        %v641 = vrot.slane %v488, %v640
        %v646 = vunpack.c.l.b16 %v634
        %v647 = vunpack.c.l.b16 %v635
        %v648 = vunpack.c.l.b16 %v636
        %v649 = vunpack.c.l.b16 %v637
        %v650 = vpack.c.b16 %v647, %v646
        %v651 = vpack.c.b16 %v649, %v648
        %v655 = vsel %vm500, %v630, 0
        %v658 = vsel %vm500, %v631, 0
        %v661 = vsel %vm500, %v632, 0
        %v664 = vsel %vm500, %v633, 0
        %666 = vmatprep.subr.bf16.mxu0 0
        %667 = vmatpush1.bf16.msra.mxu0 %v650
        %668 = vmatprep.subr.bf16.mxu0 0
        %669 = vmatpush1.bf16.msra.mxu0 %v651
        %670 = vmatprep.subr.bf16.mxu0 0
        %671 = vmatpush1.bf16.msra.mxu0 0
        %672 = vmatprep.subr.bf16.mxu0 0
        %673 = vmatpush1.bf16.msra.mxu0 0
        %674 = vmatprep.subr.bf16.mxu0 0
        %675 = vmatpush1.bf16.msra.mxu0 0
        %676 = vmatprep.subr.bf16.mxu0 0
        %677 = vmatpush1.bf16.msra.mxu0 0
        %678 = vmatprep.subr.bf16.mxu0 0
        %679 = vmatpush1.bf16.msra.mxu0 0
        %680 = vmatprep.subr.bf16.mxu0 0
        %681 = vmatpush1.bf16.msra.mxu0 0
        %682 = vmatprep.subr.bf16.mxu0 0
        %683 = vmatpush1.bf16.msra.mxu0 0
        %684 = vmatprep.subr.bf16.mxu0 0
        %685 = vmatpush1.bf16.msra.mxu0 0
        %686 = vmatprep.subr.bf16.mxu0 0
        %687 = vmatpush1.bf16.msra.mxu0 0
        %688 = vmatprep.subr.bf16.mxu0 0
        %689 = vmatpush1.bf16.msra.mxu0 0
        %690 = vmatprep.subr.bf16.mxu0 0
        %691 = vmatpush1.bf16.msra.mxu0 0
        %692 = vmatprep.subr.bf16.mxu0 0
        %693 = vmatpush1.bf16.msra.mxu0 0
        %694 = vmatprep.subr.bf16.mxu0 0
        %695 = vmatpush1.bf16.msra.mxu0 0
        %696 = vmatprep.subr.bf16.mxu0 0
        %697 = vmatpush1.bf16.msra.mxu0 0
        %698 = vmatprep.mubr.bf16.mxu0 0
        %699 = vmatmul.mubr.bf16.gmra.mrb[0].mxu0 %v655
        %v700 = vpop.f32.mrb[0].mxu0
        %v701 = vadd.f32 %v641, %v700
        %v702 = vpop.f32.mrb[0].mxu0
        %v703 = vpop.f32.mrb[0].mxu0
        %v704 = vadd.f32 %v641, %v703
        %v705 = vpop.f32.mrb[0].mxu0
        %706 = vmatprep.mubr.bf16.mxu0 0
        %707 = vmatmul.mubr.bf16.gmra.mrb[0].mxu0 %v658
        %v708 = vpop.f32.mrb[0].mxu0
        %v709 = vadd.f32 %v641, %v708
        %v710 = vpop.f32.mrb[0].mxu0
        %v711 = vpop.f32.mrb[0].mxu0
        %v712 = vadd.f32 %v641, %v711
        %v713 = vpop.f32.mrb[0].mxu0
        %714 = vmatprep.mubr.bf16.mxu0 0
        %715 = vmatmul.mubr.bf16.gmra.mrb[0].mxu0 %v661
        %v716 = vpop.f32.mrb[0].mxu0
        %v717 = vadd.f32 %v641, %v716
        %v718 = vpop.f32.mrb[0].mxu0
        %v719 = vpop.f32.mrb[0].mxu0
        %v720 = vadd.f32 %v641, %v719
        %v721 = vpop.f32.mrb[0].mxu0
        %722 = vmatprep.mubr.bf16.mxu0 0
        %723 = vmatmul.mubr.bf16.gmra.mrb[0].mxu0 %v664
        %v724 = vpop.f32.mrb[0].mxu0
        %v725 = vadd.f32 %v641, %v724
        %v726 = vpop.f32.mrb[0].mxu0
        %v727 = vpop.f32.mrb[0].mxu0
        %v728 = vadd.f32 %v641, %v727
        %v729 = vpop.f32.mrb[0].mxu0
        %730 = vdwg.mxu0
        %v731 = vpack.c.bf16 %v704, %v701
        %v732 = vpack.c.bf16 %v712, %v709
        %v733 = vpack.c.bf16 %v720, %v717
        %v734 = vpack.c.bf16 %v728, %v725
        %v735 = vld [vmem:[#allocation2] sm:$0xff]
        %v736 = vld [vmem:[#allocation2 + $0x8] sm:$0xff]
        %v737 = vld [vmem:[#allocation2 + $0x10] sm:$0xff]
        %v738 = vld [vmem:[#allocation2 + $0x18] sm:$0xff]
        %v739 = vld [vmem:[#allocation2 + $0x20] sm:$0xff]
        %v740 = vld [vmem:[#allocation2 + $0x28] sm:$0xff]
        %v741 = vld [vmem:[#allocation2 + $0x30] sm:$0xff]
        %v742 = vld [vmem:[#allocation2 + $0x38] sm:$0xff]
        %747 = vrot.lane.b32.xlu0 %v731, 96
        %v748 = vpop.permute.xlu0 %747
        %749 = vrot.lane.b32.xlu0 %v732, 96
        %v750 = vpop.permute.xlu0 %749
        %751 = vrot.lane.b32.xlu0 %v733, 96
        %v752 = vpop.permute.xlu0 %751
        %753 = vrot.lane.b32.xlu0 %v734, 96
        %v754 = vpop.permute.xlu0 %753
        %vm755 = vcmask 64512
        %v757 = vsel %vm755, %v731, 0
        %v760 = vsel %vm755, %v732, 0
        %v763 = vsel %vm755, %v733, 0
        %v766 = vsel %vm755, %v734, 0
        %v769 = vsel %vm755, %v748, 0
        %v772 = vsel %vm755, %v750, 0
        %v775 = vsel %vm755, %v752, 0
        %v778 = vsel %vm755, %v754, 0
        %780 = vmatprep.subr.bf16.mxu0 0
        %781 = vmatpush1.bf16.xpose.msra.mxu0 %v769
        %782 = vmatprep.subr.bf16.mxu0 0
        %783 = vmatpush1.bf16.xpose.msra.mxu0 %v772
        %784 = vmatprep.subr.bf16.mxu0 0
        %785 = vmatpush1.bf16.xpose.msra.mxu0 %v775
        %786 = vmatprep.subr.bf16.mxu0 0
        %787 = vmatpush1.bf16.xpose.msra.mxu0 %v778
        %788 = vmatprep.subr.bf16.mxu0 0
        %789 = vmatpush1.bf16.xpose.msra.mxu0 0
        %790 = vmatprep.subr.bf16.mxu0 0
        %791 = vmatpush1.bf16.xpose.msra.mxu0 0
        %792 = vmatprep.subr.bf16.mxu0 0
        %793 = vmatpush1.bf16.xpose.msra.mxu0 0
        %794 = vmatprep.subr.bf16.mxu0 0
        %795 = vmatpush1.bf16.xpose.msra.mxu0 0
        %796 = vmatprep.subr.bf16.mxu0 0
        %797 = vmatpush1.bf16.xpose.msra.mxu0 0
        %798 = vmatprep.subr.bf16.mxu0 0
        %799 = vmatpush1.bf16.xpose.msra.mxu0 0
        %800 = vmatprep.subr.bf16.mxu0 0
        %801 = vmatpush1.bf16.xpose.msra.mxu0 0
        %802 = vmatprep.subr.bf16.mxu0 0
        %803 = vmatpush1.bf16.xpose.msra.mxu0 0
        %804 = vmatprep.subr.bf16.mxu0 0
        %805 = vmatpush1.bf16.xpose.msra.mxu0 0
        %806 = vmatprep.subr.bf16.mxu0 0
        %807 = vmatpush1.bf16.xpose.msra.mxu0 0
        %808 = vmatprep.subr.bf16.mxu0 0
        %809 = vmatpush1.bf16.xpose.msra.mxu0 0
        %810 = vmatprep.subr.bf16.mxu0 0
        %811 = vmatpush1.bf16.xpose.msra.mxu0 0
        %812 = vmatprep.mubr.bf16.mxu0 0
        %813 = vmatmul.mubr.bf16.gmra.mrb[0].mxu0 %v757
        %v814 = vpop.f32.mrb[0].mxu0
        %v815 = vadd.f32 %v735, %v814
        %v816 = vpop.f32.mrb[0].mxu0
        %v817 = vpop.f32.mrb[0].mxu0
        %v818 = vadd.f32 %v736, %v817
        %v819 = vpop.f32.mrb[0].mxu0
        %820 = vmatprep.mubr.bf16.mxu0 0
        %821 = vmatmul.mubr.bf16.gmra.mrb[0].mxu0 %v760
        %v822 = vpop.f32.mrb[0].mxu0
        %v823 = vadd.f32 %v737, %v822
        %v824 = vpop.f32.mrb[0].mxu0
        %v825 = vpop.f32.mrb[0].mxu0
        %v826 = vadd.f32 %v738, %v825
        %v827 = vpop.f32.mrb[0].mxu0
        %828 = vmatprep.mubr.bf16.mxu0 0
        %829 = vmatmul.mubr.bf16.gmra.mrb[0].mxu0 %v763
        %v830 = vpop.f32.mrb[0].mxu0
        %v831 = vadd.f32 %v739, %v830
        %v832 = vpop.f32.mrb[0].mxu0
        %v833 = vpop.f32.mrb[0].mxu0
        %v834 = vadd.f32 %v740, %v833
        %v835 = vpop.f32.mrb[0].mxu0
        %836 = vmatprep.mubr.bf16.mxu0 0
        %837 = vmatmul.mubr.bf16.gmra.mrb[0].mxu0 %v766
        %v838 = vpop.f32.mrb[0].mxu0
        %v839 = vadd.f32 %v741, %v838
        %v840 = vpop.f32.mrb[0].mxu0
        %v841 = vpop.f32.mrb[0].mxu0
        %v842 = vadd.f32 %v742, %v841
        %v843 = vpop.f32.mrb[0].mxu0
        %844 = vdwg.mxu0
        %vm845 = vcmask 523264
        %v846 = vsel %vm845, %v815, -inf
        %847 = vmax.xlane.f32.xlu0 %v846
        %v848 = vpop.xlane.xlu0 %847
        %v849 = vsel %vm845, %v818, -inf
        %850 = vmax.xlane.f32.xlu0 %v849
        %v851 = vpop.xlane.xlu0 %850
        %v852 = vsel %vm845, %v823, -inf
        %853 = vmax.xlane.f32.xlu0 %v852
        %v854 = vpop.xlane.xlu0 %853
        %v855 = vsel %vm845, %v826, -inf
        %856 = vmax.xlane.f32.xlu0 %v855
        %v857 = vpop.xlane.xlu0 %856
        %v858 = vsel %vm845, %v831, -inf
        %859 = vmax.xlane.f32.xlu0 %v858
        %v860 = vpop.xlane.xlu0 %859
        %v861 = vsel %vm845, %v834, -inf
        %862 = vmax.xlane.f32.xlu0 %v861
        %v863 = vpop.xlane.xlu0 %862
        %v864 = vsel %vm845, %v839, -inf
        %865 = vmax.xlane.f32.xlu0 %v864
        %v866 = vpop.xlane.xlu0 %865
        %v867 = vsel %vm845, %v842, -inf
        %868 = vmax.xlane.f32.xlu0 %v867
        %v869 = vpop.xlane.xlu0 %868
        %v870 = vsub.f32 %v815, %v848
        %v871 = vsub.f32 %v818, %v851
        %v872 = vsub.f32 %v823, %v854
        %v873 = vsub.f32 %v826, %v857
        %v874 = vsub.f32 %v831, %v860
        %v875 = vsub.f32 %v834, %v863
        %v876 = vsub.f32 %v839, %v866
        %v877 = vsub.f32 %v842, %v869
        %v878 = vmul.f32 %v870, 1.442695
        %v879 = vpow.pop %v878
        %v880 = vmul.f32 %v871, 1.442695
        %v881 = vpow.pop %v880
        %v882 = vmul.f32 %v872, 1.442695
        %v883 = vpow.pop %v882
        %v884 = vmul.f32 %v873, 1.442695
        %v885 = vpow.pop %v884
        %v886 = vmul.f32 %v874, 1.442695
        %v887 = vpow.pop %v886
        %v888 = vmul.f32 %v875, 1.442695
        %v889 = vpow.pop %v888
        %v890 = vmul.f32 %v876, 1.442695
        %v891 = vpow.pop %v890
        %v892 = vmul.f32 %v877, 1.442695
        %v893 = vpow.pop %v892
        %v894 = vsel %vm845, %v879, 0.0
        %895 = vadd.xlane.f32.xlu0 %v894
        %v896 = vpop.xlane.xlu0 %895
        %v897 = vsel %vm845, %v881, 0.0
        %898 = vadd.xlane.f32.xlu0 %v897
        %v899 = vpop.xlane.xlu0 %898
        %v900 = vsel %vm845, %v883, 0.0
        %901 = vadd.xlane.f32.xlu0 %v900
        %v902 = vpop.xlane.xlu0 %901
        %v903 = vsel %vm845, %v885, 0.0
        %904 = vadd.xlane.f32.xlu0 %v903
        %v905 = vpop.xlane.xlu0 %904
        %v906 = vsel %vm845, %v887, 0.0
        %907 = vadd.xlane.f32.xlu0 %v906
        %v908 = vpop.xlane.xlu0 %907
        %v909 = vsel %vm845, %v889, 0.0
        %910 = vadd.xlane.f32.xlu0 %v909
        %v911 = vpop.xlane.xlu0 %910
        %v912 = vsel %vm845, %v891, 0.0
        %913 = vadd.xlane.f32.xlu0 %v912
        %v914 = vpop.xlane.xlu0 %913
        %v915 = vsel %vm845, %v893, 0.0
        %916 = vadd.xlane.f32.xlu0 %v915
        %v917 = vpop.xlane.xlu0 %916
        %v918 = vrcp.pop %v896
        %v919 = vrcp.pop %v899
        %v920 = vrcp.pop %v902
        %v921 = vrcp.pop %v905
        %v922 = vrcp.pop %v908
        %v923 = vrcp.pop %v911
        %v924 = vrcp.pop %v914
        %v925 = vrcp.pop %v917
        %v926 = vmul.f32 %v879, %v918
        %v927 = vmul.f32 %v881, %v919
        %v928 = vmul.f32 %v883, %v920
        %v929 = vmul.f32 %v885, %v921
        %v930 = vmul.f32 %v887, %v922
        %v931 = vmul.f32 %v889, %v923
        %v932 = vmul.f32 %v891, %v924
        %v933 = vmul.f32 %v893, %v925
        %v934 = vpack.c.bf16 %v927, %v926
        %v935 = vpack.c.bf16 %v929, %v928
        %v936 = vpack.c.bf16 %v931, %v930
        %v937 = vpack.c.bf16 %v933, %v932
        %938 = vrot.lane.b32.xlu0 %v731, 64
        %v939 = vpop.permute.xlu0 %938
        %940 = vrot.lane.b32.xlu0 %v732, 64
        %v941 = vpop.permute.xlu0 %940
        %942 = vrot.lane.b32.xlu0 %v733, 64
        %v943 = vpop.permute.xlu0 %942
        %944 = vrot.lane.b32.xlu0 %v734, 64
        %v945 = vpop.permute.xlu0 %944
        %v951 = vsel %vm845, %v934, 0
        %v954 = vsel %vm845, %v935, 0
        %v957 = vsel %vm845, %v936, 0
        %v960 = vsel %vm845, %v937, 0
        %962 = vmatprep.subr.bf16.mxu0 0
        %963 = vmatpush1.bf16.msra.mxu0 %v939
        %964 = vmatprep.subr.bf16.mxu0 0
        %965 = vmatpush1.bf16.msra.mxu0 %v941
        %966 = vmatprep.subr.bf16.mxu0 0
        %967 = vmatpush1.bf16.msra.mxu0 %v943
        %968 = vmatprep.subr.bf16.mxu0 0
        %969 = vmatpush1.bf16.msra.mxu0 %v945
        %970 = vmatprep.subr.bf16.mxu0 0
        %971 = vmatpush1.bf16.msra.mxu0 0
        %972 = vmatprep.subr.bf16.mxu0 0
        %973 = vmatpush1.bf16.msra.mxu0 0
        %974 = vmatprep.subr.bf16.mxu0 0
        %975 = vmatpush1.bf16.msra.mxu0 0
        %976 = vmatprep.subr.bf16.mxu0 0
        %977 = vmatpush1.bf16.msra.mxu0 0
        %978 = vmatprep.subr.bf16.mxu0 0
        %979 = vmatpush1.bf16.msra.mxu0 0
        %980 = vmatprep.subr.bf16.mxu0 0
        %981 = vmatpush1.bf16.msra.mxu0 0
        %982 = vmatprep.subr.bf16.mxu0 0
        %983 = vmatpush1.bf16.msra.mxu0 0
        %984 = vmatprep.subr.bf16.mxu0 0
        %985 = vmatpush1.bf16.msra.mxu0 0
        %986 = vmatprep.subr.bf16.mxu0 0
        %987 = vmatpush1.bf16.msra.mxu0 0
        %988 = vmatprep.subr.bf16.mxu0 0
        %989 = vmatpush1.bf16.msra.mxu0 0
        %990 = vmatprep.subr.bf16.mxu0 0
        %991 = vmatpush1.bf16.msra.mxu0 0
        %992 = vmatprep.subr.bf16.mxu0 0
        %993 = vmatpush1.bf16.msra.mxu0 0
        %994 = vmatprep.mubr.bf16.mxu0 0
        %995 = vmatmul.mubr.bf16.gmra.mrb[0].mxu0 %v951
        %v996 = vpop.f32.mrb[0].mxu0
        %v997 = vadd.f32 0.0, %v996
        %v998 = vpop.f32.mrb[0].mxu0
        %v999 = vpop.f32.mrb[0].mxu0
        %v1000 = vadd.f32 0.0, %v999
        %v1001 = vpop.f32.mrb[0].mxu0
        %1002 = vmatprep.mubr.bf16.mxu0 0
        %1003 = vmatmul.mubr.bf16.gmra.mrb[0].mxu0 %v954
        %v1004 = vpop.f32.mrb[0].mxu0
        %v1005 = vadd.f32 0.0, %v1004
        %v1006 = vpop.f32.mrb[0].mxu0
        %v1007 = vpop.f32.mrb[0].mxu0
        %v1008 = vadd.f32 0.0, %v1007
        %v1009 = vpop.f32.mrb[0].mxu0
        %1010 = vmatprep.mubr.bf16.mxu0 0
        %1011 = vmatmul.mubr.bf16.gmra.mrb[0].mxu0 %v957
        %v1012 = vpop.f32.mrb[0].mxu0
        %v1013 = vadd.f32 0.0, %v1012
        %v1014 = vpop.f32.mrb[0].mxu0
        %v1015 = vpop.f32.mrb[0].mxu0
        %v1016 = vadd.f32 0.0, %v1015
        %v1017 = vpop.f32.mrb[0].mxu0
        %1018 = vmatprep.mubr.bf16.mxu0 0
        %1019 = vmatmul.mubr.bf16.gmra.mrb[0].mxu0 %v960
        %v1020 = vpop.f32.mrb[0].mxu0
        %v1021 = vadd.f32 0.0, %v1020
        %v1022 = vpop.f32.mrb[0].mxu0
        %v1023 = vpop.f32.mrb[0].mxu0
        %v1024 = vadd.f32 0.0, %v1023
        %v1025 = vpop.f32.mrb[0].mxu0
        %1026 = vdwg.mxu0
        %v1027 = vpack.c.bf16 %v1000, %v997
        %v1028 = vpack.c.bf16 %v1008, %v1005
        %v1029 = vpack.c.bf16 %v1016, %v1013
        %v1030 = vpack.c.bf16 %v1024, %v1021
        %v1031 = vld [vmem:[%s5] sm:$0xf]
        %s1032 = scalar_lea.vmem [#allocation2], 64
        %v1033 = vld [vmem:[%s1032] sm:$0xff]
        %v1034 = vld [vmem:[%s1032 + $0x8] sm:$0xff]
        %v1035 = vld [vmem:[%s1032 + $0x10] sm:$0xff]
        %v1036 = vld [vmem:[%s1032 + $0x18] sm:$0xff]
        %v1037 = vld [vmem:[%s1032 + $0x20] sm:$0xff]
        %v1038 = vld [vmem:[%s1032 + $0x28] sm:$0xff]
        %v1039 = vld [vmem:[%s1032 + $0x30] sm:$0xff]
        %v1040 = vld [vmem:[%s1032 + $0x38] sm:$0xff]
        %1041 = vrot.lane.b32.xlu0 %v731, 120
        %v1042 = vpop.permute.xlu0 %1041
        %1043 = vrot.lane.b32.xlu0 %v732, 120
        %v1044 = vpop.permute.xlu0 %1043
        %1045 = vrot.lane.b32.xlu0 %v733, 120
        %v1046 = vpop.permute.xlu0 %1045
        %1047 = vrot.lane.b32.xlu0 %v734, 120
        %v1048 = vpop.permute.xlu0 %1047
        %1049 = vrot.lane.b32.xlu0 %v731, 88
        %v1050 = vpop.permute.xlu0 %1049
        %1051 = vrot.lane.b32.xlu0 %v732, 88
        %v1052 = vpop.permute.xlu0 %1051
        %1053 = vrot.lane.b32.xlu0 %v733, 88
        %v1054 = vpop.permute.xlu0 %1053
        %1055 = vrot.lane.b32.xlu0 %v734, 88
        %v1056 = vpop.permute.xlu0 %1055
        %v1058 = vsel %vm755, %v1042, 0
        %v1061 = vsel %vm755, %v1044, 0
        %v1064 = vsel %vm755, %v1046, 0
        %v1067 = vsel %vm755, %v1048, 0
        %v1070 = vsel %vm755, %v1050, 0
        %v1073 = vsel %vm755, %v1052, 0
        %v1076 = vsel %vm755, %v1054, 0
        %v1079 = vsel %vm755, %v1056, 0
        %1081 = vmatprep.subr.bf16.mxu0 0
        %1082 = vmatpush1.bf16.xpose.msra.mxu0 %v1070
        %1083 = vmatprep.subr.bf16.mxu0 0
        %1084 = vmatpush1.bf16.xpose.msra.mxu0 %v1073
        %1085 = vmatprep.subr.bf16.mxu0 0
        %1086 = vmatpush1.bf16.xpose.msra.mxu0 %v1076
        %1087 = vmatprep.subr.bf16.mxu0 0
        %1088 = vmatpush1.bf16.xpose.msra.mxu0 %v1079
        %1089 = vmatprep.subr.bf16.mxu0 0
        %1090 = vmatpush1.bf16.xpose.msra.mxu0 0
        %1091 = vmatprep.subr.bf16.mxu0 0
        %1092 = vmatpush1.bf16.xpose.msra.mxu0 0
        %1093 = vmatprep.subr.bf16.mxu0 0
        %1094 = vmatpush1.bf16.xpose.msra.mxu0 0
        %1095 = vmatprep.subr.bf16.mxu0 0
        %1096 = vmatpush1.bf16.xpose.msra.mxu0 0
        %1097 = vmatprep.subr.bf16.mxu0 0
        %1098 = vmatpush1.bf16.xpose.msra.mxu0 0
        %1099 = vmatprep.subr.bf16.mxu0 0
        %1100 = vmatpush1.bf16.xpose.msra.mxu0 0
        %1101 = vmatprep.subr.bf16.mxu0 0
        %1102 = vmatpush1.bf16.xpose.msra.mxu0 0
        %1103 = vmatprep.subr.bf16.mxu0 0
        %1104 = vmatpush1.bf16.xpose.msra.mxu0 0
        %1105 = vmatprep.subr.bf16.mxu0 0
        %1106 = vmatpush1.bf16.xpose.msra.mxu0 0
        %1107 = vmatprep.subr.bf16.mxu0 0
        %1108 = vmatpush1.bf16.xpose.msra.mxu0 0
        %1109 = vmatprep.subr.bf16.mxu0 0
        %1110 = vmatpush1.bf16.xpose.msra.mxu0 0
        %1111 = vmatprep.subr.bf16.mxu0 0
        %1112 = vmatpush1.bf16.xpose.msra.mxu0 0
        %1113 = vmatprep.mubr.bf16.mxu0 0
        %1114 = vmatmul.mubr.bf16.gmra.mrb[0].mxu0 %v1058
        %v1115 = vpop.f32.mrb[0].mxu0
        %v1116 = vadd.f32 %v1033, %v1115
        %v1117 = vpop.f32.mrb[0].mxu0
        %v1118 = vpop.f32.mrb[0].mxu0
        %v1119 = vadd.f32 %v1034, %v1118
        %v1120 = vpop.f32.mrb[0].mxu0
        %1121 = vmatprep.mubr.bf16.mxu0 0
        %1122 = vmatmul.mubr.bf16.gmra.mrb[0].mxu0 %v1061
        %v1123 = vpop.f32.mrb[0].mxu0
        %v1124 = vadd.f32 %v1035, %v1123
        %v1125 = vpop.f32.mrb[0].mxu0
        %v1126 = vpop.f32.mrb[0].mxu0
        %v1127 = vadd.f32 %v1036, %v1126
        %v1128 = vpop.f32.mrb[0].mxu0
        %1129 = vmatprep.mubr.bf16.mxu0 0
        %1130 = vmatmul.mubr.bf16.gmra.mrb[0].mxu0 %v1064
        %v1131 = vpop.f32.mrb[0].mxu0
        %v1132 = vadd.f32 %v1037, %v1131
        %v1133 = vpop.f32.mrb[0].mxu0
        %v1134 = vpop.f32.mrb[0].mxu0
        %v1135 = vadd.f32 %v1038, %v1134
        %v1136 = vpop.f32.mrb[0].mxu0
        %1137 = vmatprep.mubr.bf16.mxu0 0
        %1138 = vmatmul.mubr.bf16.gmra.mrb[0].mxu0 %v1067
        %v1139 = vpop.f32.mrb[0].mxu0
        %v1140 = vadd.f32 %v1039, %v1139
        %v1141 = vpop.f32.mrb[0].mxu0
        %v1142 = vpop.f32.mrb[0].mxu0
        %v1143 = vadd.f32 %v1040, %v1142
        %v1144 = vpop.f32.mrb[0].mxu0
        %1145 = vdwg.mxu0
        %v1146 = vsel %vm845, %v1116, -inf
        %1147 = vmax.xlane.f32.xlu0 %v1146
        %v1148 = vpop.xlane.xlu0 %1147
        %v1149 = vsel %vm845, %v1119, -inf
        %1150 = vmax.xlane.f32.xlu0 %v1149
        %v1151 = vpop.xlane.xlu0 %1150
        %v1152 = vsel %vm845, %v1124, -inf
        %1153 = vmax.xlane.f32.xlu0 %v1152
        %v1154 = vpop.xlane.xlu0 %1153
        %v1155 = vsel %vm845, %v1127, -inf
        %1156 = vmax.xlane.f32.xlu0 %v1155
        %v1157 = vpop.xlane.xlu0 %1156
        %v1158 = vsel %vm845, %v1132, -inf
        %1159 = vmax.xlane.f32.xlu0 %v1158
        %v1160 = vpop.xlane.xlu0 %1159
        %v1161 = vsel %vm845, %v1135, -inf
        %1162 = vmax.xlane.f32.xlu0 %v1161
        %v1163 = vpop.xlane.xlu0 %1162
        %v1164 = vsel %vm845, %v1140, -inf
        %1165 = vmax.xlane.f32.xlu0 %v1164
        %v1166 = vpop.xlane.xlu0 %1165
        %v1167 = vsel %vm845, %v1143, -inf
        %1168 = vmax.xlane.f32.xlu0 %v1167
        %v1169 = vpop.xlane.xlu0 %1168
        %v1170 = vsub.f32 %v1116, %v1148
        %v1171 = vsub.f32 %v1119, %v1151
        %v1172 = vsub.f32 %v1124, %v1154
        %v1173 = vsub.f32 %v1127, %v1157
        %v1174 = vsub.f32 %v1132, %v1160
        %v1175 = vsub.f32 %v1135, %v1163
        %v1176 = vsub.f32 %v1140, %v1166
        %v1177 = vsub.f32 %v1143, %v1169
        %v1178 = vmul.f32 %v1170, 1.442695
        %v1179 = vpow.pop %v1178
        %v1180 = vmul.f32 %v1171, 1.442695
        %v1181 = vpow.pop %v1180
        %v1182 = vmul.f32 %v1172, 1.442695
        %v1183 = vpow.pop %v1182
        %v1184 = vmul.f32 %v1173, 1.442695
        %v1185 = vpow.pop %v1184
        %v1186 = vmul.f32 %v1174, 1.442695
        %v1187 = vpow.pop %v1186
        %v1188 = vmul.f32 %v1175, 1.442695
        %v1189 = vpow.pop %v1188
        %v1190 = vmul.f32 %v1176, 1.442695
        %v1191 = vpow.pop %v1190
        %v1192 = vmul.f32 %v1177, 1.442695
        %v1193 = vpow.pop %v1192
        %v1194 = vsel %vm845, %v1179, 0.0
        %1195 = vadd.xlane.f32.xlu0 %v1194
        %v1196 = vpop.xlane.xlu0 %1195
        %v1197 = vsel %vm845, %v1181, 0.0
        %1198 = vadd.xlane.f32.xlu0 %v1197
        %v1199 = vpop.xlane.xlu0 %1198
        %v1200 = vsel %vm845, %v1183, 0.0
        %1201 = vadd.xlane.f32.xlu0 %v1200
        %v1202 = vpop.xlane.xlu0 %1201
        %v1203 = vsel %vm845, %v1185, 0.0
        %1204 = vadd.xlane.f32.xlu0 %v1203
        %v1205 = vpop.xlane.xlu0 %1204
        %v1206 = vsel %vm845, %v1187, 0.0
        %1207 = vadd.xlane.f32.xlu0 %v1206
        %v1208 = vpop.xlane.xlu0 %1207
        %v1209 = vsel %vm845, %v1189, 0.0
        %1210 = vadd.xlane.f32.xlu0 %v1209
        %v1211 = vpop.xlane.xlu0 %1210
        %v1212 = vsel %vm845, %v1191, 0.0
        %1213 = vadd.xlane.f32.xlu0 %v1212
        %v1214 = vpop.xlane.xlu0 %1213
        %v1215 = vsel %vm845, %v1193, 0.0
        %1216 = vadd.xlane.f32.xlu0 %v1215
        %v1217 = vpop.xlane.xlu0 %1216
        %v1218 = vrcp.pop %v1196
        %v1219 = vrcp.pop %v1199
        %v1220 = vrcp.pop %v1202
        %v1221 = vrcp.pop %v1205
        %v1222 = vrcp.pop %v1208
        %v1223 = vrcp.pop %v1211
        %v1224 = vrcp.pop %v1214
        %v1225 = vrcp.pop %v1217
        %v1226 = vmul.f32 %v1179, %v1218
        %v1227 = vmul.f32 %v1181, %v1219
        %v1228 = vmul.f32 %v1183, %v1220
        %v1229 = vmul.f32 %v1185, %v1221
        %v1230 = vmul.f32 %v1187, %v1222
        %v1231 = vmul.f32 %v1189, %v1223
        %v1232 = vmul.f32 %v1191, %v1224
        %v1233 = vmul.f32 %v1193, %v1225
        %v1234 = vpack.c.bf16 %v1227, %v1226
        %v1235 = vpack.c.bf16 %v1229, %v1228
        %v1236 = vpack.c.bf16 %v1231, %v1230
        %v1237 = vpack.c.bf16 %v1233, %v1232
        %1238 = vrot.lane.b32.xlu0 %v731, 56
        %v1239 = vpop.permute.xlu0 %1238
        %1240 = vrot.lane.b32.xlu0 %v732, 56
        %v1241 = vpop.permute.xlu0 %1240
        %1242 = vrot.lane.b32.xlu0 %v733, 56
        %v1243 = vpop.permute.xlu0 %1242
        %1244 = vrot.lane.b32.xlu0 %v734, 56
        %v1245 = vpop.permute.xlu0 %1244
        %v1251 = vsel %vm845, %v1234, 0
        %v1254 = vsel %vm845, %v1235, 0
        %v1257 = vsel %vm845, %v1236, 0
        %v1260 = vsel %vm845, %v1237, 0
        %1262 = vmatprep.subr.bf16.mxu0 0
        %1263 = vmatpush1.bf16.msra.mxu0 %v1239
        %1264 = vmatprep.subr.bf16.mxu0 0
        %1265 = vmatpush1.bf16.msra.mxu0 %v1241
        %1266 = vmatprep.subr.bf16.mxu0 0
        %1267 = vmatpush1.bf16.msra.mxu0 %v1243
        %1268 = vmatprep.subr.bf16.mxu0 0
        %1269 = vmatpush1.bf16.msra.mxu0 %v1245
        %1270 = vmatprep.subr.bf16.mxu0 0
        %1271 = vmatpush1.bf16.msra.mxu0 0
        %1272 = vmatprep.subr.bf16.mxu0 0
        %1273 = vmatpush1.bf16.msra.mxu0 0
        %1274 = vmatprep.subr.bf16.mxu0 0
        %1275 = vmatpush1.bf16.msra.mxu0 0
        %1276 = vmatprep.subr.bf16.mxu0 0
        %1277 = vmatpush1.bf16.msra.mxu0 0
        %1278 = vmatprep.subr.bf16.mxu0 0
        %1279 = vmatpush1.bf16.msra.mxu0 0
        %1280 = vmatprep.subr.bf16.mxu0 0
        %1281 = vmatpush1.bf16.msra.mxu0 0
        %1282 = vmatprep.subr.bf16.mxu0 0
        %1283 = vmatpush1.bf16.msra.mxu0 0
        %1284 = vmatprep.subr.bf16.mxu0 0
        %1285 = vmatpush1.bf16.msra.mxu0 0
        %1286 = vmatprep.subr.bf16.mxu0 0
        %1287 = vmatpush1.bf16.msra.mxu0 0
        %1288 = vmatprep.subr.bf16.mxu0 0
        %1289 = vmatpush1.bf16.msra.mxu0 0
        %1290 = vmatprep.subr.bf16.mxu0 0
        %1291 = vmatpush1.bf16.msra.mxu0 0
        %1292 = vmatprep.subr.bf16.mxu0 0
        %1293 = vmatpush1.bf16.msra.mxu0 0
        %1294 = vmatprep.mubr.bf16.mxu0 0
        %1295 = vmatmul.mubr.bf16.gmra.mrb[0].mxu0 %v1251
        %v1296 = vpop.f32.mrb[0].mxu0
        %v1297 = vadd.f32 0.0, %v1296
        %v1298 = vpop.f32.mrb[0].mxu0
        %v1299 = vpop.f32.mrb[0].mxu0
        %v1300 = vadd.f32 0.0, %v1299
        %v1301 = vpop.f32.mrb[0].mxu0
        %1302 = vmatprep.mubr.bf16.mxu0 0
        %1303 = vmatmul.mubr.bf16.gmra.mrb[0].mxu0 %v1254
        %v1304 = vpop.f32.mrb[0].mxu0
        %v1305 = vadd.f32 0.0, %v1304
        %v1306 = vpop.f32.mrb[0].mxu0
        %v1307 = vpop.f32.mrb[0].mxu0
        %v1308 = vadd.f32 0.0, %v1307
        %v1309 = vpop.f32.mrb[0].mxu0
        %1310 = vmatprep.mubr.bf16.mxu0 0
        %1311 = vmatmul.mubr.bf16.gmra.mrb[0].mxu0 %v1257
        %v1312 = vpop.f32.mrb[0].mxu0
        %v1313 = vadd.f32 0.0, %v1312
        %v1314 = vpop.f32.mrb[0].mxu0
        %v1315 = vpop.f32.mrb[0].mxu0
        %v1316 = vadd.f32 0.0, %v1315
        %v1317 = vpop.f32.mrb[0].mxu0
        %1318 = vmatprep.mubr.bf16.mxu0 0
        %1319 = vmatmul.mubr.bf16.gmra.mrb[0].mxu0 %v1260
        %v1320 = vpop.f32.mrb[0].mxu0
        %v1321 = vadd.f32 0.0, %v1320
        %v1322 = vpop.f32.mrb[0].mxu0
        %v1323 = vpop.f32.mrb[0].mxu0
        %v1324 = vadd.f32 0.0, %v1323
        %v1325 = vpop.f32.mrb[0].mxu0
        %1326 = vdwg.mxu0
        %v1327 = vpack.c.bf16 %v1300, %v1297
        %v1328 = vpack.c.bf16 %v1308, %v1305
        %v1329 = vpack.c.bf16 %v1316, %v1313
        %v1330 = vpack.c.bf16 %v1324, %v1321
        %s1331 = scalar_lea.vmem %s5, 4
        %v1332 = vld [vmem:[%s1331] sm:$0xf]
        %v1334 = vsel %vm755, %v1327, 0
        %v1337 = vsel %vm755, %v1328, 0
        %v1340 = vsel %vm755, %v1329, 0
        %v1343 = vsel %vm755, %v1330, 0
        %vm1345 = vcmask 1043456
        %v1347 = vsel %vm1345, %v1332, 0
        %1349 = vmatprep.subr.bf16.mxu0 0
        %1350 = vmatpush1.bf16.msra.mxu0 %v1347
        %1351 = vmatprep.subr.bf16.mxu0 0
        %1352 = vmatpush1.bf16.msra.mxu0 0
        %1353 = vmatprep.subr.bf16.mxu0 0
        %1354 = vmatpush1.bf16.msra.mxu0 0
        %1355 = vmatprep.subr.bf16.mxu0 0
        %1356 = vmatpush1.bf16.msra.mxu0 0
        %1357 = vmatprep.subr.bf16.mxu0 0
        %1358 = vmatpush1.bf16.msra.mxu0 0
        %1359 = vmatprep.subr.bf16.mxu0 0
        %1360 = vmatpush1.bf16.msra.mxu0 0
        %1361 = vmatprep.subr.bf16.mxu0 0
        %1362 = vmatpush1.bf16.msra.mxu0 0
        %1363 = vmatprep.subr.bf16.mxu0 0
        %1364 = vmatpush1.bf16.msra.mxu0 0
        %1365 = vmatprep.subr.bf16.mxu0 0
        %1366 = vmatpush1.bf16.msra.mxu0 0
        %1367 = vmatprep.subr.bf16.mxu0 0
        %1368 = vmatpush1.bf16.msra.mxu0 0
        %1369 = vmatprep.subr.bf16.mxu0 0
        %1370 = vmatpush1.bf16.msra.mxu0 0
        %1371 = vmatprep.subr.bf16.mxu0 0
        %1372 = vmatpush1.bf16.msra.mxu0 0
        %1373 = vmatprep.subr.bf16.mxu0 0
        %1374 = vmatpush1.bf16.msra.mxu0 0
        %1375 = vmatprep.subr.bf16.mxu0 0
        %1376 = vmatpush1.bf16.msra.mxu0 0
        %1377 = vmatprep.subr.bf16.mxu0 0
        %1378 = vmatpush1.bf16.msra.mxu0 0
        %1379 = vmatprep.subr.bf16.mxu0 0
        %1380 = vmatpush1.bf16.msra.mxu0 0
        %1381 = vmatprep.mubr.bf16.mxu0 0
        %1382 = vmatmul.mubr.bf16.gmra.mrb[0].mxu0 %v1334
        %v1383 = vpop.f32.mrb[0].mxu0
        %v1384 = vadd.f32 0.0, %v1383
        %v1385 = vpop.f32.mrb[0].mxu0
        %v1386 = vpop.f32.mrb[0].mxu0
        %v1387 = vadd.f32 0.0, %v1386
        %v1388 = vpop.f32.mrb[0].mxu0
        %1389 = vmatprep.mubr.bf16.mxu0 0
        %1390 = vmatmul.mubr.bf16.gmra.mrb[0].mxu0 %v1337
        %v1391 = vpop.f32.mrb[0].mxu0
        %v1392 = vadd.f32 0.0, %v1391
        %v1393 = vpop.f32.mrb[0].mxu0
        %v1394 = vpop.f32.mrb[0].mxu0
        %v1395 = vadd.f32 0.0, %v1394
        %v1396 = vpop.f32.mrb[0].mxu0
        %1397 = vmatprep.mubr.bf16.mxu0 0
        %1398 = vmatmul.mubr.bf16.gmra.mrb[0].mxu0 %v1340
        %v1399 = vpop.f32.mrb[0].mxu0
        %v1400 = vadd.f32 0.0, %v1399
        %v1401 = vpop.f32.mrb[0].mxu0
        %v1402 = vpop.f32.mrb[0].mxu0
        %v1403 = vadd.f32 0.0, %v1402
        %v1404 = vpop.f32.mrb[0].mxu0
        %1405 = vmatprep.mubr.bf16.mxu0 0
        %1406 = vmatmul.mubr.bf16.gmra.mrb[0].mxu0 %v1343
        %v1407 = vpop.f32.mrb[0].mxu0
        %v1408 = vadd.f32 0.0, %v1407
        %v1409 = vpop.f32.mrb[0].mxu0
        %v1410 = vpop.f32.mrb[0].mxu0
        %v1411 = vadd.f32 0.0, %v1410
        %v1412 = vpop.f32.mrb[0].mxu0
        %1413 = vdwg.mxu0
        %v1415 = vsel %vm755, %v1027, 0
        %v1418 = vsel %vm755, %v1028, 0
        %v1421 = vsel %vm755, %v1029, 0
        %v1424 = vsel %vm755, %v1030, 0
        %v1427 = vsel %vm1345, %v1031, 0
        %1429 = vmatprep.subr.bf16.mxu0 0
        %1430 = vmatpush1.bf16.msra.mxu0 %v1427
        %1431 = vmatprep.subr.bf16.mxu0 0
        %1432 = vmatpush1.bf16.msra.mxu0 0
        %1433 = vmatprep.subr.bf16.mxu0 0
        %1434 = vmatpush1.bf16.msra.mxu0 0
        %1435 = vmatprep.subr.bf16.mxu0 0
        %1436 = vmatpush1.bf16.msra.mxu0 0
        %1437 = vmatprep.subr.bf16.mxu0 0
        %1438 = vmatpush1.bf16.msra.mxu0 0
        %1439 = vmatprep.subr.bf16.mxu0 0
        %1440 = vmatpush1.bf16.msra.mxu0 0
        %1441 = vmatprep.subr.bf16.mxu0 0
        %1442 = vmatpush1.bf16.msra.mxu0 0
        %1443 = vmatprep.subr.bf16.mxu0 0
        %1444 = vmatpush1.bf16.msra.mxu0 0
        %1445 = vmatprep.subr.bf16.mxu0 0
        %1446 = vmatpush1.bf16.msra.mxu0 0
        %1447 = vmatprep.subr.bf16.mxu0 0
        %1448 = vmatpush1.bf16.msra.mxu0 0
        %1449 = vmatprep.subr.bf16.mxu0 0
        %1450 = vmatpush1.bf16.msra.mxu0 0
        %1451 = vmatprep.subr.bf16.mxu0 0
        %1452 = vmatpush1.bf16.msra.mxu0 0
        %1453 = vmatprep.subr.bf16.mxu0 0
        %1454 = vmatpush1.bf16.msra.mxu0 0
        %1455 = vmatprep.subr.bf16.mxu0 0
        %1456 = vmatpush1.bf16.msra.mxu0 0
        %1457 = vmatprep.subr.bf16.mxu0 0
        %1458 = vmatpush1.bf16.msra.mxu0 0
        %1459 = vmatprep.subr.bf16.mxu0 0
        %1460 = vmatpush1.bf16.msra.mxu0 0
        %1461 = vmatprep.mubr.bf16.mxu0 0
        %1462 = vmatmul.mubr.bf16.gmra.mrb[0].mxu0 %v1415
        %v1463 = vpop.f32.mrb[0].mxu0
        %v1464 = vadd.f32 %v1384, %v1463
        %v1465 = vpop.f32.mrb[0].mxu0
        %v1466 = vpop.f32.mrb[0].mxu0
        %v1467 = vadd.f32 %v1387, %v1466
        %v1468 = vpop.f32.mrb[0].mxu0
        %1469 = vmatprep.mubr.bf16.mxu0 0
        %1470 = vmatmul.mubr.bf16.gmra.mrb[0].mxu0 %v1418
        %v1471 = vpop.f32.mrb[0].mxu0
        %v1472 = vadd.f32 %v1392, %v1471
        %v1473 = vpop.f32.mrb[0].mxu0
        %v1474 = vpop.f32.mrb[0].mxu0
        %v1475 = vadd.f32 %v1395, %v1474
        %v1476 = vpop.f32.mrb[0].mxu0
        %1477 = vmatprep.mubr.bf16.mxu0 0
        %1478 = vmatmul.mubr.bf16.gmra.mrb[0].mxu0 %v1421
        %v1479 = vpop.f32.mrb[0].mxu0
        %v1480 = vadd.f32 %v1400, %v1479
        %v1481 = vpop.f32.mrb[0].mxu0
        %v1482 = vpop.f32.mrb[0].mxu0
        %v1483 = vadd.f32 %v1403, %v1482
        %v1484 = vpop.f32.mrb[0].mxu0
        %1485 = vmatprep.mubr.bf16.mxu0 0
        %1486 = vmatmul.mubr.bf16.gmra.mrb[0].mxu0 %v1424
        %v1487 = vpop.f32.mrb[0].mxu0
        %v1488 = vadd.f32 %v1408, %v1487
        %v1489 = vpop.f32.mrb[0].mxu0
        %v1490 = vpop.f32.mrb[0].mxu0
        %v1491 = vadd.f32 %v1411, %v1490
        %v1492 = vpop.f32.mrb[0].mxu0
        %1493 = vdwg.mxu0
        %s1494 = scalar_lea.vmem [#allocation2], 128
        %v1495 = vld [vmem:[%s1494] sm:$0xff]
        %v1496 = vld [vmem:[%s1494 + $0x8] sm:$0xff]
        %v1497 = vld [vmem:[%s1494 + $0x10] sm:$0xff]
        %v1498 = vld [vmem:[%s1494 + $0x18] sm:$0xff]
        %v1499 = vld [vmem:[%s1494 + $0x20] sm:$0xff]
        %v1500 = vld [vmem:[%s1494 + $0x28] sm:$0xff]
        %v1501 = vld [vmem:[%s1494 + $0x30] sm:$0xff]
        %v1502 = vld [vmem:[%s1494 + $0x38] sm:$0xff]
        %1503 = vrot.lane.b32.xlu0 %v731, 112
        %v1504 = vpop.permute.xlu0 %1503
        %1505 = vrot.lane.b32.xlu0 %v732, 112
        %v1506 = vpop.permute.xlu0 %1505
        %1507 = vrot.lane.b32.xlu0 %v733, 112
        %v1508 = vpop.permute.xlu0 %1507
        %1509 = vrot.lane.b32.xlu0 %v734, 112
        %v1510 = vpop.permute.xlu0 %1509
        %1511 = vrot.lane.b32.xlu0 %v731, 80
        %v1512 = vpop.permute.xlu0 %1511
        %1513 = vrot.lane.b32.xlu0 %v732, 80
        %v1514 = vpop.permute.xlu0 %1513
        %1515 = vrot.lane.b32.xlu0 %v733, 80
        %v1516 = vpop.permute.xlu0 %1515
        %1517 = vrot.lane.b32.xlu0 %v734, 80
        %v1518 = vpop.permute.xlu0 %1517
        %v1520 = vsel %vm755, %v1504, 0
        %v1523 = vsel %vm755, %v1506, 0
        %v1526 = vsel %vm755, %v1508, 0
        %v1529 = vsel %vm755, %v1510, 0
        %v1532 = vsel %vm755, %v1512, 0
        %v1535 = vsel %vm755, %v1514, 0
        %v1538 = vsel %vm755, %v1516, 0
        %v1541 = vsel %vm755, %v1518, 0
        %1543 = vmatprep.subr.bf16.mxu0 0
        %1544 = vmatpush1.bf16.xpose.msra.mxu0 %v1532
        %1545 = vmatprep.subr.bf16.mxu0 0
        %1546 = vmatpush1.bf16.xpose.msra.mxu0 %v1535
        %1547 = vmatprep.subr.bf16.mxu0 0
        %1548 = vmatpush1.bf16.xpose.msra.mxu0 %v1538
        %1549 = vmatprep.subr.bf16.mxu0 0
        %1550 = vmatpush1.bf16.xpose.msra.mxu0 %v1541
        %1551 = vmatprep.subr.bf16.mxu0 0
        %1552 = vmatpush1.bf16.xpose.msra.mxu0 0
        %1553 = vmatprep.subr.bf16.mxu0 0
        %1554 = vmatpush1.bf16.xpose.msra.mxu0 0
        %1555 = vmatprep.subr.bf16.mxu0 0
        %1556 = vmatpush1.bf16.xpose.msra.mxu0 0
        %1557 = vmatprep.subr.bf16.mxu0 0
        %1558 = vmatpush1.bf16.xpose.msra.mxu0 0
        %1559 = vmatprep.subr.bf16.mxu0 0
        %1560 = vmatpush1.bf16.xpose.msra.mxu0 0
        %1561 = vmatprep.subr.bf16.mxu0 0
        %1562 = vmatpush1.bf16.xpose.msra.mxu0 0
        %1563 = vmatprep.subr.bf16.mxu0 0
        %1564 = vmatpush1.bf16.xpose.msra.mxu0 0
        %1565 = vmatprep.subr.bf16.mxu0 0
        %1566 = vmatpush1.bf16.xpose.msra.mxu0 0
        %1567 = vmatprep.subr.bf16.mxu0 0
        %1568 = vmatpush1.bf16.xpose.msra.mxu0 0
        %1569 = vmatprep.subr.bf16.mxu0 0
        %1570 = vmatpush1.bf16.xpose.msra.mxu0 0
        %1571 = vmatprep.subr.bf16.mxu0 0
        %1572 = vmatpush1.bf16.xpose.msra.mxu0 0
        %1573 = vmatprep.subr.bf16.mxu0 0
        %1574 = vmatpush1.bf16.xpose.msra.mxu0 0
        %1575 = vmatprep.mubr.bf16.mxu0 0
        %1576 = vmatmul.mubr.bf16.gmra.mrb[0].mxu0 %v1520
        %v1577 = vpop.f32.mrb[0].mxu0
        %v1578 = vadd.f32 %v1495, %v1577
        %v1579 = vpop.f32.mrb[0].mxu0
        %v1580 = vpop.f32.mrb[0].mxu0
        %v1581 = vadd.f32 %v1496, %v1580
        %v1582 = vpop.f32.mrb[0].mxu0
        %1583 = vmatprep.mubr.bf16.mxu0 0
        %1584 = vmatmul.mubr.bf16.gmra.mrb[0].mxu0 %v1523
        %v1585 = vpop.f32.mrb[0].mxu0
        %v1586 = vadd.f32 %v1497, %v1585
        %v1587 = vpop.f32.mrb[0].mxu0
        %v1588 = vpop.f32.mrb[0].mxu0
        %v1589 = vadd.f32 %v1498, %v1588
        %v1590 = vpop.f32.mrb[0].mxu0
        %1591 = vmatprep.mubr.bf16.mxu0 0
        %1592 = vmatmul.mubr.bf16.gmra.mrb[0].mxu0 %v1526
        %v1593 = vpop.f32.mrb[0].mxu0
        %v1594 = vadd.f32 %v1499, %v1593
        %v1595 = vpop.f32.mrb[0].mxu0
        %v1596 = vpop.f32.mrb[0].mxu0
        %v1597 = vadd.f32 %v1500, %v1596
        %v1598 = vpop.f32.mrb[0].mxu0
        %1599 = vmatprep.mubr.bf16.mxu0 0
        %1600 = vmatmul.mubr.bf16.gmra.mrb[0].mxu0 %v1529
        %v1601 = vpop.f32.mrb[0].mxu0
        %v1602 = vadd.f32 %v1501, %v1601
        %v1603 = vpop.f32.mrb[0].mxu0
        %v1604 = vpop.f32.mrb[0].mxu0
        %v1605 = vadd.f32 %v1502, %v1604
        %v1606 = vpop.f32.mrb[0].mxu0
        %1607 = vdwg.mxu0
        %v1608 = vsel %vm845, %v1578, -inf
        %1609 = vmax.xlane.f32.xlu0 %v1608
        %v1610 = vpop.xlane.xlu0 %1609
        %v1611 = vsel %vm845, %v1581, -inf
        %1612 = vmax.xlane.f32.xlu0 %v1611
        %v1613 = vpop.xlane.xlu0 %1612
        %v1614 = vsel %vm845, %v1586, -inf
        %1615 = vmax.xlane.f32.xlu0 %v1614
        %v1616 = vpop.xlane.xlu0 %1615
        %v1617 = vsel %vm845, %v1589, -inf
        %1618 = vmax.xlane.f32.xlu0 %v1617
        %v1619 = vpop.xlane.xlu0 %1618
        %v1620 = vsel %vm845, %v1594, -inf
        %1621 = vmax.xlane.f32.xlu0 %v1620
        %v1622 = vpop.xlane.xlu0 %1621
        %v1623 = vsel %vm845, %v1597, -inf
        %1624 = vmax.xlane.f32.xlu0 %v1623
        %v1625 = vpop.xlane.xlu0 %1624
        %v1626 = vsel %vm845, %v1602, -inf
        %1627 = vmax.xlane.f32.xlu0 %v1626
        %v1628 = vpop.xlane.xlu0 %1627
        %v1629 = vsel %vm845, %v1605, -inf
        %1630 = vmax.xlane.f32.xlu0 %v1629
        %v1631 = vpop.xlane.xlu0 %1630
        %v1632 = vsub.f32 %v1578, %v1610
        %v1633 = vsub.f32 %v1581, %v1613
        %v1634 = vsub.f32 %v1586, %v1616
        %v1635 = vsub.f32 %v1589, %v1619
        %v1636 = vsub.f32 %v1594, %v1622
        %v1637 = vsub.f32 %v1597, %v1625
        %v1638 = vsub.f32 %v1602, %v1628
        %v1639 = vsub.f32 %v1605, %v1631
        %v1640 = vmul.f32 %v1632, 1.442695
        %v1641 = vpow.pop %v1640
        %v1642 = vmul.f32 %v1633, 1.442695
        %v1643 = vpow.pop %v1642
        %v1644 = vmul.f32 %v1634, 1.442695
        %v1645 = vpow.pop %v1644
        %v1646 = vmul.f32 %v1635, 1.442695
        %v1647 = vpow.pop %v1646
        %v1648 = vmul.f32 %v1636, 1.442695
        %v1649 = vpow.pop %v1648
        %v1650 = vmul.f32 %v1637, 1.442695
        %v1651 = vpow.pop %v1650
        %v1652 = vmul.f32 %v1638, 1.442695
        %v1653 = vpow.pop %v1652
        %v1654 = vmul.f32 %v1639, 1.442695
        %v1655 = vpow.pop %v1654
        %v1656 = vsel %vm845, %v1641, 0.0
        %1657 = vadd.xlane.f32.xlu0 %v1656
        %v1658 = vpop.xlane.xlu0 %1657
        %v1659 = vsel %vm845, %v1643, 0.0
        %1660 = vadd.xlane.f32.xlu0 %v1659
        %v1661 = vpop.xlane.xlu0 %1660
        %v1662 = vsel %vm845, %v1645, 0.0
        %1663 = vadd.xlane.f32.xlu0 %v1662
        %v1664 = vpop.xlane.xlu0 %1663
        %v1665 = vsel %vm845, %v1647, 0.0
        %1666 = vadd.xlane.f32.xlu0 %v1665
        %v1667 = vpop.xlane.xlu0 %1666
        %v1668 = vsel %vm845, %v1649, 0.0
        %1669 = vadd.xlane.f32.xlu0 %v1668
        %v1670 = vpop.xlane.xlu0 %1669
        %v1671 = vsel %vm845, %v1651, 0.0
        %1672 = vadd.xlane.f32.xlu0 %v1671
        %v1673 = vpop.xlane.xlu0 %1672
        %v1674 = vsel %vm845, %v1653, 0.0
        %1675 = vadd.xlane.f32.xlu0 %v1674
        %v1676 = vpop.xlane.xlu0 %1675
        %v1677 = vsel %vm845, %v1655, 0.0
        %1678 = vadd.xlane.f32.xlu0 %v1677
        %v1679 = vpop.xlane.xlu0 %1678
        %v1680 = vrcp.pop %v1658
        %v1681 = vrcp.pop %v1661
        %v1682 = vrcp.pop %v1664
        %v1683 = vrcp.pop %v1667
        %v1684 = vrcp.pop %v1670
        %v1685 = vrcp.pop %v1673
        %v1686 = vrcp.pop %v1676
        %v1687 = vrcp.pop %v1679
        %v1688 = vmul.f32 %v1641, %v1680
        %v1689 = vmul.f32 %v1643, %v1681
        %v1690 = vmul.f32 %v1645, %v1682
        %v1691 = vmul.f32 %v1647, %v1683
        %v1692 = vmul.f32 %v1649, %v1684
        %v1693 = vmul.f32 %v1651, %v1685
        %v1694 = vmul.f32 %v1653, %v1686
        %v1695 = vmul.f32 %v1655, %v1687
        %v1696 = vpack.c.bf16 %v1689, %v1688
        %v1697 = vpack.c.bf16 %v1691, %v1690
        %v1698 = vpack.c.bf16 %v1693, %v1692
        %v1699 = vpack.c.bf16 %v1695, %v1694
        %1700 = vrot.lane.b32.xlu0 %v731, 48
        %v1701 = vpop.permute.xlu0 %1700
        %1702 = vrot.lane.b32.xlu0 %v732, 48
        %v1703 = vpop.permute.xlu0 %1702
        %1704 = vrot.lane.b32.xlu0 %v733, 48
        %v1705 = vpop.permute.xlu0 %1704
        %1706 = vrot.lane.b32.xlu0 %v734, 48
        %v1707 = vpop.permute.xlu0 %1706
        %v1713 = vsel %vm845, %v1696, 0
        %v1716 = vsel %vm845, %v1697, 0
        %v1719 = vsel %vm845, %v1698, 0
        %v1722 = vsel %vm845, %v1699, 0
        %1724 = vmatprep.subr.bf16.mxu0 0
        %1725 = vmatpush1.bf16.msra.mxu0 %v1701
        %1726 = vmatprep.subr.bf16.mxu0 0
        %1727 = vmatpush1.bf16.msra.mxu0 %v1703
        %1728 = vmatprep.subr.bf16.mxu0 0
        %1729 = vmatpush1.bf16.msra.mxu0 %v1705
        %1730 = vmatprep.subr.bf16.mxu0 0
        %1731 = vmatpush1.bf16.msra.mxu0 %v1707
        %1732 = vmatprep.subr.bf16.mxu0 0
        %1733 = vmatpush1.bf16.msra.mxu0 0
        %1734 = vmatprep.subr.bf16.mxu0 0
        %1735 = vmatpush1.bf16.msra.mxu0 0
        %1736 = vmatprep.subr.bf16.mxu0 0
        %1737 = vmatpush1.bf16.msra.mxu0 0
        %1738 = vmatprep.subr.bf16.mxu0 0
        %1739 = vmatpush1.bf16.msra.mxu0 0
        %1740 = vmatprep.subr.bf16.mxu0 0
        %1741 = vmatpush1.bf16.msra.mxu0 0
        %1742 = vmatprep.subr.bf16.mxu0 0
        %1743 = vmatpush1.bf16.msra.mxu0 0
        %1744 = vmatprep.subr.bf16.mxu0 0
        %1745 = vmatpush1.bf16.msra.mxu0 0
        %1746 = vmatprep.subr.bf16.mxu0 0
        %1747 = vmatpush1.bf16.msra.mxu0 0
        %1748 = vmatprep.subr.bf16.mxu0 0
        %1749 = vmatpush1.bf16.msra.mxu0 0
        %1750 = vmatprep.subr.bf16.mxu0 0
        %1751 = vmatpush1.bf16.msra.mxu0 0
        %1752 = vmatprep.subr.bf16.mxu0 0
        %1753 = vmatpush1.bf16.msra.mxu0 0
        %1754 = vmatprep.subr.bf16.mxu0 0
        %1755 = vmatpush1.bf16.msra.mxu0 0
        %1756 = vmatprep.mubr.bf16.mxu0 0
        %1757 = vmatmul.mubr.bf16.gmra.mrb[0].mxu0 %v1713
        %v1758 = vpop.f32.mrb[0].mxu0
        %v1759 = vadd.f32 0.0, %v1758
        %v1760 = vpop.f32.mrb[0].mxu0
        %v1761 = vpop.f32.mrb[0].mxu0
        %v1762 = vadd.f32 0.0, %v1761
        %v1763 = vpop.f32.mrb[0].mxu0
        %1764 = vmatprep.mubr.bf16.mxu0 0
        %1765 = vmatmul.mubr.bf16.gmra.mrb[0].mxu0 %v1716
        %v1766 = vpop.f32.mrb[0].mxu0
        %v1767 = vadd.f32 0.0, %v1766
        %v1768 = vpop.f32.mrb[0].mxu0
        %v1769 = vpop.f32.mrb[0].mxu0
        %v1770 = vadd.f32 0.0, %v1769
        %v1771 = vpop.f32.mrb[0].mxu0
        %1772 = vmatprep.mubr.bf16.mxu0 0
        %1773 = vmatmul.mubr.bf16.gmra.mrb[0].mxu0 %v1719
        %v1774 = vpop.f32.mrb[0].mxu0
        %v1775 = vadd.f32 0.0, %v1774
        %v1776 = vpop.f32.mrb[0].mxu0
        %v1777 = vpop.f32.mrb[0].mxu0
        %v1778 = vadd.f32 0.0, %v1777
        %v1779 = vpop.f32.mrb[0].mxu0
        %1780 = vmatprep.mubr.bf16.mxu0 0
        %1781 = vmatmul.mubr.bf16.gmra.mrb[0].mxu0 %v1722
        %v1782 = vpop.f32.mrb[0].mxu0
        %v1783 = vadd.f32 0.0, %v1782
        %v1784 = vpop.f32.mrb[0].mxu0
        %v1785 = vpop.f32.mrb[0].mxu0
        %v1786 = vadd.f32 0.0, %v1785
        %v1787 = vpop.f32.mrb[0].mxu0
        %1788 = vdwg.mxu0
        %v1789 = vpack.c.bf16 %v1762, %v1759
        %v1790 = vpack.c.bf16 %v1770, %v1767
        %v1791 = vpack.c.bf16 %v1778, %v1775
        %v1792 = vpack.c.bf16 %v1786, %v1783
        %s1793 = scalar_lea.vmem %s5, 8
        %v1794 = vld [vmem:[%s1793] sm:$0xf]
        %v1796 = vsel %vm755, %v1789, 0
        %v1799 = vsel %vm755, %v1790, 0
        %v1802 = vsel %vm755, %v1791, 0
        %v1805 = vsel %vm755, %v1792, 0
        %v1808 = vsel %vm1345, %v1794, 0
        %1810 = vmatprep.subr.bf16.mxu0 0
        %1811 = vmatpush1.bf16.msra.mxu0 %v1808
        %1812 = vmatprep.subr.bf16.mxu0 0
        %1813 = vmatpush1.bf16.msra.mxu0 0
        %1814 = vmatprep.subr.bf16.mxu0 0
        %1815 = vmatpush1.bf16.msra.mxu0 0
        %1816 = vmatprep.subr.bf16.mxu0 0
        %1817 = vmatpush1.bf16.msra.mxu0 0
        %1818 = vmatprep.subr.bf16.mxu0 0
        %1819 = vmatpush1.bf16.msra.mxu0 0
        %1820 = vmatprep.subr.bf16.mxu0 0
        %1821 = vmatpush1.bf16.msra.mxu0 0
        %1822 = vmatprep.subr.bf16.mxu0 0
        %1823 = vmatpush1.bf16.msra.mxu0 0
        %1824 = vmatprep.subr.bf16.mxu0 0
        %1825 = vmatpush1.bf16.msra.mxu0 0
        %1826 = vmatprep.subr.bf16.mxu0 0
        %1827 = vmatpush1.bf16.msra.mxu0 0
        %1828 = vmatprep.subr.bf16.mxu0 0
        %1829 = vmatpush1.bf16.msra.mxu0 0
        %1830 = vmatprep.subr.bf16.mxu0 0
        %1831 = vmatpush1.bf16.msra.mxu0 0
        %1832 = vmatprep.subr.bf16.mxu0 0
        %1833 = vmatpush1.bf16.msra.mxu0 0
        %1834 = vmatprep.subr.bf16.mxu0 0
        %1835 = vmatpush1.bf16.msra.mxu0 0
        %1836 = vmatprep.subr.bf16.mxu0 0
        %1837 = vmatpush1.bf16.msra.mxu0 0
        %1838 = vmatprep.subr.bf16.mxu0 0
        %1839 = vmatpush1.bf16.msra.mxu0 0
        %1840 = vmatprep.subr.bf16.mxu0 0
        %1841 = vmatpush1.bf16.msra.mxu0 0
        %1842 = vmatprep.mubr.bf16.mxu0 0
        %1843 = vmatmul.mubr.bf16.gmra.mrb[0].mxu0 %v1796
        %v1844 = vpop.f32.mrb[0].mxu0
        %v1845 = vadd.f32 0.0, %v1844
        %v1846 = vpop.f32.mrb[0].mxu0
        %v1847 = vpop.f32.mrb[0].mxu0
        %v1848 = vadd.f32 0.0, %v1847
        %v1849 = vpop.f32.mrb[0].mxu0
        %1850 = vmatprep.mubr.bf16.mxu0 0
        %1851 = vmatmul.mubr.bf16.gmra.mrb[0].mxu0 %v1799
        %v1852 = vpop.f32.mrb[0].mxu0
        %v1853 = vadd.f32 0.0, %v1852
        %v1854 = vpop.f32.mrb[0].mxu0
        %v1855 = vpop.f32.mrb[0].mxu0
        %v1856 = vadd.f32 0.0, %v1855
        %v1857 = vpop.f32.mrb[0].mxu0
        %1858 = vmatprep.mubr.bf16.mxu0 0
        %1859 = vmatmul.mubr.bf16.gmra.mrb[0].mxu0 %v1802
        %v1860 = vpop.f32.mrb[0].mxu0
        %v1861 = vadd.f32 0.0, %v1860
        %v1862 = vpop.f32.mrb[0].mxu0
        %v1863 = vpop.f32.mrb[0].mxu0
        %v1864 = vadd.f32 0.0, %v1863
        %v1865 = vpop.f32.mrb[0].mxu0
        %1866 = vmatprep.mubr.bf16.mxu0 0
        %1867 = vmatmul.mubr.bf16.gmra.mrb[0].mxu0 %v1805
        %v1868 = vpop.f32.mrb[0].mxu0
        %v1869 = vadd.f32 0.0, %v1868
        %v1870 = vpop.f32.mrb[0].mxu0
        %v1871 = vpop.f32.mrb[0].mxu0
        %v1872 = vadd.f32 0.0, %v1871
        %v1873 = vpop.f32.mrb[0].mxu0
        %1874 = vdwg.mxu0
        %v1875 = vadd.f32 %v1464, %v1845
        %v1876 = vadd.f32 %v1467, %v1848
        %v1877 = vadd.f32 %v1472, %v1853
        %v1878 = vadd.f32 %v1475, %v1856
        %v1879 = vadd.f32 %v1480, %v1861
        %v1880 = vadd.f32 %v1483, %v1864
        %v1881 = vadd.f32 %v1488, %v1869
        %v1882 = vadd.f32 %v1491, %v1872
        %s1883 = scalar_lea.vmem [#allocation2], 192
        %v1884 = vld [vmem:[%s1883] sm:$0xff]
        %v1885 = vld [vmem:[%s1883 + $0x8] sm:$0xff]
        %v1886 = vld [vmem:[%s1883 + $0x10] sm:$0xff]
        %v1887 = vld [vmem:[%s1883 + $0x18] sm:$0xff]
        %v1888 = vld [vmem:[%s1883 + $0x20] sm:$0xff]
        %v1889 = vld [vmem:[%s1883 + $0x28] sm:$0xff]
        %v1890 = vld [vmem:[%s1883 + $0x30] sm:$0xff]
        %v1891 = vld [vmem:[%s1883 + $0x38] sm:$0xff]
        %1892 = vrot.lane.b32.xlu0 %v731, 104
        %v1893 = vpop.permute.xlu0 %1892
        %1894 = vrot.lane.b32.xlu0 %v732, 104
        %v1895 = vpop.permute.xlu0 %1894
        %1896 = vrot.lane.b32.xlu0 %v733, 104
        %v1897 = vpop.permute.xlu0 %1896
        %1898 = vrot.lane.b32.xlu0 %v734, 104
        %v1899 = vpop.permute.xlu0 %1898
        %1900 = vrot.lane.b32.xlu0 %v731, 72
        %v1901 = vpop.permute.xlu0 %1900
        %1902 = vrot.lane.b32.xlu0 %v732, 72
        %v1903 = vpop.permute.xlu0 %1902
        %1904 = vrot.lane.b32.xlu0 %v733, 72
        %v1905 = vpop.permute.xlu0 %1904
        %1906 = vrot.lane.b32.xlu0 %v734, 72
        %v1907 = vpop.permute.xlu0 %1906
        %v1909 = vsel %vm755, %v1893, 0
        %v1912 = vsel %vm755, %v1895, 0
        %v1915 = vsel %vm755, %v1897, 0
        %v1918 = vsel %vm755, %v1899, 0
        %v1921 = vsel %vm755, %v1901, 0
        %v1924 = vsel %vm755, %v1903, 0
        %v1927 = vsel %vm755, %v1905, 0
        %v1930 = vsel %vm755, %v1907, 0
        %1932 = vmatprep.subr.bf16.mxu0 0
        %1933 = vmatpush1.bf16.xpose.msra.mxu0 %v1921
        %1934 = vmatprep.subr.bf16.mxu0 0
        %1935 = vmatpush1.bf16.xpose.msra.mxu0 %v1924
        %1936 = vmatprep.subr.bf16.mxu0 0
        %1937 = vmatpush1.bf16.xpose.msra.mxu0 %v1927
        %1938 = vmatprep.subr.bf16.mxu0 0
        %1939 = vmatpush1.bf16.xpose.msra.mxu0 %v1930
        %1940 = vmatprep.subr.bf16.mxu0 0
        %1941 = vmatpush1.bf16.xpose.msra.mxu0 0
        %1942 = vmatprep.subr.bf16.mxu0 0
        %1943 = vmatpush1.bf16.xpose.msra.mxu0 0
        %1944 = vmatprep.subr.bf16.mxu0 0
        %1945 = vmatpush1.bf16.xpose.msra.mxu0 0
        %1946 = vmatprep.subr.bf16.mxu0 0
        %1947 = vmatpush1.bf16.xpose.msra.mxu0 0
        %1948 = vmatprep.subr.bf16.mxu0 0
        %1949 = vmatpush1.bf16.xpose.msra.mxu0 0
        %1950 = vmatprep.subr.bf16.mxu0 0
        %1951 = vmatpush1.bf16.xpose.msra.mxu0 0
        %1952 = vmatprep.subr.bf16.mxu0 0
        %1953 = vmatpush1.bf16.xpose.msra.mxu0 0
        %1954 = vmatprep.subr.bf16.mxu0 0
        %1955 = vmatpush1.bf16.xpose.msra.mxu0 0
        %1956 = vmatprep.subr.bf16.mxu0 0
        %1957 = vmatpush1.bf16.xpose.msra.mxu0 0
        %1958 = vmatprep.subr.bf16.mxu0 0
        %1959 = vmatpush1.bf16.xpose.msra.mxu0 0
        %1960 = vmatprep.subr.bf16.mxu0 0
        %1961 = vmatpush1.bf16.xpose.msra.mxu0 0
        %1962 = vmatprep.subr.bf16.mxu0 0
        %1963 = vmatpush1.bf16.xpose.msra.mxu0 0
        %1964 = vmatprep.mubr.bf16.mxu0 0
        %1965 = vmatmul.mubr.bf16.gmra.mrb[0].mxu0 %v1909
        %v1966 = vpop.f32.mrb[0].mxu0
        %v1967 = vadd.f32 %v1884, %v1966
        %v1968 = vpop.f32.mrb[0].mxu0
        %v1969 = vpop.f32.mrb[0].mxu0
        %v1970 = vadd.f32 %v1885, %v1969
        %v1971 = vpop.f32.mrb[0].mxu0
        %1972 = vmatprep.mubr.bf16.mxu0 0
        %1973 = vmatmul.mubr.bf16.gmra.mrb[0].mxu0 %v1912
        %v1974 = vpop.f32.mrb[0].mxu0
        %v1975 = vadd.f32 %v1886, %v1974
        %v1976 = vpop.f32.mrb[0].mxu0
        %v1977 = vpop.f32.mrb[0].mxu0
        %v1978 = vadd.f32 %v1887, %v1977
        %v1979 = vpop.f32.mrb[0].mxu0
        %1980 = vmatprep.mubr.bf16.mxu0 0
        %1981 = vmatmul.mubr.bf16.gmra.mrb[0].mxu0 %v1915
        %v1982 = vpop.f32.mrb[0].mxu0
        %v1983 = vadd.f32 %v1888, %v1982
        %v1984 = vpop.f32.mrb[0].mxu0
        %v1985 = vpop.f32.mrb[0].mxu0
        %v1986 = vadd.f32 %v1889, %v1985
        %v1987 = vpop.f32.mrb[0].mxu0
        %1988 = vmatprep.mubr.bf16.mxu0 0
        %1989 = vmatmul.mubr.bf16.gmra.mrb[0].mxu0 %v1918
        %v1990 = vpop.f32.mrb[0].mxu0
        %v1991 = vadd.f32 %v1890, %v1990
        %v1992 = vpop.f32.mrb[0].mxu0
        %v1993 = vpop.f32.mrb[0].mxu0
        %v1994 = vadd.f32 %v1891, %v1993
        %v1995 = vpop.f32.mrb[0].mxu0
        %1996 = vdwg.mxu0
        %v1997 = vsel %vm845, %v1967, -inf
        %1998 = vmax.xlane.f32.xlu0 %v1997
        %v1999 = vpop.xlane.xlu0 %1998
        %v2000 = vsel %vm845, %v1970, -inf
        %2001 = vmax.xlane.f32.xlu0 %v2000
        %v2002 = vpop.xlane.xlu0 %2001
        %v2003 = vsel %vm845, %v1975, -inf
        %2004 = vmax.xlane.f32.xlu0 %v2003
        %v2005 = vpop.xlane.xlu0 %2004
        %v2006 = vsel %vm845, %v1978, -inf
        %2007 = vmax.xlane.f32.xlu0 %v2006
        %v2008 = vpop.xlane.xlu0 %2007
        %v2009 = vsel %vm845, %v1983, -inf
        %2010 = vmax.xlane.f32.xlu0 %v2009
        %v2011 = vpop.xlane.xlu0 %2010
        %v2012 = vsel %vm845, %v1986, -inf
        %2013 = vmax.xlane.f32.xlu0 %v2012
        %v2014 = vpop.xlane.xlu0 %2013
        %v2015 = vsel %vm845, %v1991, -inf
        %2016 = vmax.xlane.f32.xlu0 %v2015
        %v2017 = vpop.xlane.xlu0 %2016
        %v2018 = vsel %vm845, %v1994, -inf
        %2019 = vmax.xlane.f32.xlu0 %v2018
        %v2020 = vpop.xlane.xlu0 %2019
        %v2021 = vsub.f32 %v1967, %v1999
        %v2022 = vsub.f32 %v1970, %v2002
        %v2023 = vsub.f32 %v1975, %v2005
        %v2024 = vsub.f32 %v1978, %v2008
        %v2025 = vsub.f32 %v1983, %v2011
        %v2026 = vsub.f32 %v1986, %v2014
        %v2027 = vsub.f32 %v1991, %v2017
        %v2028 = vsub.f32 %v1994, %v2020
        %v2029 = vmul.f32 %v2021, 1.442695
        %v2030 = vpow.pop %v2029
        %v2031 = vmul.f32 %v2022, 1.442695
        %v2032 = vpow.pop %v2031
        %v2033 = vmul.f32 %v2023, 1.442695
        %v2034 = vpow.pop %v2033
        %v2035 = vmul.f32 %v2024, 1.442695
        %v2036 = vpow.pop %v2035
        %v2037 = vmul.f32 %v2025, 1.442695
        %v2038 = vpow.pop %v2037
        %v2039 = vmul.f32 %v2026, 1.442695
        %v2040 = vpow.pop %v2039
        %v2041 = vmul.f32 %v2027, 1.442695
        %v2042 = vpow.pop %v2041
        %v2043 = vmul.f32 %v2028, 1.442695
        %v2044 = vpow.pop %v2043
        %v2045 = vsel %vm845, %v2030, 0.0
        %2046 = vadd.xlane.f32.xlu0 %v2045
        %v2047 = vpop.xlane.xlu0 %2046
        %v2048 = vsel %vm845, %v2032, 0.0
        %2049 = vadd.xlane.f32.xlu0 %v2048
        %v2050 = vpop.xlane.xlu0 %2049
        %v2051 = vsel %vm845, %v2034, 0.0
        %2052 = vadd.xlane.f32.xlu0 %v2051
        %v2053 = vpop.xlane.xlu0 %2052
        %v2054 = vsel %vm845, %v2036, 0.0
        %2055 = vadd.xlane.f32.xlu0 %v2054
        %v2056 = vpop.xlane.xlu0 %2055
        %v2057 = vsel %vm845, %v2038, 0.0
        %2058 = vadd.xlane.f32.xlu0 %v2057
        %v2059 = vpop.xlane.xlu0 %2058
        %v2060 = vsel %vm845, %v2040, 0.0
        %2061 = vadd.xlane.f32.xlu0 %v2060
        %v2062 = vpop.xlane.xlu0 %2061
        %v2063 = vsel %vm845, %v2042, 0.0
        %2064 = vadd.xlane.f32.xlu0 %v2063
        %v2065 = vpop.xlane.xlu0 %2064
        %v2066 = vsel %vm845, %v2044, 0.0
        %2067 = vadd.xlane.f32.xlu0 %v2066
        %v2068 = vpop.xlane.xlu0 %2067
        %v2069 = vrcp.pop %v2047
        %v2070 = vrcp.pop %v2050
        %v2071 = vrcp.pop %v2053
        %v2072 = vrcp.pop %v2056
        %v2073 = vrcp.pop %v2059
        %v2074 = vrcp.pop %v2062
        %v2075 = vrcp.pop %v2065
        %v2076 = vrcp.pop %v2068
        %v2077 = vmul.f32 %v2030, %v2069
        %v2078 = vmul.f32 %v2032, %v2070
        %v2079 = vmul.f32 %v2034, %v2071
        %v2080 = vmul.f32 %v2036, %v2072
        %v2081 = vmul.f32 %v2038, %v2073
        %v2082 = vmul.f32 %v2040, %v2074
        %v2083 = vmul.f32 %v2042, %v2075
        %v2084 = vmul.f32 %v2044, %v2076
        %v2085 = vpack.c.bf16 %v2078, %v2077
        %v2086 = vpack.c.bf16 %v2080, %v2079
        %v2087 = vpack.c.bf16 %v2082, %v2081
        %v2088 = vpack.c.bf16 %v2084, %v2083
        %2089 = vrot.lane.b32.xlu0 %v731, 40
        %v2090 = vpop.permute.xlu0 %2089
        %2091 = vrot.lane.b32.xlu0 %v732, 40
        %v2092 = vpop.permute.xlu0 %2091
        %2093 = vrot.lane.b32.xlu0 %v733, 40
        %v2094 = vpop.permute.xlu0 %2093
        %2095 = vrot.lane.b32.xlu0 %v734, 40
        %v2096 = vpop.permute.xlu0 %2095
        %v2102 = vsel %vm845, %v2085, 0
        %v2105 = vsel %vm845, %v2086, 0
        %v2108 = vsel %vm845, %v2087, 0
        %v2111 = vsel %vm845, %v2088, 0
        %2113 = vmatprep.subr.bf16.mxu0 0
        %2114 = vmatpush1.bf16.msra.mxu0 %v2090
        %2115 = vmatprep.subr.bf16.mxu0 0
        %2116 = vmatpush1.bf16.msra.mxu0 %v2092
        %2117 = vmatprep.subr.bf16.mxu0 0
        %2118 = vmatpush1.bf16.msra.mxu0 %v2094
        %2119 = vmatprep.subr.bf16.mxu0 0
        %2120 = vmatpush1.bf16.msra.mxu0 %v2096
        %2121 = vmatprep.subr.bf16.mxu0 0
        %2122 = vmatpush1.bf16.msra.mxu0 0
        %2123 = vmatprep.subr.bf16.mxu0 0
        %2124 = vmatpush1.bf16.msra.mxu0 0
        %2125 = vmatprep.subr.bf16.mxu0 0
        %2126 = vmatpush1.bf16.msra.mxu0 0
        %2127 = vmatprep.subr.bf16.mxu0 0
        %2128 = vmatpush1.bf16.msra.mxu0 0
        %2129 = vmatprep.subr.bf16.mxu0 0
        %2130 = vmatpush1.bf16.msra.mxu0 0
        %2131 = vmatprep.subr.bf16.mxu0 0
        %2132 = vmatpush1.bf16.msra.mxu0 0
        %2133 = vmatprep.subr.bf16.mxu0 0
        %2134 = vmatpush1.bf16.msra.mxu0 0
        %2135 = vmatprep.subr.bf16.mxu0 0
        %2136 = vmatpush1.bf16.msra.mxu0 0
        %2137 = vmatprep.subr.bf16.mxu0 0
        %2138 = vmatpush1.bf16.msra.mxu0 0
        %2139 = vmatprep.subr.bf16.mxu0 0
        %2140 = vmatpush1.bf16.msra.mxu0 0
        %2141 = vmatprep.subr.bf16.mxu0 0
        %2142 = vmatpush1.bf16.msra.mxu0 0
        %2143 = vmatprep.subr.bf16.mxu0 0
        %2144 = vmatpush1.bf16.msra.mxu0 0
        %2145 = vmatprep.mubr.bf16.mxu0 0
        %2146 = vmatmul.mubr.bf16.gmra.mrb[0].mxu0 %v2102
        %v2147 = vpop.f32.mrb[0].mxu0
        %v2148 = vadd.f32 0.0, %v2147
        %v2149 = vpop.f32.mrb[0].mxu0
        %v2150 = vpop.f32.mrb[0].mxu0
        %v2151 = vadd.f32 0.0, %v2150
        %v2152 = vpop.f32.mrb[0].mxu0
        %2153 = vmatprep.mubr.bf16.mxu0 0
        %2154 = vmatmul.mubr.bf16.gmra.mrb[0].mxu0 %v2105
        %v2155 = vpop.f32.mrb[0].mxu0
        %v2156 = vadd.f32 0.0, %v2155
        %v2157 = vpop.f32.mrb[0].mxu0
        %v2158 = vpop.f32.mrb[0].mxu0
        %v2159 = vadd.f32 0.0, %v2158
        %v2160 = vpop.f32.mrb[0].mxu0
        %2161 = vmatprep.mubr.bf16.mxu0 0
        %2162 = vmatmul.mubr.bf16.gmra.mrb[0].mxu0 %v2108
        %v2163 = vpop.f32.mrb[0].mxu0
        %v2164 = vadd.f32 0.0, %v2163
        %v2165 = vpop.f32.mrb[0].mxu0
        %v2166 = vpop.f32.mrb[0].mxu0
        %v2167 = vadd.f32 0.0, %v2166
        %v2168 = vpop.f32.mrb[0].mxu0
        %2169 = vmatprep.mubr.bf16.mxu0 0
        %2170 = vmatmul.mubr.bf16.gmra.mrb[0].mxu0 %v2111
        %v2171 = vpop.f32.mrb[0].mxu0
        %v2172 = vadd.f32 0.0, %v2171
        %v2173 = vpop.f32.mrb[0].mxu0
        %v2174 = vpop.f32.mrb[0].mxu0
        %v2175 = vadd.f32 0.0, %v2174
        %v2176 = vpop.f32.mrb[0].mxu0
        %2177 = vdwg.mxu0
        %v2178 = vpack.c.bf16 %v2151, %v2148
        %v2179 = vpack.c.bf16 %v2159, %v2156
        %v2180 = vpack.c.bf16 %v2167, %v2164
        %v2181 = vpack.c.bf16 %v2175, %v2172
        %s2182 = scalar_lea.vmem %s5, 12
        %v2183 = vld [vmem:[%s2182] sm:$0xf]
        %v2185 = vsel %vm755, %v2178, 0
        %v2188 = vsel %vm755, %v2179, 0
        %v2191 = vsel %vm755, %v2180, 0
        %v2194 = vsel %vm755, %v2181, 0
        %v2197 = vsel %vm1345, %v2183, 0
        %2199 = vmatprep.subr.bf16.mxu0 0
        %2200 = vmatpush1.bf16.msra.mxu0 %v2197
        %2201 = vmatprep.subr.bf16.mxu0 0
        %2202 = vmatpush1.bf16.msra.mxu0 0
        %2203 = vmatprep.subr.bf16.mxu0 0
        %2204 = vmatpush1.bf16.msra.mxu0 0
        %2205 = vmatprep.subr.bf16.mxu0 0
        %2206 = vmatpush1.bf16.msra.mxu0 0
        %2207 = vmatprep.subr.bf16.mxu0 0
        %2208 = vmatpush1.bf16.msra.mxu0 0
        %2209 = vmatprep.subr.bf16.mxu0 0
        %2210 = vmatpush1.bf16.msra.mxu0 0
        %2211 = vmatprep.subr.bf16.mxu0 0
        %2212 = vmatpush1.bf16.msra.mxu0 0
        %2213 = vmatprep.subr.bf16.mxu0 0
        %2214 = vmatpush1.bf16.msra.mxu0 0
        %2215 = vmatprep.subr.bf16.mxu0 0
        %2216 = vmatpush1.bf16.msra.mxu0 0
        %2217 = vmatprep.subr.bf16.mxu0 0
        %2218 = vmatpush1.bf16.msra.mxu0 0
        %2219 = vmatprep.subr.bf16.mxu0 0
        %2220 = vmatpush1.bf16.msra.mxu0 0
        %2221 = vmatprep.subr.bf16.mxu0 0
        %2222 = vmatpush1.bf16.msra.mxu0 0
        %2223 = vmatprep.subr.bf16.mxu0 0
        %2224 = vmatpush1.bf16.msra.mxu0 0
        %2225 = vmatprep.subr.bf16.mxu0 0
        %2226 = vmatpush1.bf16.msra.mxu0 0
        %2227 = vmatprep.subr.bf16.mxu0 0
        %2228 = vmatpush1.bf16.msra.mxu0 0
        %2229 = vmatprep.subr.bf16.mxu0 0
        %2230 = vmatpush1.bf16.msra.mxu0 0
        %2231 = vmatprep.mubr.bf16.mxu0 0
        %2232 = vmatmul.mubr.bf16.gmra.mrb[0].mxu0 %v2185
        %v2233 = vpop.f32.mrb[0].mxu0
        %v2234 = vadd.f32 0.0, %v2233
        %v2235 = vpop.f32.mrb[0].mxu0
        %v2236 = vpop.f32.mrb[0].mxu0
        %v2237 = vadd.f32 0.0, %v2236
        %v2238 = vpop.f32.mrb[0].mxu0
        %2239 = vmatprep.mubr.bf16.mxu0 0
        %2240 = vmatmul.mubr.bf16.gmra.mrb[0].mxu0 %v2188
        %v2241 = vpop.f32.mrb[0].mxu0
        %v2242 = vadd.f32 0.0, %v2241
        %v2243 = vpop.f32.mrb[0].mxu0
        %v2244 = vpop.f32.mrb[0].mxu0
        %v2245 = vadd.f32 0.0, %v2244
        %v2246 = vpop.f32.mrb[0].mxu0
        %2247 = vmatprep.mubr.bf16.mxu0 0
        %2248 = vmatmul.mubr.bf16.gmra.mrb[0].mxu0 %v2191
        %v2249 = vpop.f32.mrb[0].mxu0
        %v2250 = vadd.f32 0.0, %v2249
        %v2251 = vpop.f32.mrb[0].mxu0
        %v2252 = vpop.f32.mrb[0].mxu0
        %v2253 = vadd.f32 0.0, %v2252
        %v2254 = vpop.f32.mrb[0].mxu0
        %2255 = vmatprep.mubr.bf16.mxu0 0
        %2256 = vmatmul.mubr.bf16.gmra.mrb[0].mxu0 %v2194
        %v2257 = vpop.f32.mrb[0].mxu0
        %v2258 = vadd.f32 0.0, %v2257
        %v2259 = vpop.f32.mrb[0].mxu0
        %v2260 = vpop.f32.mrb[0].mxu0
        %v2261 = vadd.f32 0.0, %v2260
        %v2262 = vpop.f32.mrb[0].mxu0
        %2263 = vdwg.mxu0
        %v2264 = vadd.f32 %v1875, %v2234
        %v2265 = vadd.f32 %v1876, %v2237
        %v2266 = vadd.f32 %v1877, %v2242
        %v2267 = vadd.f32 %v1878, %v2245
        %v2268 = vadd.f32 %v1879, %v2250
        %v2269 = vadd.f32 %v1880, %v2253
        %v2270 = vadd.f32 %v1881, %v2258
        %v2271 = vadd.f32 %v1882, %v2261
        %v2272 = vlaneseq
        %v2273 = vshrl.u32 %v2272, 7
        %v2274 = vsub.s32 0, %v2273
        %v2275 = vrot.slane %v489, %v2274
        %v2276 = vadd.f32 %v2264, %v2275
        %v2277 = vadd.f32 %v2265, %v2275
        %v2278 = vadd.f32 %v2266, %v2275
        %v2279 = vadd.f32 %v2267, %v2275
        %v2280 = vadd.f32 %v2268, %v2275
        %v2281 = vadd.f32 %v2269, %v2275
        %v2282 = vadd.f32 %v2270, %v2275
        %v2283 = vadd.f32 %v2271, %v2275
        %v2284 = vadd.f32 %v492, %v2276
        %v2285 = vadd.f32 %v493, %v2277
        %v2286 = vadd.f32 %v494, %v2278
        %v2287 = vadd.f32 %v495, %v2279
        %v2288 = vadd.f32 %v496, %v2280
        %v2289 = vadd.f32 %v497, %v2281
        %v2290 = vadd.f32 %v498, %v2282
        %v2291 = vadd.f32 %v499, %v2283
        %v2292 = vsel %vm500, %v2284, 0.0
        %2293 = vadd.xlane.f32.xlu0 %v2292
        %v2294 = vpop.xlane.xlu0 %2293
        %v2295 = vsel %vm500, %v2285, 0.0
        %2296 = vadd.xlane.f32.xlu0 %v2295
        %v2297 = vpop.xlane.xlu0 %2296
        %v2298 = vsel %vm500, %v2286, 0.0
        %2299 = vadd.xlane.f32.xlu0 %v2298
        %v2300 = vpop.xlane.xlu0 %2299
        %v2301 = vsel %vm500, %v2287, 0.0
        %2302 = vadd.xlane.f32.xlu0 %v2301
        %v2303 = vpop.xlane.xlu0 %2302
        %v2304 = vsel %vm500, %v2288, 0.0
        %2305 = vadd.xlane.f32.xlu0 %v2304
        %v2306 = vpop.xlane.xlu0 %2305
        %v2307 = vsel %vm500, %v2289, 0.0
        %2308 = vadd.xlane.f32.xlu0 %v2307
        %v2309 = vpop.xlane.xlu0 %2308
        %v2310 = vsel %vm500, %v2290, 0.0
        %2311 = vadd.xlane.f32.xlu0 %v2310
        %v2312 = vpop.xlane.xlu0 %2311
        %v2313 = vsel %vm500, %v2291, 0.0
        %2314 = vadd.xlane.f32.xlu0 %v2313
        %v2315 = vpop.xlane.xlu0 %2314
        %v2316 = vmul.f32 %v2294, %v525
        %v2317 = vmul.f32 %v2297, %v525
        %v2318 = vmul.f32 %v2300, %v525
        %v2319 = vmul.f32 %v2303, %v525
        %v2320 = vmul.f32 %v2306, %v525
        %v2321 = vmul.f32 %v2309, %v525
        %v2322 = vmul.f32 %v2312, %v525
        %v2323 = vmul.f32 %v2315, %v525
        %v2324 = vsub.f32 %v2284, %v2316
        %v2325 = vsub.f32 %v2285, %v2317
        %v2326 = vsub.f32 %v2286, %v2318
        %v2327 = vsub.f32 %v2287, %v2319
        %v2328 = vsub.f32 %v2288, %v2320
        %v2329 = vsub.f32 %v2289, %v2321
        %v2330 = vsub.f32 %v2290, %v2322
        %v2331 = vsub.f32 %v2291, %v2323
        %v2332 = vmul.f32 %v2324, %v2324
        %v2333 = vmul.f32 %v2325, %v2325
        %v2334 = vmul.f32 %v2326, %v2326
        %v2335 = vmul.f32 %v2327, %v2327
        %v2336 = vmul.f32 %v2328, %v2328
        %v2337 = vmul.f32 %v2329, %v2329
        %v2338 = vmul.f32 %v2330, %v2330
        %v2339 = vmul.f32 %v2331, %v2331
        %v2340 = vsel %vm500, %v2332, 0.0
        %2341 = vadd.xlane.f32.xlu0 %v2340
        %v2342 = vpop.xlane.xlu0 %2341
        %v2343 = vsel %vm500, %v2333, 0.0
        %2344 = vadd.xlane.f32.xlu0 %v2343
        %v2345 = vpop.xlane.xlu0 %2344
        %v2346 = vsel %vm500, %v2334, 0.0
        %2347 = vadd.xlane.f32.xlu0 %v2346
        %v2348 = vpop.xlane.xlu0 %2347
        %v2349 = vsel %vm500, %v2335, 0.0
        %2350 = vadd.xlane.f32.xlu0 %v2349
        %v2351 = vpop.xlane.xlu0 %2350
        %v2352 = vsel %vm500, %v2336, 0.0
        %2353 = vadd.xlane.f32.xlu0 %v2352
        %v2354 = vpop.xlane.xlu0 %2353
        %v2355 = vsel %vm500, %v2337, 0.0
        %2356 = vadd.xlane.f32.xlu0 %v2355
        %v2357 = vpop.xlane.xlu0 %2356
        %v2358 = vsel %vm500, %v2338, 0.0
        %2359 = vadd.xlane.f32.xlu0 %v2358
        %v2360 = vpop.xlane.xlu0 %2359
        %v2361 = vsel %vm500, %v2339, 0.0
        %2362 = vadd.xlane.f32.xlu0 %v2361
        %v2363 = vpop.xlane.xlu0 %2362
        %v2364 = vmul.f32 %v2342, %v525
        %v2365 = vmul.f32 %v2345, %v525
        %v2366 = vmul.f32 %v2348, %v525
        %v2367 = vmul.f32 %v2351, %v525
        %v2368 = vmul.f32 %v2354, %v525
        %v2369 = vmul.f32 %v2357, %v525
        %v2370 = vmul.f32 %v2360, %v525
        %v2371 = vmul.f32 %v2363, %v525
        %v2372 = vadd.f32 %v2364, 1e-05
        %v2373 = vadd.f32 %v2365, 1e-05
        %v2374 = vadd.f32 %v2366, 1e-05
        %v2375 = vadd.f32 %v2367, 1e-05
        %v2376 = vadd.f32 %v2368, 1e-05
        %v2377 = vadd.f32 %v2369, 1e-05
        %v2378 = vadd.f32 %v2370, 1e-05
        %v2379 = vadd.f32 %v2371, 1e-05
        %v2380 = vrsqrt.pop %v2372
        %v2381 = vrsqrt.pop %v2373
        %v2382 = vrsqrt.pop %v2374
        %v2383 = vrsqrt.pop %v2375
        %v2384 = vrsqrt.pop %v2376
        %v2385 = vrsqrt.pop %v2377
        %v2386 = vrsqrt.pop %v2378
        %v2387 = vrsqrt.pop %v2379
        %v2388 = vmul.f32 %v2324, %v2380
        %v2389 = vmul.f32 %v2325, %v2381
        %v2390 = vmul.f32 %v2326, %v2382
        %v2391 = vmul.f32 %v2327, %v2383
        %v2392 = vmul.f32 %v2328, %v2384
        %v2393 = vmul.f32 %v2329, %v2385
        %v2394 = vmul.f32 %v2330, %v2386
        %v2395 = vmul.f32 %v2331, %v2387
        %v2396 = vlaneseq
        %v2397 = vshrl.u32 %v2396, 7
        %v2398 = vsub.s32 0, %v2397
        %v2399 = vrot.slane %v486, %v2398
        %v2400 = vmul.f32 %v2388, %v2399
        %v2401 = vmul.f32 %v2389, %v2399
        %v2402 = vmul.f32 %v2390, %v2399
        %v2403 = vmul.f32 %v2391, %v2399
        %v2404 = vmul.f32 %v2392, %v2399
        %v2405 = vmul.f32 %v2393, %v2399
        %v2406 = vmul.f32 %v2394, %v2399
        %v2407 = vmul.f32 %v2395, %v2399
        %v2408 = vlaneseq
        %v2409 = vshrl.u32 %v2408, 7
        %v2410 = vsub.s32 0, %v2409
        %v2411 = vrot.slane %v487, %v2410
        %v2412 = vadd.f32 %v2400, %v2411
        %v2413 = vadd.f32 %v2401, %v2411
        %v2414 = vadd.f32 %v2402, %v2411
        %v2415 = vadd.f32 %v2403, %v2411
        %v2416 = vadd.f32 %v2404, %v2411
        %v2417 = vadd.f32 %v2405, %v2411
        %v2418 = vadd.f32 %v2406, %v2411
        %v2419 = vadd.f32 %v2407, %v2411
        %v2420 = vpack.c.bf16 %v2413, %v2412
        %v2421 = vpack.c.bf16 %v2415, %v2414
        %v2422 = vpack.c.bf16 %v2417, %v2416
        %v2423 = vpack.c.bf16 %v2419, %v2418
        %v2424 = vld [vmem:[%s10] sm:$0xf]
        %v2425 = vld [vmem:[%s10 + $0x4] sm:$0xf]
        %v2426 = vld [vmem:[%s10 + $0x8] sm:$0xf]
        %v2427 = vld [vmem:[%s10 + $0xc] sm:$0xf]
        %v2428 = vlaneseq
        %v2429 = vshrl.u32 %v2428, 7
        %v2430 = vsub.s32 0, %v2429
        %v2431 = vrot.slane %v490, %v2430
        %v2436 = vunpack.c.l.b16 %v2424
        %v2437 = vunpack.c.l.b16 %v2425
        %v2438 = vunpack.c.l.b16 %v2426
        %v2439 = vunpack.c.l.b16 %v2427
        %v2440 = vpack.c.b16 %v2437, %v2436
        %v2441 = vpack.c.b16 %v2439, %v2438
        %v2445 = vsel %vm500, %v2420, 0
        %v2448 = vsel %vm500, %v2421, 0
        %v2451 = vsel %vm500, %v2422, 0
        %v2454 = vsel %vm500, %v2423, 0
        %2456 = vmatprep.subr.bf16.mxu0 0
        %2457 = vmatpush1.bf16.msra.mxu0 %v2440
        %2458 = vmatprep.subr.bf16.mxu0 0
        %2459 = vmatpush1.bf16.msra.mxu0 %v2441
        %2460 = vmatprep.subr.bf16.mxu0 0
        %2461 = vmatpush1.bf16.msra.mxu0 0
        %2462 = vmatprep.subr.bf16.mxu0 0
        %2463 = vmatpush1.bf16.msra.mxu0 0
        %2464 = vmatprep.subr.bf16.mxu0 0
        %2465 = vmatpush1.bf16.msra.mxu0 0
        %2466 = vmatprep.subr.bf16.mxu0 0
        %2467 = vmatpush1.bf16.msra.mxu0 0
        %2468 = vmatprep.subr.bf16.mxu0 0
        %2469 = vmatpush1.bf16.msra.mxu0 0
        %2470 = vmatprep.subr.bf16.mxu0 0
        %2471 = vmatpush1.bf16.msra.mxu0 0
        %2472 = vmatprep.subr.bf16.mxu0 0
        %2473 = vmatpush1.bf16.msra.mxu0 0
        %2474 = vmatprep.subr.bf16.mxu0 0
        %2475 = vmatpush1.bf16.msra.mxu0 0
        %2476 = vmatprep.subr.bf16.mxu0 0
        %2477 = vmatpush1.bf16.msra.mxu0 0
        %2478 = vmatprep.subr.bf16.mxu0 0
        %2479 = vmatpush1.bf16.msra.mxu0 0
        %2480 = vmatprep.subr.bf16.mxu0 0
        %2481 = vmatpush1.bf16.msra.mxu0 0
        %2482 = vmatprep.subr.bf16.mxu0 0
        %2483 = vmatpush1.bf16.msra.mxu0 0
        %2484 = vmatprep.subr.bf16.mxu0 0
        %2485 = vmatpush1.bf16.msra.mxu0 0
        %2486 = vmatprep.subr.bf16.mxu0 0
        %2487 = vmatpush1.bf16.msra.mxu0 0
        %2488 = vmatprep.mubr.bf16.mxu0 0
        %2489 = vmatmul.mubr.bf16.gmra.mrb[0].mxu0 %v2445
        %v2490 = vpop.f32.mrb[0].mxu0
        %v2491 = vadd.f32 %v2431, %v2490
        %v2492 = vpop.f32.mrb[0].mxu0
        %v2493 = vpop.f32.mrb[0].mxu0
        %v2494 = vadd.f32 %v2431, %v2493
        %v2495 = vpop.f32.mrb[0].mxu0
        %2496 = vmatprep.mubr.bf16.mxu0 0
        %2497 = vmatmul.mubr.bf16.gmra.mrb[0].mxu0 %v2448
        %v2498 = vpop.f32.mrb[0].mxu0
        %v2499 = vadd.f32 %v2431, %v2498
        %v2500 = vpop.f32.mrb[0].mxu0
        %v2501 = vpop.f32.mrb[0].mxu0
        %v2502 = vadd.f32 %v2431, %v2501
        %v2503 = vpop.f32.mrb[0].mxu0
        %2504 = vmatprep.mubr.bf16.mxu0 0
        %2505 = vmatmul.mubr.bf16.gmra.mrb[0].mxu0 %v2451
        %v2506 = vpop.f32.mrb[0].mxu0
        %v2507 = vadd.f32 %v2431, %v2506
        %v2508 = vpop.f32.mrb[0].mxu0
        %v2509 = vpop.f32.mrb[0].mxu0
        %v2510 = vadd.f32 %v2431, %v2509
        %v2511 = vpop.f32.mrb[0].mxu0
        %2512 = vmatprep.mubr.bf16.mxu0 0
        %2513 = vmatmul.mubr.bf16.gmra.mrb[0].mxu0 %v2454
        %v2514 = vpop.f32.mrb[0].mxu0
        %v2515 = vadd.f32 %v2431, %v2514
        %v2516 = vpop.f32.mrb[0].mxu0
        %v2517 = vpop.f32.mrb[0].mxu0
        %v2518 = vadd.f32 %v2431, %v2517
        %v2519 = vpop.f32.mrb[0].mxu0
        %2520 = vdwg.mxu0
        %v2521 = vmul.f32 %v2491, %v2491
        %v2522 = vmul.f32 %v2494, %v2494
        %v2523 = vmul.f32 %v2499, %v2499
        %v2524 = vmul.f32 %v2502, %v2502
        %v2525 = vmul.f32 %v2507, %v2507
        %v2526 = vmul.f32 %v2510, %v2510
        %v2527 = vmul.f32 %v2515, %v2515
        %v2528 = vmul.f32 %v2518, %v2518
        %v2529 = vmul.f32 %v2491, %v2521
        %v2530 = vmul.f32 %v2494, %v2522
        %v2531 = vmul.f32 %v2499, %v2523
        %v2532 = vmul.f32 %v2502, %v2524
        %v2533 = vmul.f32 %v2507, %v2525
        %v2534 = vmul.f32 %v2510, %v2526
        %v2535 = vmul.f32 %v2515, %v2527
        %v2536 = vmul.f32 %v2518, %v2528
        %v2537 = vmul.f32 %v2529, 0.044715
        %v2538 = vmul.f32 %v2530, 0.044715
        %v2539 = vmul.f32 %v2531, 0.044715
        %v2540 = vmul.f32 %v2532, 0.044715
        %v2541 = vmul.f32 %v2533, 0.044715
        %v2542 = vmul.f32 %v2534, 0.044715
        %v2543 = vmul.f32 %v2535, 0.044715
        %v2544 = vmul.f32 %v2536, 0.044715
        %v2545 = vadd.f32 %v2491, %v2537
        %v2546 = vadd.f32 %v2494, %v2538
        %v2547 = vadd.f32 %v2499, %v2539
        %v2548 = vadd.f32 %v2502, %v2540
        %v2549 = vadd.f32 %v2507, %v2541
        %v2550 = vadd.f32 %v2510, %v2542
        %v2551 = vadd.f32 %v2515, %v2543
        %v2552 = vadd.f32 %v2518, %v2544
        %v2553 = vmul.f32 %v2545, 0.7978846
        %v2554 = vmul.f32 %v2546, 0.7978846
        %v2555 = vmul.f32 %v2547, 0.7978846
        %v2556 = vmul.f32 %v2548, 0.7978846
        %v2557 = vmul.f32 %v2549, 0.7978846
        %v2558 = vmul.f32 %v2550, 0.7978846
        %v2559 = vmul.f32 %v2551, 0.7978846
        %v2560 = vmul.f32 %v2552, 0.7978846
        %v2561 = vtanh.pop %v2553
        %v2562 = vtanh.pop %v2554
        %v2563 = vtanh.pop %v2555
        %v2564 = vtanh.pop %v2556
        %v2565 = vtanh.pop %v2557
        %v2566 = vtanh.pop %v2558
        %v2567 = vtanh.pop %v2559
        %v2568 = vtanh.pop %v2560
        %v2569 = vadd.f32 %v2561, 1.0
        %v2570 = vadd.f32 %v2562, 1.0
        %v2571 = vadd.f32 %v2563, 1.0
        %v2572 = vadd.f32 %v2564, 1.0
        %v2573 = vadd.f32 %v2565, 1.0
        %v2574 = vadd.f32 %v2566, 1.0
        %v2575 = vadd.f32 %v2567, 1.0
        %v2576 = vadd.f32 %v2568, 1.0
        %v2577 = vmul.f32 %v2569, 0.5
        %v2578 = vmul.f32 %v2570, 0.5
        %v2579 = vmul.f32 %v2571, 0.5
        %v2580 = vmul.f32 %v2572, 0.5
        %v2581 = vmul.f32 %v2573, 0.5
        %v2582 = vmul.f32 %v2574, 0.5
        %v2583 = vmul.f32 %v2575, 0.5
        %v2584 = vmul.f32 %v2576, 0.5
        %v2585 = vmul.f32 %v2491, %v2577
        %v2586 = vmul.f32 %v2494, %v2578
        %v2587 = vmul.f32 %v2499, %v2579
        %v2588 = vmul.f32 %v2502, %v2580
        %v2589 = vmul.f32 %v2507, %v2581
        %v2590 = vmul.f32 %v2510, %v2582
        %v2591 = vmul.f32 %v2515, %v2583
        %v2592 = vmul.f32 %v2518, %v2584
        %v2593 = vpack.c.bf16 %v2586, %v2585
        %v2594 = vpack.c.bf16 %v2588, %v2587
        %v2595 = vpack.c.bf16 %v2590, %v2589
        %v2596 = vpack.c.bf16 %v2592, %v2591
        %v2597 = vld [vmem:[%s12] sm:$0xf]
        %v2598 = vld [vmem:[%s12 + $0x4] sm:$0xf]
        %v2599 = vld [vmem:[%s12 + $0x8] sm:$0xf]
        %v2600 = vld [vmem:[%s12 + $0xc] sm:$0xf]
        %v2601 = vld [vmem:[%s12 + $0x10] sm:$0xf]
        %v2602 = vld [vmem:[%s12 + $0x14] sm:$0xf]
        %v2603 = vld [vmem:[%s12 + $0x18] sm:$0xf]
        %v2604 = vld [vmem:[%s12 + $0x1c] sm:$0xf]
        %v2605 = vld [vmem:[%s12 + $0x20] sm:$0xf]
        %v2606 = vld [vmem:[%s12 + $0x24] sm:$0xf]
        %v2607 = vld [vmem:[%s12 + $0x28] sm:$0xf]
        %v2608 = vld [vmem:[%s12 + $0x2c] sm:$0xf]
        %v2609 = vld [vmem:[%s12 + $0x30] sm:$0xf]
        %v2610 = vld [vmem:[%s12 + $0x34] sm:$0xf]
        %v2611 = vld [vmem:[%s12 + $0x38] sm:$0xf]
        %v2612 = vld [vmem:[%s12 + $0x3c] sm:$0xf]
        %v2613 = vlaneseq
        %v2614 = vshrl.u32 %v2613, 7
        %v2615 = vsub.s32 0, %v2614
        %v2616 = vrot.slane %v491, %v2615
        %v2633 = vunpack.c.l.b16 %v2597
        %v2634 = vunpack.c.l.b16 %v2598
        %v2635 = vunpack.c.l.b16 %v2599
        %v2636 = vunpack.c.l.b16 %v2600
        %v2637 = vunpack.c.l.b16 %v2601
        %v2638 = vunpack.c.l.b16 %v2602
        %v2639 = vunpack.c.l.b16 %v2603
        %v2640 = vunpack.c.l.b16 %v2604
        %v2641 = vunpack.c.l.b16 %v2605
        %v2642 = vunpack.c.l.b16 %v2606
        %v2643 = vunpack.c.l.b16 %v2607
        %v2644 = vunpack.c.l.b16 %v2608
        %v2645 = vunpack.c.l.b16 %v2609
        %v2646 = vunpack.c.l.b16 %v2610
        %v2647 = vunpack.c.l.b16 %v2611
        %v2648 = vunpack.c.l.b16 %v2612
        %v2649 = vpack.c.b16 %v2634, %v2633
        %v2650 = vpack.c.b16 %v2636, %v2635
        %v2651 = vpack.c.b16 %v2638, %v2637
        %v2652 = vpack.c.b16 %v2640, %v2639
        %v2653 = vpack.c.b16 %v2642, %v2641
        %v2654 = vpack.c.b16 %v2644, %v2643
        %v2655 = vpack.c.b16 %v2646, %v2645
        %v2656 = vpack.c.b16 %v2648, %v2647
        %2665 = vmatprep.subr.bf16.mxu0 0
        %2666 = vmatpush1.bf16.msra.mxu0 %v2649
        %2667 = vmatprep.subr.bf16.mxu0 0
        %2668 = vmatpush1.bf16.msra.mxu0 %v2650
        %2669 = vmatprep.subr.bf16.mxu0 0
        %2670 = vmatpush1.bf16.msra.mxu0 %v2651
        %2671 = vmatprep.subr.bf16.mxu0 0
        %2672 = vmatpush1.bf16.msra.mxu0 %v2652
        %2673 = vmatprep.subr.bf16.mxu0 0
        %2674 = vmatpush1.bf16.msra.mxu0 %v2653
        %2675 = vmatprep.subr.bf16.mxu0 0
        %2676 = vmatpush1.bf16.msra.mxu0 %v2654
        %2677 = vmatprep.subr.bf16.mxu0 0
        %2678 = vmatpush1.bf16.msra.mxu0 %v2655
        %2679 = vmatprep.subr.bf16.mxu0 0
        %2680 = vmatpush1.bf16.msra.mxu0 %v2656
        %2681 = vmatprep.subr.bf16.mxu0 0
        %2682 = vmatpush1.bf16.msra.mxu0 0
        %2683 = vmatprep.subr.bf16.mxu0 0
        %2684 = vmatpush1.bf16.msra.mxu0 0
        %2685 = vmatprep.subr.bf16.mxu0 0
        %2686 = vmatpush1.bf16.msra.mxu0 0
        %2687 = vmatprep.subr.bf16.mxu0 0
        %2688 = vmatpush1.bf16.msra.mxu0 0
        %2689 = vmatprep.subr.bf16.mxu0 0
        %2690 = vmatpush1.bf16.msra.mxu0 0
        %2691 = vmatprep.subr.bf16.mxu0 0
        %2692 = vmatpush1.bf16.msra.mxu0 0
        %2693 = vmatprep.subr.bf16.mxu0 0
        %2694 = vmatpush1.bf16.msra.mxu0 0
        %2695 = vmatprep.subr.bf16.mxu0 0
        %2696 = vmatpush1.bf16.msra.mxu0 0
        %2697 = vmatprep.mubr.bf16.mxu0 0
        %2698 = vmatmul.mubr.bf16.gmra.mrb[0].mxu0 %v2593
        %v2699 = vpop.f32.mrb[0].mxu0
        %v2700 = vadd.f32 %v2616, %v2699
        %v2701 = vpop.f32.mrb[0].mxu0
        %v2702 = vpop.f32.mrb[0].mxu0
        %v2703 = vadd.f32 %v2616, %v2702
        %v2704 = vpop.f32.mrb[0].mxu0
        %2705 = vmatprep.mubr.bf16.mxu0 0
        %2706 = vmatmul.mubr.bf16.gmra.mrb[0].mxu0 %v2594
        %v2707 = vpop.f32.mrb[0].mxu0
        %v2708 = vadd.f32 %v2616, %v2707
        %v2709 = vpop.f32.mrb[0].mxu0
        %v2710 = vpop.f32.mrb[0].mxu0
        %v2711 = vadd.f32 %v2616, %v2710
        %v2712 = vpop.f32.mrb[0].mxu0
        %2713 = vmatprep.mubr.bf16.mxu0 0
        %2714 = vmatmul.mubr.bf16.gmra.mrb[0].mxu0 %v2595
        %v2715 = vpop.f32.mrb[0].mxu0
        %v2716 = vadd.f32 %v2616, %v2715
        %v2717 = vpop.f32.mrb[0].mxu0
        %v2718 = vpop.f32.mrb[0].mxu0
        %v2719 = vadd.f32 %v2616, %v2718
        %v2720 = vpop.f32.mrb[0].mxu0
        %2721 = vmatprep.mubr.bf16.mxu0 0
        %2722 = vmatmul.mubr.bf16.gmra.mrb[0].mxu0 %v2596
        %v2723 = vpop.f32.mrb[0].mxu0
        %v2724 = vadd.f32 %v2616, %v2723
        %v2725 = vpop.f32.mrb[0].mxu0
        %v2726 = vpop.f32.mrb[0].mxu0
        %v2727 = vadd.f32 %v2616, %v2726
        %v2728 = vpop.f32.mrb[0].mxu0
        %2729 = vdwg.mxu0
        %v2730 = vadd.f32 %v2284, %v2700
        %v2731 = vadd.f32 %v2285, %v2703
        %v2732 = vadd.f32 %v2286, %v2708
        %v2733 = vadd.f32 %v2287, %v2711
        %v2734 = vadd.f32 %v2288, %v2716
        %v2735 = vadd.f32 %v2289, %v2719
        %v2736 = vadd.f32 %v2290, %v2724
        %v2737 = vadd.f32 %v2291, %v2727
        %v2738 = vsel %vm500, %v2730, 0.0
        %2739 = vadd.xlane.f32.xlu0 %v2738
        %v2740 = vpop.xlane.xlu0 %2739
        %v2741 = vsel %vm500, %v2731, 0.0
        %2742 = vadd.xlane.f32.xlu0 %v2741
        %v2743 = vpop.xlane.xlu0 %2742
        %v2744 = vsel %vm500, %v2732, 0.0
        %2745 = vadd.xlane.f32.xlu0 %v2744
        %v2746 = vpop.xlane.xlu0 %2745
        %v2747 = vsel %vm500, %v2733, 0.0
        %2748 = vadd.xlane.f32.xlu0 %v2747
        %v2749 = vpop.xlane.xlu0 %2748
        %v2750 = vsel %vm500, %v2734, 0.0
        %2751 = vadd.xlane.f32.xlu0 %v2750
        %v2752 = vpop.xlane.xlu0 %2751
        %v2753 = vsel %vm500, %v2735, 0.0
        %2754 = vadd.xlane.f32.xlu0 %v2753
        %v2755 = vpop.xlane.xlu0 %2754
        %v2756 = vsel %vm500, %v2736, 0.0
        %2757 = vadd.xlane.f32.xlu0 %v2756
        %v2758 = vpop.xlane.xlu0 %2757
        %v2759 = vsel %vm500, %v2737, 0.0
        %2760 = vadd.xlane.f32.xlu0 %v2759
        %v2761 = vpop.xlane.xlu0 %2760
        %v2762 = vmul.f32 %v2740, %v525
        %v2763 = vmul.f32 %v2743, %v525
        %v2764 = vmul.f32 %v2746, %v525
        %v2765 = vmul.f32 %v2749, %v525
        %v2766 = vmul.f32 %v2752, %v525
        %v2767 = vmul.f32 %v2755, %v525
        %v2768 = vmul.f32 %v2758, %v525
        %v2769 = vmul.f32 %v2761, %v525
        %v2770 = vsub.f32 %v2730, %v2762
        %v2771 = vsub.f32 %v2731, %v2763
        %v2772 = vsub.f32 %v2732, %v2764
        %v2773 = vsub.f32 %v2733, %v2765
        %v2774 = vsub.f32 %v2734, %v2766
        %v2775 = vsub.f32 %v2735, %v2767
        %v2776 = vsub.f32 %v2736, %v2768
        %v2777 = vsub.f32 %v2737, %v2769
        %v2778 = vmul.f32 %v2770, %v2770
        %v2779 = vmul.f32 %v2771, %v2771
        %v2780 = vmul.f32 %v2772, %v2772
        %v2781 = vmul.f32 %v2773, %v2773
        %v2782 = vmul.f32 %v2774, %v2774
        %v2783 = vmul.f32 %v2775, %v2775
        %v2784 = vmul.f32 %v2776, %v2776
        %v2785 = vmul.f32 %v2777, %v2777
        %v2786 = vsel %vm500, %v2778, 0.0
        %2787 = vadd.xlane.f32.xlu0 %v2786
        %v2788 = vpop.xlane.xlu0 %2787
        %v2789 = vsel %vm500, %v2779, 0.0
        %2790 = vadd.xlane.f32.xlu0 %v2789
        %v2791 = vpop.xlane.xlu0 %2790
        %v2792 = vsel %vm500, %v2780, 0.0
        %2793 = vadd.xlane.f32.xlu0 %v2792
        %v2794 = vpop.xlane.xlu0 %2793
        %v2795 = vsel %vm500, %v2781, 0.0
        %2796 = vadd.xlane.f32.xlu0 %v2795
        %v2797 = vpop.xlane.xlu0 %2796
        %v2798 = vsel %vm500, %v2782, 0.0
        %2799 = vadd.xlane.f32.xlu0 %v2798
        %v2800 = vpop.xlane.xlu0 %2799
        %v2801 = vsel %vm500, %v2783, 0.0
        %2802 = vadd.xlane.f32.xlu0 %v2801
        %v2803 = vpop.xlane.xlu0 %2802
        %v2804 = vsel %vm500, %v2784, 0.0
        %2805 = vadd.xlane.f32.xlu0 %v2804
        %v2806 = vpop.xlane.xlu0 %2805
        %v2807 = vsel %vm500, %v2785, 0.0
        %2808 = vadd.xlane.f32.xlu0 %v2807
        %v2809 = vpop.xlane.xlu0 %2808
        %v2810 = vmul.f32 %v2788, %v525
        %v2811 = vmul.f32 %v2791, %v525
        %v2812 = vmul.f32 %v2794, %v525
        %v2813 = vmul.f32 %v2797, %v525
        %v2814 = vmul.f32 %v2800, %v525
        %v2815 = vmul.f32 %v2803, %v525
        %v2816 = vmul.f32 %v2806, %v525
        %v2817 = vmul.f32 %v2809, %v525
        %v2818 = vadd.f32 %v2810, 1e-05
        %v2819 = vadd.f32 %v2811, 1e-05
        %v2820 = vadd.f32 %v2812, 1e-05
        %v2821 = vadd.f32 %v2813, 1e-05
        %v2822 = vadd.f32 %v2814, 1e-05
        %v2823 = vadd.f32 %v2815, 1e-05
        %v2824 = vadd.f32 %v2816, 1e-05
        %v2825 = vadd.f32 %v2817, 1e-05
        %v2826 = vrsqrt.pop %v2818
        %v2827 = vrsqrt.pop %v2819
        %v2828 = vrsqrt.pop %v2820
        %v2829 = vrsqrt.pop %v2821
        %v2830 = vrsqrt.pop %v2822
        %v2831 = vrsqrt.pop %v2823
        %v2832 = vrsqrt.pop %v2824
        %v2833 = vrsqrt.pop %v2825
        %v2834 = vmul.f32 %v2770, %v2826
        %v2835 = vmul.f32 %v2771, %v2827
        %v2836 = vmul.f32 %v2772, %v2828
        %v2837 = vmul.f32 %v2773, %v2829
        %v2838 = vmul.f32 %v2774, %v2830
        %v2839 = vmul.f32 %v2775, %v2831
        %v2840 = vmul.f32 %v2776, %v2832
        %v2841 = vmul.f32 %v2777, %v2833
        %v2842 = vlaneseq
        %v2843 = vshrl.u32 %v2842, 7
        %v2844 = vsub.s32 1, %v2843
        %v2845 = vrot.slane %v484, %v2844
        %v2846 = vmul.f32 %v2834, %v2845
        %v2847 = vmul.f32 %v2835, %v2845
        %v2848 = vmul.f32 %v2836, %v2845
        %v2849 = vmul.f32 %v2837, %v2845
        %v2850 = vmul.f32 %v2838, %v2845
        %v2851 = vmul.f32 %v2839, %v2845
        %v2852 = vmul.f32 %v2840, %v2845
        %v2853 = vmul.f32 %v2841, %v2845
        %v2854 = vlaneseq
        %v2855 = vshrl.u32 %v2854, 7
        %v2856 = vsub.s32 1, %v2855
        %v2857 = vrot.slane %v485, %v2856
        %v2858 = vadd.f32 %v2846, %v2857
        %v2859 = vadd.f32 %v2847, %v2857
        %v2860 = vadd.f32 %v2848, %v2857
        %v2861 = vadd.f32 %v2849, %v2857
        %v2862 = vadd.f32 %v2850, %v2857
        %v2863 = vadd.f32 %v2851, %v2857
        %v2864 = vadd.f32 %v2852, %v2857
        %v2865 = vadd.f32 %v2853, %v2857
        %v2866 = vpack.c.bf16 %v2859, %v2858
        %v2867 = vpack.c.bf16 %v2861, %v2860
        %v2868 = vpack.c.bf16 %v2863, %v2862
        %v2869 = vpack.c.bf16 %v2865, %v2864
        %s2870 = scalar_lea.vmem %s3, 16
        %v2871 = vld [vmem:[%s2870] sm:$0xf]
        %v2872 = vld [vmem:[%s2870 + $0x4] sm:$0xf]
        %v2873 = vld [vmem:[%s2870 + $0x8] sm:$0xf]
        %v2874 = vld [vmem:[%s2870 + $0xc] sm:$0xf]
        %v2875 = vlaneseq
        %v2876 = vshrl.u32 %v2875, 7
        %v2877 = vsub.s32 1, %v2876
        %v2878 = vrot.slane %v488, %v2877
        %v2883 = vunpack.c.l.b16 %v2871
        %v2884 = vunpack.c.l.b16 %v2872
        %v2885 = vunpack.c.l.b16 %v2873
        %v2886 = vunpack.c.l.b16 %v2874
        %v2887 = vpack.c.b16 %v2884, %v2883
        %v2888 = vpack.c.b16 %v2886, %v2885
        %v2892 = vsel %vm500, %v2866, 0
        %v2895 = vsel %vm500, %v2867, 0
        %v2898 = vsel %vm500, %v2868, 0
        %v2901 = vsel %vm500, %v2869, 0
        %2903 = vmatprep.subr.bf16.mxu0 0
        %2904 = vmatpush1.bf16.msra.mxu0 %v2887
        %2905 = vmatprep.subr.bf16.mxu0 0
        %2906 = vmatpush1.bf16.msra.mxu0 %v2888
        %2907 = vmatprep.subr.bf16.mxu0 0
        %2908 = vmatpush1.bf16.msra.mxu0 0
        %2909 = vmatprep.subr.bf16.mxu0 0
        %2910 = vmatpush1.bf16.msra.mxu0 0
        %2911 = vmatprep.subr.bf16.mxu0 0
        %2912 = vmatpush1.bf16.msra.mxu0 0
        %2913 = vmatprep.subr.bf16.mxu0 0
        %2914 = vmatpush1.bf16.msra.mxu0 0
        %2915 = vmatprep.subr.bf16.mxu0 0
        %2916 = vmatpush1.bf16.msra.mxu0 0
        %2917 = vmatprep.subr.bf16.mxu0 0
        %2918 = vmatpush1.bf16.msra.mxu0 0
        %2919 = vmatprep.subr.bf16.mxu0 0
        %2920 = vmatpush1.bf16.msra.mxu0 0
        %2921 = vmatprep.subr.bf16.mxu0 0
        %2922 = vmatpush1.bf16.msra.mxu0 0
        %2923 = vmatprep.subr.bf16.mxu0 0
        %2924 = vmatpush1.bf16.msra.mxu0 0
        %2925 = vmatprep.subr.bf16.mxu0 0
        %2926 = vmatpush1.bf16.msra.mxu0 0
        %2927 = vmatprep.subr.bf16.mxu0 0
        %2928 = vmatpush1.bf16.msra.mxu0 0
        %2929 = vmatprep.subr.bf16.mxu0 0
        %2930 = vmatpush1.bf16.msra.mxu0 0
        %2931 = vmatprep.subr.bf16.mxu0 0
        %2932 = vmatpush1.bf16.msra.mxu0 0
        %2933 = vmatprep.subr.bf16.mxu0 0
        %2934 = vmatpush1.bf16.msra.mxu0 0
        %2935 = vmatprep.mubr.bf16.mxu0 0
        %2936 = vmatmul.mubr.bf16.gmra.mrb[0].mxu0 %v2892
        %v2937 = vpop.f32.mrb[0].mxu0
        %v2938 = vadd.f32 %v2878, %v2937
        %v2939 = vpop.f32.mrb[0].mxu0
        %v2940 = vpop.f32.mrb[0].mxu0
        %v2941 = vadd.f32 %v2878, %v2940
        %v2942 = vpop.f32.mrb[0].mxu0
        %2943 = vmatprep.mubr.bf16.mxu0 0
        %2944 = vmatmul.mubr.bf16.gmra.mrb[0].mxu0 %v2895
        %v2945 = vpop.f32.mrb[0].mxu0
        %v2946 = vadd.f32 %v2878, %v2945
        %v2947 = vpop.f32.mrb[0].mxu0
        %v2948 = vpop.f32.mrb[0].mxu0
        %v2949 = vadd.f32 %v2878, %v2948
        %v2950 = vpop.f32.mrb[0].mxu0
        %2951 = vmatprep.mubr.bf16.mxu0 0
        %2952 = vmatmul.mubr.bf16.gmra.mrb[0].mxu0 %v2898
        %v2953 = vpop.f32.mrb[0].mxu0
        %v2954 = vadd.f32 %v2878, %v2953
        %v2955 = vpop.f32.mrb[0].mxu0
        %v2956 = vpop.f32.mrb[0].mxu0
        %v2957 = vadd.f32 %v2878, %v2956
        %v2958 = vpop.f32.mrb[0].mxu0
        %2959 = vmatprep.mubr.bf16.mxu0 0
        %2960 = vmatmul.mubr.bf16.gmra.mrb[0].mxu0 %v2901
        %v2961 = vpop.f32.mrb[0].mxu0
        %v2962 = vadd.f32 %v2878, %v2961
        %v2963 = vpop.f32.mrb[0].mxu0
        %v2964 = vpop.f32.mrb[0].mxu0
        %v2965 = vadd.f32 %v2878, %v2964
        %v2966 = vpop.f32.mrb[0].mxu0
        %2967 = vdwg.mxu0
        %v2968 = vpack.c.bf16 %v2941, %v2938
        %v2969 = vpack.c.bf16 %v2949, %v2946
        %v2970 = vpack.c.bf16 %v2957, %v2954
        %v2971 = vpack.c.bf16 %v2965, %v2962
        %s2972 = scalar_lea.vmem [#allocation2], 256
        %v2973 = vld [vmem:[%s2972] sm:$0xff]
        %v2974 = vld [vmem:[%s2972 + $0x8] sm:$0xff]
        %v2975 = vld [vmem:[%s2972 + $0x10] sm:$0xff]
        %v2976 = vld [vmem:[%s2972 + $0x18] sm:$0xff]
        %v2977 = vld [vmem:[%s2972 + $0x20] sm:$0xff]
        %v2978 = vld [vmem:[%s2972 + $0x28] sm:$0xff]
        %v2979 = vld [vmem:[%s2972 + $0x30] sm:$0xff]
        %v2980 = vld [vmem:[%s2972 + $0x38] sm:$0xff]
        %2985 = vrot.lane.b32.xlu0 %v2968, 96
        %v2986 = vpop.permute.xlu0 %2985
        %2987 = vrot.lane.b32.xlu0 %v2969, 96
        %v2988 = vpop.permute.xlu0 %2987
        %2989 = vrot.lane.b32.xlu0 %v2970, 96
        %v2990 = vpop.permute.xlu0 %2989
        %2991 = vrot.lane.b32.xlu0 %v2971, 96
        %v2992 = vpop.permute.xlu0 %2991
        %v2994 = vsel %vm755, %v2968, 0
        %v2997 = vsel %vm755, %v2969, 0
        %v3000 = vsel %vm755, %v2970, 0
        %v3003 = vsel %vm755, %v2971, 0
        %v3006 = vsel %vm755, %v2986, 0
        %v3009 = vsel %vm755, %v2988, 0
        %v3012 = vsel %vm755, %v2990, 0
        %v3015 = vsel %vm755, %v2992, 0
        %3017 = vmatprep.subr.bf16.mxu0 0
        %3018 = vmatpush1.bf16.xpose.msra.mxu0 %v3006
        %3019 = vmatprep.subr.bf16.mxu0 0
        %3020 = vmatpush1.bf16.xpose.msra.mxu0 %v3009
        %3021 = vmatprep.subr.bf16.mxu0 0
        %3022 = vmatpush1.bf16.xpose.msra.mxu0 %v3012
        %3023 = vmatprep.subr.bf16.mxu0 0
        %3024 = vmatpush1.bf16.xpose.msra.mxu0 %v3015
        %3025 = vmatprep.subr.bf16.mxu0 0
        %3026 = vmatpush1.bf16.xpose.msra.mxu0 0
        %3027 = vmatprep.subr.bf16.mxu0 0
        %3028 = vmatpush1.bf16.xpose.msra.mxu0 0
        %3029 = vmatprep.subr.bf16.mxu0 0
        %3030 = vmatpush1.bf16.xpose.msra.mxu0 0
        %3031 = vmatprep.subr.bf16.mxu0 0
        %3032 = vmatpush1.bf16.xpose.msra.mxu0 0
        %3033 = vmatprep.subr.bf16.mxu0 0
        %3034 = vmatpush1.bf16.xpose.msra.mxu0 0
        %3035 = vmatprep.subr.bf16.mxu0 0
        %3036 = vmatpush1.bf16.xpose.msra.mxu0 0
        %3037 = vmatprep.subr.bf16.mxu0 0
        %3038 = vmatpush1.bf16.xpose.msra.mxu0 0
        %3039 = vmatprep.subr.bf16.mxu0 0
        %3040 = vmatpush1.bf16.xpose.msra.mxu0 0
        %3041 = vmatprep.subr.bf16.mxu0 0
        %3042 = vmatpush1.bf16.xpose.msra.mxu0 0
        %3043 = vmatprep.subr.bf16.mxu0 0
        %3044 = vmatpush1.bf16.xpose.msra.mxu0 0
        %3045 = vmatprep.subr.bf16.mxu0 0
        %3046 = vmatpush1.bf16.xpose.msra.mxu0 0
        %3047 = vmatprep.subr.bf16.mxu0 0
        %3048 = vmatpush1.bf16.xpose.msra.mxu0 0
        %3049 = vmatprep.mubr.bf16.mxu0 0
        %3050 = vmatmul.mubr.bf16.gmra.mrb[0].mxu0 %v2994
        %v3051 = vpop.f32.mrb[0].mxu0
        %v3052 = vadd.f32 %v2973, %v3051
        %v3053 = vpop.f32.mrb[0].mxu0
        %v3054 = vpop.f32.mrb[0].mxu0
        %v3055 = vadd.f32 %v2974, %v3054
        %v3056 = vpop.f32.mrb[0].mxu0
        %3057 = vmatprep.mubr.bf16.mxu0 0
        %3058 = vmatmul.mubr.bf16.gmra.mrb[0].mxu0 %v2997
        %v3059 = vpop.f32.mrb[0].mxu0
        %v3060 = vadd.f32 %v2975, %v3059
        %v3061 = vpop.f32.mrb[0].mxu0
        %v3062 = vpop.f32.mrb[0].mxu0
        %v3063 = vadd.f32 %v2976, %v3062
        %v3064 = vpop.f32.mrb[0].mxu0
        %3065 = vmatprep.mubr.bf16.mxu0 0
        %3066 = vmatmul.mubr.bf16.gmra.mrb[0].mxu0 %v3000
        %v3067 = vpop.f32.mrb[0].mxu0
        %v3068 = vadd.f32 %v2977, %v3067
        %v3069 = vpop.f32.mrb[0].mxu0
        %v3070 = vpop.f32.mrb[0].mxu0
        %v3071 = vadd.f32 %v2978, %v3070
        %v3072 = vpop.f32.mrb[0].mxu0
        %3073 = vmatprep.mubr.bf16.mxu0 0
        %3074 = vmatmul.mubr.bf16.gmra.mrb[0].mxu0 %v3003
        %v3075 = vpop.f32.mrb[0].mxu0
        %v3076 = vadd.f32 %v2979, %v3075
        %v3077 = vpop.f32.mrb[0].mxu0
        %v3078 = vpop.f32.mrb[0].mxu0
        %v3079 = vadd.f32 %v2980, %v3078
        %v3080 = vpop.f32.mrb[0].mxu0
        %3081 = vdwg.mxu0
        %v3082 = vsel %vm845, %v3052, -inf
        %3083 = vmax.xlane.f32.xlu0 %v3082
        %v3084 = vpop.xlane.xlu0 %3083
        %v3085 = vsel %vm845, %v3055, -inf
        %3086 = vmax.xlane.f32.xlu0 %v3085
        %v3087 = vpop.xlane.xlu0 %3086
        %v3088 = vsel %vm845, %v3060, -inf
        %3089 = vmax.xlane.f32.xlu0 %v3088
        %v3090 = vpop.xlane.xlu0 %3089
        %v3091 = vsel %vm845, %v3063, -inf
        %3092 = vmax.xlane.f32.xlu0 %v3091
        %v3093 = vpop.xlane.xlu0 %3092
        %v3094 = vsel %vm845, %v3068, -inf
        %3095 = vmax.xlane.f32.xlu0 %v3094
        %v3096 = vpop.xlane.xlu0 %3095
        %v3097 = vsel %vm845, %v3071, -inf
        %3098 = vmax.xlane.f32.xlu0 %v3097
        %v3099 = vpop.xlane.xlu0 %3098
        %v3100 = vsel %vm845, %v3076, -inf
        %3101 = vmax.xlane.f32.xlu0 %v3100
        %v3102 = vpop.xlane.xlu0 %3101
        %v3103 = vsel %vm845, %v3079, -inf
        %3104 = vmax.xlane.f32.xlu0 %v3103
        %v3105 = vpop.xlane.xlu0 %3104
        %v3106 = vsub.f32 %v3052, %v3084
        %v3107 = vsub.f32 %v3055, %v3087
        %v3108 = vsub.f32 %v3060, %v3090
        %v3109 = vsub.f32 %v3063, %v3093
        %v3110 = vsub.f32 %v3068, %v3096
        %v3111 = vsub.f32 %v3071, %v3099
        %v3112 = vsub.f32 %v3076, %v3102
        %v3113 = vsub.f32 %v3079, %v3105
        %v3114 = vmul.f32 %v3106, 1.442695
        %v3115 = vpow.pop %v3114
        %v3116 = vmul.f32 %v3107, 1.442695
        %v3117 = vpow.pop %v3116
        %v3118 = vmul.f32 %v3108, 1.442695
        %v3119 = vpow.pop %v3118
        %v3120 = vmul.f32 %v3109, 1.442695
        %v3121 = vpow.pop %v3120
        %v3122 = vmul.f32 %v3110, 1.442695
        %v3123 = vpow.pop %v3122
        %v3124 = vmul.f32 %v3111, 1.442695
        %v3125 = vpow.pop %v3124
        %v3126 = vmul.f32 %v3112, 1.442695
        %v3127 = vpow.pop %v3126
        %v3128 = vmul.f32 %v3113, 1.442695
        %v3129 = vpow.pop %v3128
        %v3130 = vsel %vm845, %v3115, 0.0
        %3131 = vadd.xlane.f32.xlu0 %v3130
        %v3132 = vpop.xlane.xlu0 %3131
        %v3133 = vsel %vm845, %v3117, 0.0
        %3134 = vadd.xlane.f32.xlu0 %v3133
        %v3135 = vpop.xlane.xlu0 %3134
        %v3136 = vsel %vm845, %v3119, 0.0
        %3137 = vadd.xlane.f32.xlu0 %v3136
        %v3138 = vpop.xlane.xlu0 %3137
        %v3139 = vsel %vm845, %v3121, 0.0
        %3140 = vadd.xlane.f32.xlu0 %v3139
        %v3141 = vpop.xlane.xlu0 %3140
        %v3142 = vsel %vm845, %v3123, 0.0
        %3143 = vadd.xlane.f32.xlu0 %v3142
        %v3144 = vpop.xlane.xlu0 %3143
        %v3145 = vsel %vm845, %v3125, 0.0
        %3146 = vadd.xlane.f32.xlu0 %v3145
        %v3147 = vpop.xlane.xlu0 %3146
        %v3148 = vsel %vm845, %v3127, 0.0
        %3149 = vadd.xlane.f32.xlu0 %v3148
        %v3150 = vpop.xlane.xlu0 %3149
        %v3151 = vsel %vm845, %v3129, 0.0
        %3152 = vadd.xlane.f32.xlu0 %v3151
        %v3153 = vpop.xlane.xlu0 %3152
        %v3154 = vrcp.pop %v3132
        %v3155 = vrcp.pop %v3135
        %v3156 = vrcp.pop %v3138
        %v3157 = vrcp.pop %v3141
        %v3158 = vrcp.pop %v3144
        %v3159 = vrcp.pop %v3147
        %v3160 = vrcp.pop %v3150
        %v3161 = vrcp.pop %v3153
        %v3162 = vmul.f32 %v3115, %v3154
        %v3163 = vmul.f32 %v3117, %v3155
        %v3164 = vmul.f32 %v3119, %v3156
        %v3165 = vmul.f32 %v3121, %v3157
        %v3166 = vmul.f32 %v3123, %v3158
        %v3167 = vmul.f32 %v3125, %v3159
        %v3168 = vmul.f32 %v3127, %v3160
        %v3169 = vmul.f32 %v3129, %v3161
        %v3170 = vpack.c.bf16 %v3163, %v3162
        %v3171 = vpack.c.bf16 %v3165, %v3164
        %v3172 = vpack.c.bf16 %v3167, %v3166
        %v3173 = vpack.c.bf16 %v3169, %v3168
        %3174 = vrot.lane.b32.xlu0 %v2968, 64
        %v3175 = vpop.permute.xlu0 %3174
        %3176 = vrot.lane.b32.xlu0 %v2969, 64
        %v3177 = vpop.permute.xlu0 %3176
        %3178 = vrot.lane.b32.xlu0 %v2970, 64
        %v3179 = vpop.permute.xlu0 %3178
        %3180 = vrot.lane.b32.xlu0 %v2971, 64
        %v3181 = vpop.permute.xlu0 %3180
        %v3187 = vsel %vm845, %v3170, 0
        %v3190 = vsel %vm845, %v3171, 0
        %v3193 = vsel %vm845, %v3172, 0
        %v3196 = vsel %vm845, %v3173, 0
        %3198 = vmatprep.subr.bf16.mxu0 0
        %3199 = vmatpush1.bf16.msra.mxu0 %v3175
        %3200 = vmatprep.subr.bf16.mxu0 0
        %3201 = vmatpush1.bf16.msra.mxu0 %v3177
        %3202 = vmatprep.subr.bf16.mxu0 0
        %3203 = vmatpush1.bf16.msra.mxu0 %v3179
        %3204 = vmatprep.subr.bf16.mxu0 0
        %3205 = vmatpush1.bf16.msra.mxu0 %v3181
        %3206 = vmatprep.subr.bf16.mxu0 0
        %3207 = vmatpush1.bf16.msra.mxu0 0
        %3208 = vmatprep.subr.bf16.mxu0 0
        %3209 = vmatpush1.bf16.msra.mxu0 0
        %3210 = vmatprep.subr.bf16.mxu0 0
        %3211 = vmatpush1.bf16.msra.mxu0 0
        %3212 = vmatprep.subr.bf16.mxu0 0
        %3213 = vmatpush1.bf16.msra.mxu0 0
        %3214 = vmatprep.subr.bf16.mxu0 0
        %3215 = vmatpush1.bf16.msra.mxu0 0
        %3216 = vmatprep.subr.bf16.mxu0 0
        %3217 = vmatpush1.bf16.msra.mxu0 0
        %3218 = vmatprep.subr.bf16.mxu0 0
        %3219 = vmatpush1.bf16.msra.mxu0 0
        %3220 = vmatprep.subr.bf16.mxu0 0
        %3221 = vmatpush1.bf16.msra.mxu0 0
        %3222 = vmatprep.subr.bf16.mxu0 0
        %3223 = vmatpush1.bf16.msra.mxu0 0
        %3224 = vmatprep.subr.bf16.mxu0 0
        %3225 = vmatpush1.bf16.msra.mxu0 0
        %3226 = vmatprep.subr.bf16.mxu0 0
        %3227 = vmatpush1.bf16.msra.mxu0 0
        %3228 = vmatprep.subr.bf16.mxu0 0
        %3229 = vmatpush1.bf16.msra.mxu0 0
        %3230 = vmatprep.mubr.bf16.mxu0 0
        %3231 = vmatmul.mubr.bf16.gmra.mrb[0].mxu0 %v3187
        %v3232 = vpop.f32.mrb[0].mxu0
        %v3233 = vadd.f32 0.0, %v3232
        %v3234 = vpop.f32.mrb[0].mxu0
        %v3235 = vpop.f32.mrb[0].mxu0
        %v3236 = vadd.f32 0.0, %v3235
        %v3237 = vpop.f32.mrb[0].mxu0
        %3238 = vmatprep.mubr.bf16.mxu0 0
        %3239 = vmatmul.mubr.bf16.gmra.mrb[0].mxu0 %v3190
        %v3240 = vpop.f32.mrb[0].mxu0
        %v3241 = vadd.f32 0.0, %v3240
        %v3242 = vpop.f32.mrb[0].mxu0
        %v3243 = vpop.f32.mrb[0].mxu0
        %v3244 = vadd.f32 0.0, %v3243
        %v3245 = vpop.f32.mrb[0].mxu0
        %3246 = vmatprep.mubr.bf16.mxu0 0
        %3247 = vmatmul.mubr.bf16.gmra.mrb[0].mxu0 %v3193
        %v3248 = vpop.f32.mrb[0].mxu0
        %v3249 = vadd.f32 0.0, %v3248
        %v3250 = vpop.f32.mrb[0].mxu0
        %v3251 = vpop.f32.mrb[0].mxu0
        %v3252 = vadd.f32 0.0, %v3251
        %v3253 = vpop.f32.mrb[0].mxu0
        %3254 = vmatprep.mubr.bf16.mxu0 0
        %3255 = vmatmul.mubr.bf16.gmra.mrb[0].mxu0 %v3196
        %v3256 = vpop.f32.mrb[0].mxu0
        %v3257 = vadd.f32 0.0, %v3256
        %v3258 = vpop.f32.mrb[0].mxu0
        %v3259 = vpop.f32.mrb[0].mxu0
        %v3260 = vadd.f32 0.0, %v3259
        %v3261 = vpop.f32.mrb[0].mxu0
        %3262 = vdwg.mxu0
        %v3263 = vpack.c.bf16 %v3236, %v3233
        %v3264 = vpack.c.bf16 %v3244, %v3241
        %v3265 = vpack.c.bf16 %v3252, %v3249
        %v3266 = vpack.c.bf16 %v3260, %v3257
        %s3267 = scalar_lea.vmem %s5, 16
        %v3268 = vld [vmem:[%s3267] sm:$0xf]
        %s3269 = scalar_lea.vmem [#allocation2], 320
        %v3270 = vld [vmem:[%s3269] sm:$0xff]
        %v3271 = vld [vmem:[%s3269 + $0x8] sm:$0xff]
        %v3272 = vld [vmem:[%s3269 + $0x10] sm:$0xff]
        %v3273 = vld [vmem:[%s3269 + $0x18] sm:$0xff]
        %v3274 = vld [vmem:[%s3269 + $0x20] sm:$0xff]
        %v3275 = vld [vmem:[%s3269 + $0x28] sm:$0xff]
        %v3276 = vld [vmem:[%s3269 + $0x30] sm:$0xff]
        %v3277 = vld [vmem:[%s3269 + $0x38] sm:$0xff]
        %3278 = vrot.lane.b32.xlu0 %v2968, 120
        %v3279 = vpop.permute.xlu0 %3278
        %3280 = vrot.lane.b32.xlu0 %v2969, 120
        %v3281 = vpop.permute.xlu0 %3280
        %3282 = vrot.lane.b32.xlu0 %v2970, 120
        %v3283 = vpop.permute.xlu0 %3282
        %3284 = vrot.lane.b32.xlu0 %v2971, 120
        %v3285 = vpop.permute.xlu0 %3284
        %3286 = vrot.lane.b32.xlu0 %v2968, 88
        %v3287 = vpop.permute.xlu0 %3286
        %3288 = vrot.lane.b32.xlu0 %v2969, 88
        %v3289 = vpop.permute.xlu0 %3288
        %3290 = vrot.lane.b32.xlu0 %v2970, 88
        %v3291 = vpop.permute.xlu0 %3290
        %3292 = vrot.lane.b32.xlu0 %v2971, 88
        %v3293 = vpop.permute.xlu0 %3292
        %v3295 = vsel %vm755, %v3279, 0
        %v3298 = vsel %vm755, %v3281, 0
        %v3301 = vsel %vm755, %v3283, 0
        %v3304 = vsel %vm755, %v3285, 0
        %v3307 = vsel %vm755, %v3287, 0
        %v3310 = vsel %vm755, %v3289, 0
        %v3313 = vsel %vm755, %v3291, 0
        %v3316 = vsel %vm755, %v3293, 0
        %3318 = vmatprep.subr.bf16.mxu0 0
        %3319 = vmatpush1.bf16.xpose.msra.mxu0 %v3307
        %3320 = vmatprep.subr.bf16.mxu0 0
        %3321 = vmatpush1.bf16.xpose.msra.mxu0 %v3310
        %3322 = vmatprep.subr.bf16.mxu0 0
        %3323 = vmatpush1.bf16.xpose.msra.mxu0 %v3313
        %3324 = vmatprep.subr.bf16.mxu0 0
        %3325 = vmatpush1.bf16.xpose.msra.mxu0 %v3316
        %3326 = vmatprep.subr.bf16.mxu0 0
        %3327 = vmatpush1.bf16.xpose.msra.mxu0 0
        %3328 = vmatprep.subr.bf16.mxu0 0
        %3329 = vmatpush1.bf16.xpose.msra.mxu0 0
        %3330 = vmatprep.subr.bf16.mxu0 0
        %3331 = vmatpush1.bf16.xpose.msra.mxu0 0
        %3332 = vmatprep.subr.bf16.mxu0 0
        %3333 = vmatpush1.bf16.xpose.msra.mxu0 0
        %3334 = vmatprep.subr.bf16.mxu0 0
        %3335 = vmatpush1.bf16.xpose.msra.mxu0 0
        %3336 = vmatprep.subr.bf16.mxu0 0
        %3337 = vmatpush1.bf16.xpose.msra.mxu0 0
        %3338 = vmatprep.subr.bf16.mxu0 0
        %3339 = vmatpush1.bf16.xpose.msra.mxu0 0
        %3340 = vmatprep.subr.bf16.mxu0 0
        %3341 = vmatpush1.bf16.xpose.msra.mxu0 0
        %3342 = vmatprep.subr.bf16.mxu0 0
        %3343 = vmatpush1.bf16.xpose.msra.mxu0 0
        %3344 = vmatprep.subr.bf16.mxu0 0
        %3345 = vmatpush1.bf16.xpose.msra.mxu0 0
        %3346 = vmatprep.subr.bf16.mxu0 0
        %3347 = vmatpush1.bf16.xpose.msra.mxu0 0
        %3348 = vmatprep.subr.bf16.mxu0 0
        %3349 = vmatpush1.bf16.xpose.msra.mxu0 0
        %3350 = vmatprep.mubr.bf16.mxu0 0
        %3351 = vmatmul.mubr.bf16.gmra.mrb[0].mxu0 %v3295
        %v3352 = vpop.f32.mrb[0].mxu0
        %v3353 = vadd.f32 %v3270, %v3352
        %v3354 = vpop.f32.mrb[0].mxu0
        %v3355 = vpop.f32.mrb[0].mxu0
        %v3356 = vadd.f32 %v3271, %v3355
        %v3357 = vpop.f32.mrb[0].mxu0
        %3358 = vmatprep.mubr.bf16.mxu0 0
        %3359 = vmatmul.mubr.bf16.gmra.mrb[0].mxu0 %v3298
        %v3360 = vpop.f32.mrb[0].mxu0
        %v3361 = vadd.f32 %v3272, %v3360
        %v3362 = vpop.f32.mrb[0].mxu0
        %v3363 = vpop.f32.mrb[0].mxu0
        %v3364 = vadd.f32 %v3273, %v3363
        %v3365 = vpop.f32.mrb[0].mxu0
        %3366 = vmatprep.mubr.bf16.mxu0 0
        %3367 = vmatmul.mubr.bf16.gmra.mrb[0].mxu0 %v3301
        %v3368 = vpop.f32.mrb[0].mxu0
        %v3369 = vadd.f32 %v3274, %v3368
        %v3370 = vpop.f32.mrb[0].mxu0
        %v3371 = vpop.f32.mrb[0].mxu0
        %v3372 = vadd.f32 %v3275, %v3371
        %v3373 = vpop.f32.mrb[0].mxu0
        %3374 = vmatprep.mubr.bf16.mxu0 0
        %3375 = vmatmul.mubr.bf16.gmra.mrb[0].mxu0 %v3304
        %v3376 = vpop.f32.mrb[0].mxu0
        %v3377 = vadd.f32 %v3276, %v3376
        %v3378 = vpop.f32.mrb[0].mxu0
        %v3379 = vpop.f32.mrb[0].mxu0
        %v3380 = vadd.f32 %v3277, %v3379
        %v3381 = vpop.f32.mrb[0].mxu0
        %3382 = vdwg.mxu0
        %v3383 = vsel %vm845, %v3353, -inf
        %3384 = vmax.xlane.f32.xlu0 %v3383
        %v3385 = vpop.xlane.xlu0 %3384
        %v3386 = vsel %vm845, %v3356, -inf
        %3387 = vmax.xlane.f32.xlu0 %v3386
        %v3388 = vpop.xlane.xlu0 %3387
        %v3389 = vsel %vm845, %v3361, -inf
        %3390 = vmax.xlane.f32.xlu0 %v3389
        %v3391 = vpop.xlane.xlu0 %3390
        %v3392 = vsel %vm845, %v3364, -inf
        %3393 = vmax.xlane.f32.xlu0 %v3392
        %v3394 = vpop.xlane.xlu0 %3393
        %v3395 = vsel %vm845, %v3369, -inf
        %3396 = vmax.xlane.f32.xlu0 %v3395
        %v3397 = vpop.xlane.xlu0 %3396
        %v3398 = vsel %vm845, %v3372, -inf
        %3399 = vmax.xlane.f32.xlu0 %v3398
        %v3400 = vpop.xlane.xlu0 %3399
        %v3401 = vsel %vm845, %v3377, -inf
        %3402 = vmax.xlane.f32.xlu0 %v3401
        %v3403 = vpop.xlane.xlu0 %3402
        %v3404 = vsel %vm845, %v3380, -inf
        %3405 = vmax.xlane.f32.xlu0 %v3404
        %v3406 = vpop.xlane.xlu0 %3405
        %v3407 = vsub.f32 %v3353, %v3385
        %v3408 = vsub.f32 %v3356, %v3388
        %v3409 = vsub.f32 %v3361, %v3391
        %v3410 = vsub.f32 %v3364, %v3394
        %v3411 = vsub.f32 %v3369, %v3397
        %v3412 = vsub.f32 %v3372, %v3400
        %v3413 = vsub.f32 %v3377, %v3403
        %v3414 = vsub.f32 %v3380, %v3406
        %v3415 = vmul.f32 %v3407, 1.442695
        %v3416 = vpow.pop %v3415
        %v3417 = vmul.f32 %v3408, 1.442695
        %v3418 = vpow.pop %v3417
        %v3419 = vmul.f32 %v3409, 1.442695
        %v3420 = vpow.pop %v3419
        %v3421 = vmul.f32 %v3410, 1.442695
        %v3422 = vpow.pop %v3421
        %v3423 = vmul.f32 %v3411, 1.442695
        %v3424 = vpow.pop %v3423
        %v3425 = vmul.f32 %v3412, 1.442695
        %v3426 = vpow.pop %v3425
        %v3427 = vmul.f32 %v3413, 1.442695
        %v3428 = vpow.pop %v3427
        %v3429 = vmul.f32 %v3414, 1.442695
        %v3430 = vpow.pop %v3429
        %v3431 = vsel %vm845, %v3416, 0.0
        %3432 = vadd.xlane.f32.xlu0 %v3431
        %v3433 = vpop.xlane.xlu0 %3432
        %v3434 = vsel %vm845, %v3418, 0.0
        %3435 = vadd.xlane.f32.xlu0 %v3434
        %v3436 = vpop.xlane.xlu0 %3435
        %v3437 = vsel %vm845, %v3420, 0.0
        %3438 = vadd.xlane.f32.xlu0 %v3437
        %v3439 = vpop.xlane.xlu0 %3438
        %v3440 = vsel %vm845, %v3422, 0.0
        %3441 = vadd.xlane.f32.xlu0 %v3440
        %v3442 = vpop.xlane.xlu0 %3441
        %v3443 = vsel %vm845, %v3424, 0.0
        %3444 = vadd.xlane.f32.xlu0 %v3443
        %v3445 = vpop.xlane.xlu0 %3444
        %v3446 = vsel %vm845, %v3426, 0.0
        %3447 = vadd.xlane.f32.xlu0 %v3446
        %v3448 = vpop.xlane.xlu0 %3447
        %v3449 = vsel %vm845, %v3428, 0.0
        %3450 = vadd.xlane.f32.xlu0 %v3449
        %v3451 = vpop.xlane.xlu0 %3450
        %v3452 = vsel %vm845, %v3430, 0.0
        %3453 = vadd.xlane.f32.xlu0 %v3452
        %v3454 = vpop.xlane.xlu0 %3453
        %v3455 = vrcp.pop %v3433
        %v3456 = vrcp.pop %v3436
        %v3457 = vrcp.pop %v3439
        %v3458 = vrcp.pop %v3442
        %v3459 = vrcp.pop %v3445
        %v3460 = vrcp.pop %v3448
        %v3461 = vrcp.pop %v3451
        %v3462 = vrcp.pop %v3454
        %v3463 = vmul.f32 %v3416, %v3455
        %v3464 = vmul.f32 %v3418, %v3456
        %v3465 = vmul.f32 %v3420, %v3457
        %v3466 = vmul.f32 %v3422, %v3458
        %v3467 = vmul.f32 %v3424, %v3459
        %v3468 = vmul.f32 %v3426, %v3460
        %v3469 = vmul.f32 %v3428, %v3461
        %v3470 = vmul.f32 %v3430, %v3462
        %v3471 = vpack.c.bf16 %v3464, %v3463
        %v3472 = vpack.c.bf16 %v3466, %v3465
        %v3473 = vpack.c.bf16 %v3468, %v3467
        %v3474 = vpack.c.bf16 %v3470, %v3469
        %3475 = vrot.lane.b32.xlu0 %v2968, 56
        %v3476 = vpop.permute.xlu0 %3475
        %3477 = vrot.lane.b32.xlu0 %v2969, 56
        %v3478 = vpop.permute.xlu0 %3477
        %3479 = vrot.lane.b32.xlu0 %v2970, 56
        %v3480 = vpop.permute.xlu0 %3479
        %3481 = vrot.lane.b32.xlu0 %v2971, 56
        %v3482 = vpop.permute.xlu0 %3481
        %v3488 = vsel %vm845, %v3471, 0
        %v3491 = vsel %vm845, %v3472, 0
        %v3494 = vsel %vm845, %v3473, 0
        %v3497 = vsel %vm845, %v3474, 0
        %3499 = vmatprep.subr.bf16.mxu0 0
        %3500 = vmatpush1.bf16.msra.mxu0 %v3476
        %3501 = vmatprep.subr.bf16.mxu0 0
        %3502 = vmatpush1.bf16.msra.mxu0 %v3478
        %3503 = vmatprep.subr.bf16.mxu0 0
        %3504 = vmatpush1.bf16.msra.mxu0 %v3480
        %3505 = vmatprep.subr.bf16.mxu0 0
        %3506 = vmatpush1.bf16.msra.mxu0 %v3482
        %3507 = vmatprep.subr.bf16.mxu0 0
        %3508 = vmatpush1.bf16.msra.mxu0 0
        %3509 = vmatprep.subr.bf16.mxu0 0
        %3510 = vmatpush1.bf16.msra.mxu0 0
        %3511 = vmatprep.subr.bf16.mxu0 0
        %3512 = vmatpush1.bf16.msra.mxu0 0
        %3513 = vmatprep.subr.bf16.mxu0 0
        %3514 = vmatpush1.bf16.msra.mxu0 0
        %3515 = vmatprep.subr.bf16.mxu0 0
        %3516 = vmatpush1.bf16.msra.mxu0 0
        %3517 = vmatprep.subr.bf16.mxu0 0
        %3518 = vmatpush1.bf16.msra.mxu0 0
        %3519 = vmatprep.subr.bf16.mxu0 0
        %3520 = vmatpush1.bf16.msra.mxu0 0
        %3521 = vmatprep.subr.bf16.mxu0 0
        %3522 = vmatpush1.bf16.msra.mxu0 0
        %3523 = vmatprep.subr.bf16.mxu0 0
        %3524 = vmatpush1.bf16.msra.mxu0 0
        %3525 = vmatprep.subr.bf16.mxu0 0
        %3526 = vmatpush1.bf16.msra.mxu0 0
        %3527 = vmatprep.subr.bf16.mxu0 0
        %3528 = vmatpush1.bf16.msra.mxu0 0
        %3529 = vmatprep.subr.bf16.mxu0 0
        %3530 = vmatpush1.bf16.msra.mxu0 0
        %3531 = vmatprep.mubr.bf16.mxu0 0
        %3532 = vmatmul.mubr.bf16.gmra.mrb[0].mxu0 %v3488
        %v3533 = vpop.f32.mrb[0].mxu0
        %v3534 = vadd.f32 0.0, %v3533
        %v3535 = vpop.f32.mrb[0].mxu0
        %v3536 = vpop.f32.mrb[0].mxu0
        %v3537 = vadd.f32 0.0, %v3536
        %v3538 = vpop.f32.mrb[0].mxu0
        %3539 = vmatprep.mubr.bf16.mxu0 0
        %3540 = vmatmul.mubr.bf16.gmra.mrb[0].mxu0 %v3491
        %v3541 = vpop.f32.mrb[0].mxu0
        %v3542 = vadd.f32 0.0, %v3541
        %v3543 = vpop.f32.mrb[0].mxu0
        %v3544 = vpop.f32.mrb[0].mxu0
        %v3545 = vadd.f32 0.0, %v3544
        %v3546 = vpop.f32.mrb[0].mxu0
        %3547 = vmatprep.mubr.bf16.mxu0 0
        %3548 = vmatmul.mubr.bf16.gmra.mrb[0].mxu0 %v3494
        %v3549 = vpop.f32.mrb[0].mxu0
        %v3550 = vadd.f32 0.0, %v3549
        %v3551 = vpop.f32.mrb[0].mxu0
        %v3552 = vpop.f32.mrb[0].mxu0
        %v3553 = vadd.f32 0.0, %v3552
        %v3554 = vpop.f32.mrb[0].mxu0
        %3555 = vmatprep.mubr.bf16.mxu0 0
        %3556 = vmatmul.mubr.bf16.gmra.mrb[0].mxu0 %v3497
        %v3557 = vpop.f32.mrb[0].mxu0
        %v3558 = vadd.f32 0.0, %v3557
        %v3559 = vpop.f32.mrb[0].mxu0
        %v3560 = vpop.f32.mrb[0].mxu0
        %v3561 = vadd.f32 0.0, %v3560
        %v3562 = vpop.f32.mrb[0].mxu0
        %3563 = vdwg.mxu0
        %v3564 = vpack.c.bf16 %v3537, %v3534
        %v3565 = vpack.c.bf16 %v3545, %v3542
        %v3566 = vpack.c.bf16 %v3553, %v3550
        %v3567 = vpack.c.bf16 %v3561, %v3558
        %s3568 = scalar_lea.vmem %s5, 20
        %v3569 = vld [vmem:[%s3568] sm:$0xf]
        %v3571 = vsel %vm755, %v3564, 0
        %v3574 = vsel %vm755, %v3565, 0
        %v3577 = vsel %vm755, %v3566, 0
        %v3580 = vsel %vm755, %v3567, 0
        %v3583 = vsel %vm1345, %v3569, 0
        %3585 = vmatprep.subr.bf16.mxu0 0
        %3586 = vmatpush1.bf16.msra.mxu0 %v3583
        %3587 = vmatprep.subr.bf16.mxu0 0
        %3588 = vmatpush1.bf16.msra.mxu0 0
        %3589 = vmatprep.subr.bf16.mxu0 0
        %3590 = vmatpush1.bf16.msra.mxu0 0
        %3591 = vmatprep.subr.bf16.mxu0 0
        %3592 = vmatpush1.bf16.msra.mxu0 0
        %3593 = vmatprep.subr.bf16.mxu0 0
        %3594 = vmatpush1.bf16.msra.mxu0 0
        %3595 = vmatprep.subr.bf16.mxu0 0
        %3596 = vmatpush1.bf16.msra.mxu0 0
        %3597 = vmatprep.subr.bf16.mxu0 0
        %3598 = vmatpush1.bf16.msra.mxu0 0
        %3599 = vmatprep.subr.bf16.mxu0 0
        %3600 = vmatpush1.bf16.msra.mxu0 0
        %3601 = vmatprep.subr.bf16.mxu0 0
        %3602 = vmatpush1.bf16.msra.mxu0 0
        %3603 = vmatprep.subr.bf16.mxu0 0
        %3604 = vmatpush1.bf16.msra.mxu0 0
        %3605 = vmatprep.subr.bf16.mxu0 0
        %3606 = vmatpush1.bf16.msra.mxu0 0
        %3607 = vmatprep.subr.bf16.mxu0 0
        %3608 = vmatpush1.bf16.msra.mxu0 0
        %3609 = vmatprep.subr.bf16.mxu0 0
        %3610 = vmatpush1.bf16.msra.mxu0 0
        %3611 = vmatprep.subr.bf16.mxu0 0
        %3612 = vmatpush1.bf16.msra.mxu0 0
        %3613 = vmatprep.subr.bf16.mxu0 0
        %3614 = vmatpush1.bf16.msra.mxu0 0
        %3615 = vmatprep.subr.bf16.mxu0 0
        %3616 = vmatpush1.bf16.msra.mxu0 0
        %3617 = vmatprep.mubr.bf16.mxu0 0
        %3618 = vmatmul.mubr.bf16.gmra.mrb[0].mxu0 %v3571
        %v3619 = vpop.f32.mrb[0].mxu0
        %v3620 = vadd.f32 0.0, %v3619
        %v3621 = vpop.f32.mrb[0].mxu0
        %v3622 = vpop.f32.mrb[0].mxu0
        %v3623 = vadd.f32 0.0, %v3622
        %v3624 = vpop.f32.mrb[0].mxu0
        %3625 = vmatprep.mubr.bf16.mxu0 0
        %3626 = vmatmul.mubr.bf16.gmra.mrb[0].mxu0 %v3574
        %v3627 = vpop.f32.mrb[0].mxu0
        %v3628 = vadd.f32 0.0, %v3627
        %v3629 = vpop.f32.mrb[0].mxu0
        %v3630 = vpop.f32.mrb[0].mxu0
        %v3631 = vadd.f32 0.0, %v3630
        %v3632 = vpop.f32.mrb[0].mxu0
        %3633 = vmatprep.mubr.bf16.mxu0 0
        %3634 = vmatmul.mubr.bf16.gmra.mrb[0].mxu0 %v3577
        %v3635 = vpop.f32.mrb[0].mxu0
        %v3636 = vadd.f32 0.0, %v3635
        %v3637 = vpop.f32.mrb[0].mxu0
        %v3638 = vpop.f32.mrb[0].mxu0
        %v3639 = vadd.f32 0.0, %v3638
        %v3640 = vpop.f32.mrb[0].mxu0
        %3641 = vmatprep.mubr.bf16.mxu0 0
        %3642 = vmatmul.mubr.bf16.gmra.mrb[0].mxu0 %v3580
        %v3643 = vpop.f32.mrb[0].mxu0
        %v3644 = vadd.f32 0.0, %v3643
        %v3645 = vpop.f32.mrb[0].mxu0
        %v3646 = vpop.f32.mrb[0].mxu0
        %v3647 = vadd.f32 0.0, %v3646
        %v3648 = vpop.f32.mrb[0].mxu0
        %3649 = vdwg.mxu0
        %v3651 = vsel %vm755, %v3263, 0
        %v3654 = vsel %vm755, %v3264, 0
        %v3657 = vsel %vm755, %v3265, 0
        %v3660 = vsel %vm755, %v3266, 0
        %v3663 = vsel %vm1345, %v3268, 0
        %3665 = vmatprep.subr.bf16.mxu0 0
        %3666 = vmatpush1.bf16.msra.mxu0 %v3663
        %3667 = vmatprep.subr.bf16.mxu0 0
        %3668 = vmatpush1.bf16.msra.mxu0 0
        %3669 = vmatprep.subr.bf16.mxu0 0
        %3670 = vmatpush1.bf16.msra.mxu0 0
        %3671 = vmatprep.subr.bf16.mxu0 0
        %3672 = vmatpush1.bf16.msra.mxu0 0
        %3673 = vmatprep.subr.bf16.mxu0 0
        %3674 = vmatpush1.bf16.msra.mxu0 0
        %3675 = vmatprep.subr.bf16.mxu0 0
        %3676 = vmatpush1.bf16.msra.mxu0 0
        %3677 = vmatprep.subr.bf16.mxu0 0
        %3678 = vmatpush1.bf16.msra.mxu0 0
        %3679 = vmatprep.subr.bf16.mxu0 0
        %3680 = vmatpush1.bf16.msra.mxu0 0
        %3681 = vmatprep.subr.bf16.mxu0 0
        %3682 = vmatpush1.bf16.msra.mxu0 0
        %3683 = vmatprep.subr.bf16.mxu0 0
        %3684 = vmatpush1.bf16.msra.mxu0 0
        %3685 = vmatprep.subr.bf16.mxu0 0
        %3686 = vmatpush1.bf16.msra.mxu0 0
        %3687 = vmatprep.subr.bf16.mxu0 0
        %3688 = vmatpush1.bf16.msra.mxu0 0
        %3689 = vmatprep.subr.bf16.mxu0 0
        %3690 = vmatpush1.bf16.msra.mxu0 0
        %3691 = vmatprep.subr.bf16.mxu0 0
        %3692 = vmatpush1.bf16.msra.mxu0 0
        %3693 = vmatprep.subr.bf16.mxu0 0
        %3694 = vmatpush1.bf16.msra.mxu0 0
        %3695 = vmatprep.subr.bf16.mxu0 0
        %3696 = vmatpush1.bf16.msra.mxu0 0
        %3697 = vmatprep.mubr.bf16.mxu0 0
        %3698 = vmatmul.mubr.bf16.gmra.mrb[0].mxu0 %v3651
        %v3699 = vpop.f32.mrb[0].mxu0
        %v3700 = vadd.f32 %v3620, %v3699
        %v3701 = vpop.f32.mrb[0].mxu0
        %v3702 = vpop.f32.mrb[0].mxu0
        %v3703 = vadd.f32 %v3623, %v3702
        %v3704 = vpop.f32.mrb[0].mxu0
        %3705 = vmatprep.mubr.bf16.mxu0 0
        %3706 = vmatmul.mubr.bf16.gmra.mrb[0].mxu0 %v3654
        %v3707 = vpop.f32.mrb[0].mxu0
        %v3708 = vadd.f32 %v3628, %v3707
        %v3709 = vpop.f32.mrb[0].mxu0
        %v3710 = vpop.f32.mrb[0].mxu0
        %v3711 = vadd.f32 %v3631, %v3710
        %v3712 = vpop.f32.mrb[0].mxu0
        %3713 = vmatprep.mubr.bf16.mxu0 0
        %3714 = vmatmul.mubr.bf16.gmra.mrb[0].mxu0 %v3657
        %v3715 = vpop.f32.mrb[0].mxu0
        %v3716 = vadd.f32 %v3636, %v3715
        %v3717 = vpop.f32.mrb[0].mxu0
        %v3718 = vpop.f32.mrb[0].mxu0
        %v3719 = vadd.f32 %v3639, %v3718
        %v3720 = vpop.f32.mrb[0].mxu0
        %3721 = vmatprep.mubr.bf16.mxu0 0
        %3722 = vmatmul.mubr.bf16.gmra.mrb[0].mxu0 %v3660
        %v3723 = vpop.f32.mrb[0].mxu0
        %v3724 = vadd.f32 %v3644, %v3723
        %v3725 = vpop.f32.mrb[0].mxu0
        %v3726 = vpop.f32.mrb[0].mxu0
        %v3727 = vadd.f32 %v3647, %v3726
        %v3728 = vpop.f32.mrb[0].mxu0
        %3729 = vdwg.mxu0
        %s3730 = scalar_lea.vmem [#allocation2], 384
        %v3731 = vld [vmem:[%s3730] sm:$0xff]
        %v3732 = vld [vmem:[%s3730 + $0x8] sm:$0xff]
        %v3733 = vld [vmem:[%s3730 + $0x10] sm:$0xff]
        %v3734 = vld [vmem:[%s3730 + $0x18] sm:$0xff]
        %v3735 = vld [vmem:[%s3730 + $0x20] sm:$0xff]
        %v3736 = vld [vmem:[%s3730 + $0x28] sm:$0xff]
        %v3737 = vld [vmem:[%s3730 + $0x30] sm:$0xff]
        %v3738 = vld [vmem:[%s3730 + $0x38] sm:$0xff]
        %3739 = vrot.lane.b32.xlu0 %v2968, 112
        %v3740 = vpop.permute.xlu0 %3739
        %3741 = vrot.lane.b32.xlu0 %v2969, 112
        %v3742 = vpop.permute.xlu0 %3741
        %3743 = vrot.lane.b32.xlu0 %v2970, 112
        %v3744 = vpop.permute.xlu0 %3743
        %3745 = vrot.lane.b32.xlu0 %v2971, 112
        %v3746 = vpop.permute.xlu0 %3745
        %3747 = vrot.lane.b32.xlu0 %v2968, 80
        %v3748 = vpop.permute.xlu0 %3747
        %3749 = vrot.lane.b32.xlu0 %v2969, 80
        %v3750 = vpop.permute.xlu0 %3749
        %3751 = vrot.lane.b32.xlu0 %v2970, 80
        %v3752 = vpop.permute.xlu0 %3751
        %3753 = vrot.lane.b32.xlu0 %v2971, 80
        %v3754 = vpop.permute.xlu0 %3753
        %v3756 = vsel %vm755, %v3740, 0
        %v3759 = vsel %vm755, %v3742, 0
        %v3762 = vsel %vm755, %v3744, 0
        %v3765 = vsel %vm755, %v3746, 0
        %v3768 = vsel %vm755, %v3748, 0
        %v3771 = vsel %vm755, %v3750, 0
        %v3774 = vsel %vm755, %v3752, 0
        %v3777 = vsel %vm755, %v3754, 0
        %3779 = vmatprep.subr.bf16.mxu0 0
        %3780 = vmatpush1.bf16.xpose.msra.mxu0 %v3768
        %3781 = vmatprep.subr.bf16.mxu0 0
        %3782 = vmatpush1.bf16.xpose.msra.mxu0 %v3771
        %3783 = vmatprep.subr.bf16.mxu0 0
        %3784 = vmatpush1.bf16.xpose.msra.mxu0 %v3774
        %3785 = vmatprep.subr.bf16.mxu0 0
        %3786 = vmatpush1.bf16.xpose.msra.mxu0 %v3777
        %3787 = vmatprep.subr.bf16.mxu0 0
        %3788 = vmatpush1.bf16.xpose.msra.mxu0 0
        %3789 = vmatprep.subr.bf16.mxu0 0
        %3790 = vmatpush1.bf16.xpose.msra.mxu0 0
        %3791 = vmatprep.subr.bf16.mxu0 0
        %3792 = vmatpush1.bf16.xpose.msra.mxu0 0
        %3793 = vmatprep.subr.bf16.mxu0 0
        %3794 = vmatpush1.bf16.xpose.msra.mxu0 0
        %3795 = vmatprep.subr.bf16.mxu0 0
        %3796 = vmatpush1.bf16.xpose.msra.mxu0 0
        %3797 = vmatprep.subr.bf16.mxu0 0
        %3798 = vmatpush1.bf16.xpose.msra.mxu0 0
        %3799 = vmatprep.subr.bf16.mxu0 0
        %3800 = vmatpush1.bf16.xpose.msra.mxu0 0
        %3801 = vmatprep.subr.bf16.mxu0 0
        %3802 = vmatpush1.bf16.xpose.msra.mxu0 0
        %3803 = vmatprep.subr.bf16.mxu0 0
        %3804 = vmatpush1.bf16.xpose.msra.mxu0 0
        %3805 = vmatprep.subr.bf16.mxu0 0
        %3806 = vmatpush1.bf16.xpose.msra.mxu0 0
        %3807 = vmatprep.subr.bf16.mxu0 0
        %3808 = vmatpush1.bf16.xpose.msra.mxu0 0
        %3809 = vmatprep.subr.bf16.mxu0 0
        %3810 = vmatpush1.bf16.xpose.msra.mxu0 0
        %3811 = vmatprep.mubr.bf16.mxu0 0
        %3812 = vmatmul.mubr.bf16.gmra.mrb[0].mxu0 %v3756
        %v3813 = vpop.f32.mrb[0].mxu0
        %v3814 = vadd.f32 %v3731, %v3813
        %v3815 = vpop.f32.mrb[0].mxu0
        %v3816 = vpop.f32.mrb[0].mxu0
        %v3817 = vadd.f32 %v3732, %v3816
        %v3818 = vpop.f32.mrb[0].mxu0
        %3819 = vmatprep.mubr.bf16.mxu0 0
        %3820 = vmatmul.mubr.bf16.gmra.mrb[0].mxu0 %v3759
        %v3821 = vpop.f32.mrb[0].mxu0
        %v3822 = vadd.f32 %v3733, %v3821
        %v3823 = vpop.f32.mrb[0].mxu0
        %v3824 = vpop.f32.mrb[0].mxu0
        %v3825 = vadd.f32 %v3734, %v3824
        %v3826 = vpop.f32.mrb[0].mxu0
        %3827 = vmatprep.mubr.bf16.mxu0 0
        %3828 = vmatmul.mubr.bf16.gmra.mrb[0].mxu0 %v3762
        %v3829 = vpop.f32.mrb[0].mxu0
        %v3830 = vadd.f32 %v3735, %v3829
        %v3831 = vpop.f32.mrb[0].mxu0
        %v3832 = vpop.f32.mrb[0].mxu0
        %v3833 = vadd.f32 %v3736, %v3832
        %v3834 = vpop.f32.mrb[0].mxu0
        %3835 = vmatprep.mubr.bf16.mxu0 0
        %3836 = vmatmul.mubr.bf16.gmra.mrb[0].mxu0 %v3765
        %v3837 = vpop.f32.mrb[0].mxu0
        %v3838 = vadd.f32 %v3737, %v3837
        %v3839 = vpop.f32.mrb[0].mxu0
        %v3840 = vpop.f32.mrb[0].mxu0
        %v3841 = vadd.f32 %v3738, %v3840
        %v3842 = vpop.f32.mrb[0].mxu0
        %3843 = vdwg.mxu0
        %v3844 = vsel %vm845, %v3814, -inf
        %3845 = vmax.xlane.f32.xlu0 %v3844
        %v3846 = vpop.xlane.xlu0 %3845
        %v3847 = vsel %vm845, %v3817, -inf
        %3848 = vmax.xlane.f32.xlu0 %v3847
        %v3849 = vpop.xlane.xlu0 %3848
        %v3850 = vsel %vm845, %v3822, -inf
        %3851 = vmax.xlane.f32.xlu0 %v3850
        %v3852 = vpop.xlane.xlu0 %3851
        %v3853 = vsel %vm845, %v3825, -inf
        %3854 = vmax.xlane.f32.xlu0 %v3853
        %v3855 = vpop.xlane.xlu0 %3854
        %v3856 = vsel %vm845, %v3830, -inf
        %3857 = vmax.xlane.f32.xlu0 %v3856
        %v3858 = vpop.xlane.xlu0 %3857
        %v3859 = vsel %vm845, %v3833, -inf
        %3860 = vmax.xlane.f32.xlu0 %v3859
        %v3861 = vpop.xlane.xlu0 %3860
        %v3862 = vsel %vm845, %v3838, -inf
        %3863 = vmax.xlane.f32.xlu0 %v3862
        %v3864 = vpop.xlane.xlu0 %3863
        %v3865 = vsel %vm845, %v3841, -inf
        %3866 = vmax.xlane.f32.xlu0 %v3865
        %v3867 = vpop.xlane.xlu0 %3866
        %v3868 = vsub.f32 %v3814, %v3846
        %v3869 = vsub.f32 %v3817, %v3849
        %v3870 = vsub.f32 %v3822, %v3852
        %v3871 = vsub.f32 %v3825, %v3855
        %v3872 = vsub.f32 %v3830, %v3858
        %v3873 = vsub.f32 %v3833, %v3861
        %v3874 = vsub.f32 %v3838, %v3864
        %v3875 = vsub.f32 %v3841, %v3867
        %v3876 = vmul.f32 %v3868, 1.442695
        %v3877 = vpow.pop %v3876
        %v3878 = vmul.f32 %v3869, 1.442695
        %v3879 = vpow.pop %v3878
        %v3880 = vmul.f32 %v3870, 1.442695
        %v3881 = vpow.pop %v3880
        %v3882 = vmul.f32 %v3871, 1.442695
        %v3883 = vpow.pop %v3882
        %v3884 = vmul.f32 %v3872, 1.442695
        %v3885 = vpow.pop %v3884
        %v3886 = vmul.f32 %v3873, 1.442695
        %v3887 = vpow.pop %v3886
        %v3888 = vmul.f32 %v3874, 1.442695
        %v3889 = vpow.pop %v3888
        %v3890 = vmul.f32 %v3875, 1.442695
        %v3891 = vpow.pop %v3890
        %v3892 = vsel %vm845, %v3877, 0.0
        %3893 = vadd.xlane.f32.xlu0 %v3892
        %v3894 = vpop.xlane.xlu0 %3893
        %v3895 = vsel %vm845, %v3879, 0.0
        %3896 = vadd.xlane.f32.xlu0 %v3895
        %v3897 = vpop.xlane.xlu0 %3896
        %v3898 = vsel %vm845, %v3881, 0.0
        %3899 = vadd.xlane.f32.xlu0 %v3898
        %v3900 = vpop.xlane.xlu0 %3899
        %v3901 = vsel %vm845, %v3883, 0.0
        %3902 = vadd.xlane.f32.xlu0 %v3901
        %v3903 = vpop.xlane.xlu0 %3902
        %v3904 = vsel %vm845, %v3885, 0.0
        %3905 = vadd.xlane.f32.xlu0 %v3904
        %v3906 = vpop.xlane.xlu0 %3905
        %v3907 = vsel %vm845, %v3887, 0.0
        %3908 = vadd.xlane.f32.xlu0 %v3907
        %v3909 = vpop.xlane.xlu0 %3908
        %v3910 = vsel %vm845, %v3889, 0.0
        %3911 = vadd.xlane.f32.xlu0 %v3910
        %v3912 = vpop.xlane.xlu0 %3911
        %v3913 = vsel %vm845, %v3891, 0.0
        %3914 = vadd.xlane.f32.xlu0 %v3913
        %v3915 = vpop.xlane.xlu0 %3914
        %v3916 = vrcp.pop %v3894
        %v3917 = vrcp.pop %v3897
        %v3918 = vrcp.pop %v3900
        %v3919 = vrcp.pop %v3903
        %v3920 = vrcp.pop %v3906
        %v3921 = vrcp.pop %v3909
        %v3922 = vrcp.pop %v3912
        %v3923 = vrcp.pop %v3915
        %v3924 = vmul.f32 %v3877, %v3916
        %v3925 = vmul.f32 %v3879, %v3917
        %v3926 = vmul.f32 %v3881, %v3918
        %v3927 = vmul.f32 %v3883, %v3919
        %v3928 = vmul.f32 %v3885, %v3920
        %v3929 = vmul.f32 %v3887, %v3921
        %v3930 = vmul.f32 %v3889, %v3922
        %v3931 = vmul.f32 %v3891, %v3923
        %v3932 = vpack.c.bf16 %v3925, %v3924
        %v3933 = vpack.c.bf16 %v3927, %v3926
        %v3934 = vpack.c.bf16 %v3929, %v3928
        %v3935 = vpack.c.bf16 %v3931, %v3930
        %3936 = vrot.lane.b32.xlu0 %v2968, 48
        %v3937 = vpop.permute.xlu0 %3936
        %3938 = vrot.lane.b32.xlu0 %v2969, 48
        %v3939 = vpop.permute.xlu0 %3938
        %3940 = vrot.lane.b32.xlu0 %v2970, 48
        %v3941 = vpop.permute.xlu0 %3940
        %3942 = vrot.lane.b32.xlu0 %v2971, 48
        %v3943 = vpop.permute.xlu0 %3942
        %v3949 = vsel %vm845, %v3932, 0
        %v3952 = vsel %vm845, %v3933, 0
        %v3955 = vsel %vm845, %v3934, 0
        %v3958 = vsel %vm845, %v3935, 0
        %3960 = vmatprep.subr.bf16.mxu0 0
        %3961 = vmatpush1.bf16.msra.mxu0 %v3937
        %3962 = vmatprep.subr.bf16.mxu0 0
        %3963 = vmatpush1.bf16.msra.mxu0 %v3939
        %3964 = vmatprep.subr.bf16.mxu0 0
        %3965 = vmatpush1.bf16.msra.mxu0 %v3941
        %3966 = vmatprep.subr.bf16.mxu0 0
        %3967 = vmatpush1.bf16.msra.mxu0 %v3943
        %3968 = vmatprep.subr.bf16.mxu0 0
        %3969 = vmatpush1.bf16.msra.mxu0 0
        %3970 = vmatprep.subr.bf16.mxu0 0
        %3971 = vmatpush1.bf16.msra.mxu0 0
        %3972 = vmatprep.subr.bf16.mxu0 0
        %3973 = vmatpush1.bf16.msra.mxu0 0
        %3974 = vmatprep.subr.bf16.mxu0 0
        %3975 = vmatpush1.bf16.msra.mxu0 0
        %3976 = vmatprep.subr.bf16.mxu0 0
        %3977 = vmatpush1.bf16.msra.mxu0 0
        %3978 = vmatprep.subr.bf16.mxu0 0
        %3979 = vmatpush1.bf16.msra.mxu0 0
        %3980 = vmatprep.subr.bf16.mxu0 0
        %3981 = vmatpush1.bf16.msra.mxu0 0
        %3982 = vmatprep.subr.bf16.mxu0 0
        %3983 = vmatpush1.bf16.msra.mxu0 0
        %3984 = vmatprep.subr.bf16.mxu0 0
        %3985 = vmatpush1.bf16.msra.mxu0 0
        %3986 = vmatprep.subr.bf16.mxu0 0
        %3987 = vmatpush1.bf16.msra.mxu0 0
        %3988 = vmatprep.subr.bf16.mxu0 0
        %3989 = vmatpush1.bf16.msra.mxu0 0
        %3990 = vmatprep.subr.bf16.mxu0 0
        %3991 = vmatpush1.bf16.msra.mxu0 0
        %3992 = vmatprep.mubr.bf16.mxu0 0
        %3993 = vmatmul.mubr.bf16.gmra.mrb[0].mxu0 %v3949
        %v3994 = vpop.f32.mrb[0].mxu0
        %v3995 = vadd.f32 0.0, %v3994
        %v3996 = vpop.f32.mrb[0].mxu0
        %v3997 = vpop.f32.mrb[0].mxu0
        %v3998 = vadd.f32 0.0, %v3997
        %v3999 = vpop.f32.mrb[0].mxu0
        %4000 = vmatprep.mubr.bf16.mxu0 0
        %4001 = vmatmul.mubr.bf16.gmra.mrb[0].mxu0 %v3952
        %v4002 = vpop.f32.mrb[0].mxu0
        %v4003 = vadd.f32 0.0, %v4002
        %v4004 = vpop.f32.mrb[0].mxu0
        %v4005 = vpop.f32.mrb[0].mxu0
        %v4006 = vadd.f32 0.0, %v4005
        %v4007 = vpop.f32.mrb[0].mxu0
        %4008 = vmatprep.mubr.bf16.mxu0 0
        %4009 = vmatmul.mubr.bf16.gmra.mrb[0].mxu0 %v3955
        %v4010 = vpop.f32.mrb[0].mxu0
        %v4011 = vadd.f32 0.0, %v4010
        %v4012 = vpop.f32.mrb[0].mxu0
        %v4013 = vpop.f32.mrb[0].mxu0
        %v4014 = vadd.f32 0.0, %v4013
        %v4015 = vpop.f32.mrb[0].mxu0
        %4016 = vmatprep.mubr.bf16.mxu0 0
        %4017 = vmatmul.mubr.bf16.gmra.mrb[0].mxu0 %v3958
        %v4018 = vpop.f32.mrb[0].mxu0
        %v4019 = vadd.f32 0.0, %v4018
        %v4020 = vpop.f32.mrb[0].mxu0
        %v4021 = vpop.f32.mrb[0].mxu0
        %v4022 = vadd.f32 0.0, %v4021
        %v4023 = vpop.f32.mrb[0].mxu0
        %4024 = vdwg.mxu0
        %v4025 = vpack.c.bf16 %v3998, %v3995
        %v4026 = vpack.c.bf16 %v4006, %v4003
        %v4027 = vpack.c.bf16 %v4014, %v4011
        %v4028 = vpack.c.bf16 %v4022, %v4019
        %s4029 = scalar_lea.vmem %s5, 24
        %v4030 = vld [vmem:[%s4029] sm:$0xf]
        %v4032 = vsel %vm755, %v4025, 0
        %v4035 = vsel %vm755, %v4026, 0
        %v4038 = vsel %vm755, %v4027, 0
        %v4041 = vsel %vm755, %v4028, 0
        %v4044 = vsel %vm1345, %v4030, 0
        %4046 = vmatprep.subr.bf16.mxu0 0
        %4047 = vmatpush1.bf16.msra.mxu0 %v4044
        %4048 = vmatprep.subr.bf16.mxu0 0
        %4049 = vmatpush1.bf16.msra.mxu0 0
        %4050 = vmatprep.subr.bf16.mxu0 0
        %4051 = vmatpush1.bf16.msra.mxu0 0
        %4052 = vmatprep.subr.bf16.mxu0 0
        %4053 = vmatpush1.bf16.msra.mxu0 0
        %4054 = vmatprep.subr.bf16.mxu0 0
        %4055 = vmatpush1.bf16.msra.mxu0 0
        %4056 = vmatprep.subr.bf16.mxu0 0
        %4057 = vmatpush1.bf16.msra.mxu0 0
        %4058 = vmatprep.subr.bf16.mxu0 0
        %4059 = vmatpush1.bf16.msra.mxu0 0
        %4060 = vmatprep.subr.bf16.mxu0 0
        %4061 = vmatpush1.bf16.msra.mxu0 0
        %4062 = vmatprep.subr.bf16.mxu0 0
        %4063 = vmatpush1.bf16.msra.mxu0 0
        %4064 = vmatprep.subr.bf16.mxu0 0
        %4065 = vmatpush1.bf16.msra.mxu0 0
        %4066 = vmatprep.subr.bf16.mxu0 0
        %4067 = vmatpush1.bf16.msra.mxu0 0
        %4068 = vmatprep.subr.bf16.mxu0 0
        %4069 = vmatpush1.bf16.msra.mxu0 0
        %4070 = vmatprep.subr.bf16.mxu0 0
        %4071 = vmatpush1.bf16.msra.mxu0 0
        %4072 = vmatprep.subr.bf16.mxu0 0
        %4073 = vmatpush1.bf16.msra.mxu0 0
        %4074 = vmatprep.subr.bf16.mxu0 0
        %4075 = vmatpush1.bf16.msra.mxu0 0
        %4076 = vmatprep.subr.bf16.mxu0 0
        %4077 = vmatpush1.bf16.msra.mxu0 0
        %4078 = vmatprep.mubr.bf16.mxu0 0
        %4079 = vmatmul.mubr.bf16.gmra.mrb[0].mxu0 %v4032
        %v4080 = vpop.f32.mrb[0].mxu0
        %v4081 = vadd.f32 0.0, %v4080
        %v4082 = vpop.f32.mrb[0].mxu0
        %v4083 = vpop.f32.mrb[0].mxu0
        %v4084 = vadd.f32 0.0, %v4083
        %v4085 = vpop.f32.mrb[0].mxu0
        %4086 = vmatprep.mubr.bf16.mxu0 0
        %4087 = vmatmul.mubr.bf16.gmra.mrb[0].mxu0 %v4035
        %v4088 = vpop.f32.mrb[0].mxu0
        %v4089 = vadd.f32 0.0, %v4088
        %v4090 = vpop.f32.mrb[0].mxu0
        %v4091 = vpop.f32.mrb[0].mxu0
        %v4092 = vadd.f32 0.0, %v4091
        %v4093 = vpop.f32.mrb[0].mxu0
        %4094 = vmatprep.mubr.bf16.mxu0 0
        %4095 = vmatmul.mubr.bf16.gmra.mrb[0].mxu0 %v4038
        %v4096 = vpop.f32.mrb[0].mxu0
        %v4097 = vadd.f32 0.0, %v4096
        %v4098 = vpop.f32.mrb[0].mxu0
        %v4099 = vpop.f32.mrb[0].mxu0
        %v4100 = vadd.f32 0.0, %v4099
        %v4101 = vpop.f32.mrb[0].mxu0
        %4102 = vmatprep.mubr.bf16.mxu0 0
        %4103 = vmatmul.mubr.bf16.gmra.mrb[0].mxu0 %v4041
        %v4104 = vpop.f32.mrb[0].mxu0
        %v4105 = vadd.f32 0.0, %v4104
        %v4106 = vpop.f32.mrb[0].mxu0
        %v4107 = vpop.f32.mrb[0].mxu0
        %v4108 = vadd.f32 0.0, %v4107
        %v4109 = vpop.f32.mrb[0].mxu0
        %4110 = vdwg.mxu0
        %v4111 = vadd.f32 %v3700, %v4081
        %v4112 = vadd.f32 %v3703, %v4084
        %v4113 = vadd.f32 %v3708, %v4089
        %v4114 = vadd.f32 %v3711, %v4092
        %v4115 = vadd.f32 %v3716, %v4097
        %v4116 = vadd.f32 %v3719, %v4100
        %v4117 = vadd.f32 %v3724, %v4105
        %v4118 = vadd.f32 %v3727, %v4108
        %s4119 = scalar_lea.vmem [#allocation2], 448
        %v4120 = vld [vmem:[%s4119] sm:$0xff]
        %v4121 = vld [vmem:[%s4119 + $0x8] sm:$0xff]
        %v4122 = vld [vmem:[%s4119 + $0x10] sm:$0xff]
        %v4123 = vld [vmem:[%s4119 + $0x18] sm:$0xff]
        %v4124 = vld [vmem:[%s4119 + $0x20] sm:$0xff]
        %v4125 = vld [vmem:[%s4119 + $0x28] sm:$0xff]
        %v4126 = vld [vmem:[%s4119 + $0x30] sm:$0xff]
        %v4127 = vld [vmem:[%s4119 + $0x38] sm:$0xff]
        %4128 = vrot.lane.b32.xlu0 %v2968, 104
        %v4129 = vpop.permute.xlu0 %4128
        %4130 = vrot.lane.b32.xlu0 %v2969, 104
        %v4131 = vpop.permute.xlu0 %4130
        %4132 = vrot.lane.b32.xlu0 %v2970, 104
        %v4133 = vpop.permute.xlu0 %4132
        %4134 = vrot.lane.b32.xlu0 %v2971, 104
        %v4135 = vpop.permute.xlu0 %4134
        %4136 = vrot.lane.b32.xlu0 %v2968, 72
        %v4137 = vpop.permute.xlu0 %4136
        %4138 = vrot.lane.b32.xlu0 %v2969, 72
        %v4139 = vpop.permute.xlu0 %4138
        %4140 = vrot.lane.b32.xlu0 %v2970, 72
        %v4141 = vpop.permute.xlu0 %4140
        %4142 = vrot.lane.b32.xlu0 %v2971, 72
        %v4143 = vpop.permute.xlu0 %4142
        %v4145 = vsel %vm755, %v4129, 0
        %v4148 = vsel %vm755, %v4131, 0
        %v4151 = vsel %vm755, %v4133, 0
        %v4154 = vsel %vm755, %v4135, 0
        %v4157 = vsel %vm755, %v4137, 0
        %v4160 = vsel %vm755, %v4139, 0
        %v4163 = vsel %vm755, %v4141, 0
        %v4166 = vsel %vm755, %v4143, 0
        %4168 = vmatprep.subr.bf16.mxu0 0
        %4169 = vmatpush1.bf16.xpose.msra.mxu0 %v4157
        %4170 = vmatprep.subr.bf16.mxu0 0
        %4171 = vmatpush1.bf16.xpose.msra.mxu0 %v4160
        %4172 = vmatprep.subr.bf16.mxu0 0
        %4173 = vmatpush1.bf16.xpose.msra.mxu0 %v4163
        %4174 = vmatprep.subr.bf16.mxu0 0
        %4175 = vmatpush1.bf16.xpose.msra.mxu0 %v4166
        %4176 = vmatprep.subr.bf16.mxu0 0
        %4177 = vmatpush1.bf16.xpose.msra.mxu0 0
        %4178 = vmatprep.subr.bf16.mxu0 0
        %4179 = vmatpush1.bf16.xpose.msra.mxu0 0
        %4180 = vmatprep.subr.bf16.mxu0 0
        %4181 = vmatpush1.bf16.xpose.msra.mxu0 0
        %4182 = vmatprep.subr.bf16.mxu0 0
        %4183 = vmatpush1.bf16.xpose.msra.mxu0 0
        %4184 = vmatprep.subr.bf16.mxu0 0
        %4185 = vmatpush1.bf16.xpose.msra.mxu0 0
        %4186 = vmatprep.subr.bf16.mxu0 0
        %4187 = vmatpush1.bf16.xpose.msra.mxu0 0
        %4188 = vmatprep.subr.bf16.mxu0 0
        %4189 = vmatpush1.bf16.xpose.msra.mxu0 0
        %4190 = vmatprep.subr.bf16.mxu0 0
        %4191 = vmatpush1.bf16.xpose.msra.mxu0 0
        %4192 = vmatprep.subr.bf16.mxu0 0
        %4193 = vmatpush1.bf16.xpose.msra.mxu0 0
        %4194 = vmatprep.subr.bf16.mxu0 0
        %4195 = vmatpush1.bf16.xpose.msra.mxu0 0
        %4196 = vmatprep.subr.bf16.mxu0 0
        %4197 = vmatpush1.bf16.xpose.msra.mxu0 0
        %4198 = vmatprep.subr.bf16.mxu0 0
        %4199 = vmatpush1.bf16.xpose.msra.mxu0 0
        %4200 = vmatprep.mubr.bf16.mxu0 0
        %4201 = vmatmul.mubr.bf16.gmra.mrb[0].mxu0 %v4145
        %v4202 = vpop.f32.mrb[0].mxu0
        %v4203 = vadd.f32 %v4120, %v4202
        %v4204 = vpop.f32.mrb[0].mxu0
        %v4205 = vpop.f32.mrb[0].mxu0
        %v4206 = vadd.f32 %v4121, %v4205
        %v4207 = vpop.f32.mrb[0].mxu0
        %4208 = vmatprep.mubr.bf16.mxu0 0
        %4209 = vmatmul.mubr.bf16.gmra.mrb[0].mxu0 %v4148
        %v4210 = vpop.f32.mrb[0].mxu0
        %v4211 = vadd.f32 %v4122, %v4210
        %v4212 = vpop.f32.mrb[0].mxu0
        %v4213 = vpop.f32.mrb[0].mxu0
        %v4214 = vadd.f32 %v4123, %v4213
        %v4215 = vpop.f32.mrb[0].mxu0
        %4216 = vmatprep.mubr.bf16.mxu0 0
        %4217 = vmatmul.mubr.bf16.gmra.mrb[0].mxu0 %v4151
        %v4218 = vpop.f32.mrb[0].mxu0
        %v4219 = vadd.f32 %v4124, %v4218
        %v4220 = vpop.f32.mrb[0].mxu0
        %v4221 = vpop.f32.mrb[0].mxu0
        %v4222 = vadd.f32 %v4125, %v4221
        %v4223 = vpop.f32.mrb[0].mxu0
        %4224 = vmatprep.mubr.bf16.mxu0 0
        %4225 = vmatmul.mubr.bf16.gmra.mrb[0].mxu0 %v4154
        %v4226 = vpop.f32.mrb[0].mxu0
        %v4227 = vadd.f32 %v4126, %v4226
        %v4228 = vpop.f32.mrb[0].mxu0
        %v4229 = vpop.f32.mrb[0].mxu0
        %v4230 = vadd.f32 %v4127, %v4229
        %v4231 = vpop.f32.mrb[0].mxu0
        %4232 = vdwg.mxu0
        %v4233 = vsel %vm845, %v4203, -inf
        %4234 = vmax.xlane.f32.xlu0 %v4233
        %v4235 = vpop.xlane.xlu0 %4234
        %v4236 = vsel %vm845, %v4206, -inf
        %4237 = vmax.xlane.f32.xlu0 %v4236
        %v4238 = vpop.xlane.xlu0 %4237
        %v4239 = vsel %vm845, %v4211, -inf
        %4240 = vmax.xlane.f32.xlu0 %v4239
        %v4241 = vpop.xlane.xlu0 %4240
        %v4242 = vsel %vm845, %v4214, -inf
        %4243 = vmax.xlane.f32.xlu0 %v4242
        %v4244 = vpop.xlane.xlu0 %4243
        %v4245 = vsel %vm845, %v4219, -inf
        %4246 = vmax.xlane.f32.xlu0 %v4245
        %v4247 = vpop.xlane.xlu0 %4246
        %v4248 = vsel %vm845, %v4222, -inf
        %4249 = vmax.xlane.f32.xlu0 %v4248
        %v4250 = vpop.xlane.xlu0 %4249
        %v4251 = vsel %vm845, %v4227, -inf
        %4252 = vmax.xlane.f32.xlu0 %v4251
        %v4253 = vpop.xlane.xlu0 %4252
        %v4254 = vsel %vm845, %v4230, -inf
        %4255 = vmax.xlane.f32.xlu0 %v4254
        %v4256 = vpop.xlane.xlu0 %4255
        %v4257 = vsub.f32 %v4203, %v4235
        %v4258 = vsub.f32 %v4206, %v4238
        %v4259 = vsub.f32 %v4211, %v4241
        %v4260 = vsub.f32 %v4214, %v4244
        %v4261 = vsub.f32 %v4219, %v4247
        %v4262 = vsub.f32 %v4222, %v4250
        %v4263 = vsub.f32 %v4227, %v4253
        %v4264 = vsub.f32 %v4230, %v4256
        %v4265 = vmul.f32 %v4257, 1.442695
        %v4266 = vpow.pop %v4265
        %v4267 = vmul.f32 %v4258, 1.442695
        %v4268 = vpow.pop %v4267
        %v4269 = vmul.f32 %v4259, 1.442695
        %v4270 = vpow.pop %v4269
        %v4271 = vmul.f32 %v4260, 1.442695
        %v4272 = vpow.pop %v4271
        %v4273 = vmul.f32 %v4261, 1.442695
        %v4274 = vpow.pop %v4273
        %v4275 = vmul.f32 %v4262, 1.442695
        %v4276 = vpow.pop %v4275
        %v4277 = vmul.f32 %v4263, 1.442695
        %v4278 = vpow.pop %v4277
        %v4279 = vmul.f32 %v4264, 1.442695
        %v4280 = vpow.pop %v4279
        %v4281 = vsel %vm845, %v4266, 0.0
        %4282 = vadd.xlane.f32.xlu0 %v4281
        %v4283 = vpop.xlane.xlu0 %4282
        %v4284 = vsel %vm845, %v4268, 0.0
        %4285 = vadd.xlane.f32.xlu0 %v4284
        %v4286 = vpop.xlane.xlu0 %4285
        %v4287 = vsel %vm845, %v4270, 0.0
        %4288 = vadd.xlane.f32.xlu0 %v4287
        %v4289 = vpop.xlane.xlu0 %4288
        %v4290 = vsel %vm845, %v4272, 0.0
        %4291 = vadd.xlane.f32.xlu0 %v4290
        %v4292 = vpop.xlane.xlu0 %4291
        %v4293 = vsel %vm845, %v4274, 0.0
        %4294 = vadd.xlane.f32.xlu0 %v4293
        %v4295 = vpop.xlane.xlu0 %4294
        %v4296 = vsel %vm845, %v4276, 0.0
        %4297 = vadd.xlane.f32.xlu0 %v4296
        %v4298 = vpop.xlane.xlu0 %4297
        %v4299 = vsel %vm845, %v4278, 0.0
        %4300 = vadd.xlane.f32.xlu0 %v4299
        %v4301 = vpop.xlane.xlu0 %4300
        %v4302 = vsel %vm845, %v4280, 0.0
        %4303 = vadd.xlane.f32.xlu0 %v4302
        %v4304 = vpop.xlane.xlu0 %4303
        %v4305 = vrcp.pop %v4283
        %v4306 = vrcp.pop %v4286
        %v4307 = vrcp.pop %v4289
        %v4308 = vrcp.pop %v4292
        %v4309 = vrcp.pop %v4295
        %v4310 = vrcp.pop %v4298
        %v4311 = vrcp.pop %v4301
        %v4312 = vrcp.pop %v4304
        %v4313 = vmul.f32 %v4266, %v4305
        %v4314 = vmul.f32 %v4268, %v4306
        %v4315 = vmul.f32 %v4270, %v4307
        %v4316 = vmul.f32 %v4272, %v4308
        %v4317 = vmul.f32 %v4274, %v4309
        %v4318 = vmul.f32 %v4276, %v4310
        %v4319 = vmul.f32 %v4278, %v4311
        %v4320 = vmul.f32 %v4280, %v4312
        %v4321 = vpack.c.bf16 %v4314, %v4313
        %v4322 = vpack.c.bf16 %v4316, %v4315
        %v4323 = vpack.c.bf16 %v4318, %v4317
        %v4324 = vpack.c.bf16 %v4320, %v4319
        %4325 = vrot.lane.b32.xlu0 %v2968, 40
        %v4326 = vpop.permute.xlu0 %4325
        %4327 = vrot.lane.b32.xlu0 %v2969, 40
        %v4328 = vpop.permute.xlu0 %4327
        %4329 = vrot.lane.b32.xlu0 %v2970, 40
        %v4330 = vpop.permute.xlu0 %4329
        %4331 = vrot.lane.b32.xlu0 %v2971, 40
        %v4332 = vpop.permute.xlu0 %4331
        %v4338 = vsel %vm845, %v4321, 0
        %v4341 = vsel %vm845, %v4322, 0
        %v4344 = vsel %vm845, %v4323, 0
        %v4347 = vsel %vm845, %v4324, 0
        %4349 = vmatprep.subr.bf16.mxu0 0
        %4350 = vmatpush1.bf16.msra.mxu0 %v4326
        %4351 = vmatprep.subr.bf16.mxu0 0
        %4352 = vmatpush1.bf16.msra.mxu0 %v4328
        %4353 = vmatprep.subr.bf16.mxu0 0
        %4354 = vmatpush1.bf16.msra.mxu0 %v4330
        %4355 = vmatprep.subr.bf16.mxu0 0
        %4356 = vmatpush1.bf16.msra.mxu0 %v4332
        %4357 = vmatprep.subr.bf16.mxu0 0
        %4358 = vmatpush1.bf16.msra.mxu0 0
        %4359 = vmatprep.subr.bf16.mxu0 0
        %4360 = vmatpush1.bf16.msra.mxu0 0
        %4361 = vmatprep.subr.bf16.mxu0 0
        %4362 = vmatpush1.bf16.msra.mxu0 0
        %4363 = vmatprep.subr.bf16.mxu0 0
        %4364 = vmatpush1.bf16.msra.mxu0 0
        %4365 = vmatprep.subr.bf16.mxu0 0
        %4366 = vmatpush1.bf16.msra.mxu0 0
        %4367 = vmatprep.subr.bf16.mxu0 0
        %4368 = vmatpush1.bf16.msra.mxu0 0
        %4369 = vmatprep.subr.bf16.mxu0 0
        %4370 = vmatpush1.bf16.msra.mxu0 0
        %4371 = vmatprep.subr.bf16.mxu0 0
        %4372 = vmatpush1.bf16.msra.mxu0 0
        %4373 = vmatprep.subr.bf16.mxu0 0
        %4374 = vmatpush1.bf16.msra.mxu0 0
        %4375 = vmatprep.subr.bf16.mxu0 0
        %4376 = vmatpush1.bf16.msra.mxu0 0
        %4377 = vmatprep.subr.bf16.mxu0 0
        %4378 = vmatpush1.bf16.msra.mxu0 0
        %4379 = vmatprep.subr.bf16.mxu0 0
        %4380 = vmatpush1.bf16.msra.mxu0 0
        %4381 = vmatprep.mubr.bf16.mxu0 0
        %4382 = vmatmul.mubr.bf16.gmra.mrb[0].mxu0 %v4338
        %v4383 = vpop.f32.mrb[0].mxu0
        %v4384 = vadd.f32 0.0, %v4383
        %v4385 = vpop.f32.mrb[0].mxu0
        %v4386 = vpop.f32.mrb[0].mxu0
        %v4387 = vadd.f32 0.0, %v4386
        %v4388 = vpop.f32.mrb[0].mxu0
        %4389 = vmatprep.mubr.bf16.mxu0 0
        %4390 = vmatmul.mubr.bf16.gmra.mrb[0].mxu0 %v4341
        %v4391 = vpop.f32.mrb[0].mxu0
        %v4392 = vadd.f32 0.0, %v4391
        %v4393 = vpop.f32.mrb[0].mxu0
        %v4394 = vpop.f32.mrb[0].mxu0
        %v4395 = vadd.f32 0.0, %v4394
        %v4396 = vpop.f32.mrb[0].mxu0
        %4397 = vmatprep.mubr.bf16.mxu0 0
        %4398 = vmatmul.mubr.bf16.gmra.mrb[0].mxu0 %v4344
        %v4399 = vpop.f32.mrb[0].mxu0
        %v4400 = vadd.f32 0.0, %v4399
        %v4401 = vpop.f32.mrb[0].mxu0
        %v4402 = vpop.f32.mrb[0].mxu0
        %v4403 = vadd.f32 0.0, %v4402
        %v4404 = vpop.f32.mrb[0].mxu0
        %4405 = vmatprep.mubr.bf16.mxu0 0
        %4406 = vmatmul.mubr.bf16.gmra.mrb[0].mxu0 %v4347
        %v4407 = vpop.f32.mrb[0].mxu0
        %v4408 = vadd.f32 0.0, %v4407
        %v4409 = vpop.f32.mrb[0].mxu0
        %v4410 = vpop.f32.mrb[0].mxu0
        %v4411 = vadd.f32 0.0, %v4410
        %v4412 = vpop.f32.mrb[0].mxu0
        %4413 = vdwg.mxu0
        %v4414 = vpack.c.bf16 %v4387, %v4384
        %v4415 = vpack.c.bf16 %v4395, %v4392
        %v4416 = vpack.c.bf16 %v4403, %v4400
        %v4417 = vpack.c.bf16 %v4411, %v4408
        %s4418 = scalar_lea.vmem %s5, 28
        %v4419 = vld [vmem:[%s4418] sm:$0xf]
        %v4421 = vsel %vm755, %v4414, 0
        %v4424 = vsel %vm755, %v4415, 0
        %v4427 = vsel %vm755, %v4416, 0
        %v4430 = vsel %vm755, %v4417, 0
        %v4433 = vsel %vm1345, %v4419, 0
        %4435 = vmatprep.subr.bf16.mxu0 0
        %4436 = vmatpush1.bf16.msra.mxu0 %v4433
        %4437 = vmatprep.subr.bf16.mxu0 0
        %4438 = vmatpush1.bf16.msra.mxu0 0
        %4439 = vmatprep.subr.bf16.mxu0 0
        %4440 = vmatpush1.bf16.msra.mxu0 0
        %4441 = vmatprep.subr.bf16.mxu0 0
        %4442 = vmatpush1.bf16.msra.mxu0 0
        %4443 = vmatprep.subr.bf16.mxu0 0
        %4444 = vmatpush1.bf16.msra.mxu0 0
        %4445 = vmatprep.subr.bf16.mxu0 0
        %4446 = vmatpush1.bf16.msra.mxu0 0
        %4447 = vmatprep.subr.bf16.mxu0 0
        %4448 = vmatpush1.bf16.msra.mxu0 0
        %4449 = vmatprep.subr.bf16.mxu0 0
        %4450 = vmatpush1.bf16.msra.mxu0 0
        %4451 = vmatprep.subr.bf16.mxu0 0
        %4452 = vmatpush1.bf16.msra.mxu0 0
        %4453 = vmatprep.subr.bf16.mxu0 0
        %4454 = vmatpush1.bf16.msra.mxu0 0
        %4455 = vmatprep.subr.bf16.mxu0 0
        %4456 = vmatpush1.bf16.msra.mxu0 0
        %4457 = vmatprep.subr.bf16.mxu0 0
        %4458 = vmatpush1.bf16.msra.mxu0 0
        %4459 = vmatprep.subr.bf16.mxu0 0
        %4460 = vmatpush1.bf16.msra.mxu0 0
        %4461 = vmatprep.subr.bf16.mxu0 0
        %4462 = vmatpush1.bf16.msra.mxu0 0
        %4463 = vmatprep.subr.bf16.mxu0 0
        %4464 = vmatpush1.bf16.msra.mxu0 0
        %4465 = vmatprep.subr.bf16.mxu0 0
        %4466 = vmatpush1.bf16.msra.mxu0 0
        %4467 = vmatprep.mubr.bf16.mxu0 0
        %4468 = vmatmul.mubr.bf16.gmra.mrb[0].mxu0 %v4421
        %v4469 = vpop.f32.mrb[0].mxu0
        %v4470 = vadd.f32 0.0, %v4469
        %v4471 = vpop.f32.mrb[0].mxu0
        %v4472 = vpop.f32.mrb[0].mxu0
        %v4473 = vadd.f32 0.0, %v4472
        %v4474 = vpop.f32.mrb[0].mxu0
        %4475 = vmatprep.mubr.bf16.mxu0 0
        %4476 = vmatmul.mubr.bf16.gmra.mrb[0].mxu0 %v4424
        %v4477 = vpop.f32.mrb[0].mxu0
        %v4478 = vadd.f32 0.0, %v4477
        %v4479 = vpop.f32.mrb[0].mxu0
        %v4480 = vpop.f32.mrb[0].mxu0
        %v4481 = vadd.f32 0.0, %v4480
        %v4482 = vpop.f32.mrb[0].mxu0
        %4483 = vmatprep.mubr.bf16.mxu0 0
        %4484 = vmatmul.mubr.bf16.gmra.mrb[0].mxu0 %v4427
        %v4485 = vpop.f32.mrb[0].mxu0
        %v4486 = vadd.f32 0.0, %v4485
        %v4487 = vpop.f32.mrb[0].mxu0
        %v4488 = vpop.f32.mrb[0].mxu0
        %v4489 = vadd.f32 0.0, %v4488
        %v4490 = vpop.f32.mrb[0].mxu0
        %4491 = vmatprep.mubr.bf16.mxu0 0
        %4492 = vmatmul.mubr.bf16.gmra.mrb[0].mxu0 %v4430
        %v4493 = vpop.f32.mrb[0].mxu0
        %v4494 = vadd.f32 0.0, %v4493
        %v4495 = vpop.f32.mrb[0].mxu0
        %v4496 = vpop.f32.mrb[0].mxu0
        %v4497 = vadd.f32 0.0, %v4496
        %v4498 = vpop.f32.mrb[0].mxu0
        %4499 = vdwg.mxu0
        %v4500 = vadd.f32 %v4111, %v4470
        %v4501 = vadd.f32 %v4112, %v4473
        %v4502 = vadd.f32 %v4113, %v4478
        %v4503 = vadd.f32 %v4114, %v4481
        %v4504 = vadd.f32 %v4115, %v4486
        %v4505 = vadd.f32 %v4116, %v4489
        %v4506 = vadd.f32 %v4117, %v4494
        %v4507 = vadd.f32 %v4118, %v4497
        %v4508 = vlaneseq
        %v4509 = vshrl.u32 %v4508, 7
        %v4510 = vsub.s32 1, %v4509
        %v4511 = vrot.slane %v489, %v4510
        %v4512 = vadd.f32 %v4500, %v4511
        %v4513 = vadd.f32 %v4501, %v4511
        %v4514 = vadd.f32 %v4502, %v4511
        %v4515 = vadd.f32 %v4503, %v4511
        %v4516 = vadd.f32 %v4504, %v4511
        %v4517 = vadd.f32 %v4505, %v4511
        %v4518 = vadd.f32 %v4506, %v4511
        %v4519 = vadd.f32 %v4507, %v4511
        %v4520 = vadd.f32 %v2730, %v4512
        %v4521 = vadd.f32 %v2731, %v4513
        %v4522 = vadd.f32 %v2732, %v4514
        %v4523 = vadd.f32 %v2733, %v4515
        %v4524 = vadd.f32 %v2734, %v4516
        %v4525 = vadd.f32 %v2735, %v4517
        %v4526 = vadd.f32 %v2736, %v4518
        %v4527 = vadd.f32 %v2737, %v4519
        %v4528 = vsel %vm500, %v4520, 0.0
        %4529 = vadd.xlane.f32.xlu0 %v4528
        %v4530 = vpop.xlane.xlu0 %4529
        %v4531 = vsel %vm500, %v4521, 0.0
        %4532 = vadd.xlane.f32.xlu0 %v4531
        %v4533 = vpop.xlane.xlu0 %4532
        %v4534 = vsel %vm500, %v4522, 0.0
        %4535 = vadd.xlane.f32.xlu0 %v4534
        %v4536 = vpop.xlane.xlu0 %4535
        %v4537 = vsel %vm500, %v4523, 0.0
        %4538 = vadd.xlane.f32.xlu0 %v4537
        %v4539 = vpop.xlane.xlu0 %4538
        %v4540 = vsel %vm500, %v4524, 0.0
        %4541 = vadd.xlane.f32.xlu0 %v4540
        %v4542 = vpop.xlane.xlu0 %4541
        %v4543 = vsel %vm500, %v4525, 0.0
        %4544 = vadd.xlane.f32.xlu0 %v4543
        %v4545 = vpop.xlane.xlu0 %4544
        %v4546 = vsel %vm500, %v4526, 0.0
        %4547 = vadd.xlane.f32.xlu0 %v4546
        %v4548 = vpop.xlane.xlu0 %4547
        %v4549 = vsel %vm500, %v4527, 0.0
        %4550 = vadd.xlane.f32.xlu0 %v4549
        %v4551 = vpop.xlane.xlu0 %4550
        %v4552 = vmul.f32 %v4530, %v525
        %v4553 = vmul.f32 %v4533, %v525
        %v4554 = vmul.f32 %v4536, %v525
        %v4555 = vmul.f32 %v4539, %v525
        %v4556 = vmul.f32 %v4542, %v525
        %v4557 = vmul.f32 %v4545, %v525
        %v4558 = vmul.f32 %v4548, %v525
        %v4559 = vmul.f32 %v4551, %v525
        %v4560 = vsub.f32 %v4520, %v4552
        %v4561 = vsub.f32 %v4521, %v4553
        %v4562 = vsub.f32 %v4522, %v4554
        %v4563 = vsub.f32 %v4523, %v4555
        %v4564 = vsub.f32 %v4524, %v4556
        %v4565 = vsub.f32 %v4525, %v4557
        %v4566 = vsub.f32 %v4526, %v4558
        %v4567 = vsub.f32 %v4527, %v4559
        %v4568 = vmul.f32 %v4560, %v4560
        %v4569 = vmul.f32 %v4561, %v4561
        %v4570 = vmul.f32 %v4562, %v4562
        %v4571 = vmul.f32 %v4563, %v4563
        %v4572 = vmul.f32 %v4564, %v4564
        %v4573 = vmul.f32 %v4565, %v4565
        %v4574 = vmul.f32 %v4566, %v4566
        %v4575 = vmul.f32 %v4567, %v4567
        %v4576 = vsel %vm500, %v4568, 0.0
        %4577 = vadd.xlane.f32.xlu0 %v4576
        %v4578 = vpop.xlane.xlu0 %4577
        %v4579 = vsel %vm500, %v4569, 0.0
        %4580 = vadd.xlane.f32.xlu0 %v4579
        %v4581 = vpop.xlane.xlu0 %4580
        %v4582 = vsel %vm500, %v4570, 0.0
        %4583 = vadd.xlane.f32.xlu0 %v4582
        %v4584 = vpop.xlane.xlu0 %4583
        %v4585 = vsel %vm500, %v4571, 0.0
        %4586 = vadd.xlane.f32.xlu0 %v4585
        %v4587 = vpop.xlane.xlu0 %4586
        %v4588 = vsel %vm500, %v4572, 0.0
        %4589 = vadd.xlane.f32.xlu0 %v4588
        %v4590 = vpop.xlane.xlu0 %4589
        %v4591 = vsel %vm500, %v4573, 0.0
        %4592 = vadd.xlane.f32.xlu0 %v4591
        %v4593 = vpop.xlane.xlu0 %4592
        %v4594 = vsel %vm500, %v4574, 0.0
        %4595 = vadd.xlane.f32.xlu0 %v4594
        %v4596 = vpop.xlane.xlu0 %4595
        %v4597 = vsel %vm500, %v4575, 0.0
        %4598 = vadd.xlane.f32.xlu0 %v4597
        %v4599 = vpop.xlane.xlu0 %4598
        %v4600 = vmul.f32 %v4578, %v525
        %v4601 = vmul.f32 %v4581, %v525
        %v4602 = vmul.f32 %v4584, %v525
        %v4603 = vmul.f32 %v4587, %v525
        %v4604 = vmul.f32 %v4590, %v525
        %v4605 = vmul.f32 %v4593, %v525
        %v4606 = vmul.f32 %v4596, %v525
        %v4607 = vmul.f32 %v4599, %v525
        %v4608 = vadd.f32 %v4600, 1e-05
        %v4609 = vadd.f32 %v4601, 1e-05
        %v4610 = vadd.f32 %v4602, 1e-05
        %v4611 = vadd.f32 %v4603, 1e-05
        %v4612 = vadd.f32 %v4604, 1e-05
        %v4613 = vadd.f32 %v4605, 1e-05
        %v4614 = vadd.f32 %v4606, 1e-05
        %v4615 = vadd.f32 %v4607, 1e-05
        %v4616 = vrsqrt.pop %v4608
        %v4617 = vrsqrt.pop %v4609
        %v4618 = vrsqrt.pop %v4610
        %v4619 = vrsqrt.pop %v4611
        %v4620 = vrsqrt.pop %v4612
        %v4621 = vrsqrt.pop %v4613
        %v4622 = vrsqrt.pop %v4614
        %v4623 = vrsqrt.pop %v4615
        %v4624 = vmul.f32 %v4560, %v4616
        %v4625 = vmul.f32 %v4561, %v4617
        %v4626 = vmul.f32 %v4562, %v4618
        %v4627 = vmul.f32 %v4563, %v4619
        %v4628 = vmul.f32 %v4564, %v4620
        %v4629 = vmul.f32 %v4565, %v4621
        %v4630 = vmul.f32 %v4566, %v4622
        %v4631 = vmul.f32 %v4567, %v4623
        %v4632 = vlaneseq
        %v4633 = vshrl.u32 %v4632, 7
        %v4634 = vsub.s32 1, %v4633
        %v4635 = vrot.slane %v486, %v4634
        %v4636 = vmul.f32 %v4624, %v4635
        %v4637 = vmul.f32 %v4625, %v4635
        %v4638 = vmul.f32 %v4626, %v4635
        %v4639 = vmul.f32 %v4627, %v4635
        %v4640 = vmul.f32 %v4628, %v4635
        %v4641 = vmul.f32 %v4629, %v4635
        %v4642 = vmul.f32 %v4630, %v4635
        %v4643 = vmul.f32 %v4631, %v4635
        %v4644 = vlaneseq
        %v4645 = vshrl.u32 %v4644, 7
        %v4646 = vsub.s32 1, %v4645
        %v4647 = vrot.slane %v487, %v4646
        %v4648 = vadd.f32 %v4636, %v4647
        %v4649 = vadd.f32 %v4637, %v4647
        %v4650 = vadd.f32 %v4638, %v4647
        %v4651 = vadd.f32 %v4639, %v4647
        %v4652 = vadd.f32 %v4640, %v4647
        %v4653 = vadd.f32 %v4641, %v4647
        %v4654 = vadd.f32 %v4642, %v4647
        %v4655 = vadd.f32 %v4643, %v4647
        %v4656 = vpack.c.bf16 %v4649, %v4648
        %v4657 = vpack.c.bf16 %v4651, %v4650
        %v4658 = vpack.c.bf16 %v4653, %v4652
        %v4659 = vpack.c.bf16 %v4655, %v4654
        %s4660 = scalar_lea.vmem %s10, 16
        %v4661 = vld [vmem:[%s4660] sm:$0xf]
        %v4662 = vld [vmem:[%s4660 + $0x4] sm:$0xf]
        %v4663 = vld [vmem:[%s4660 + $0x8] sm:$0xf]
        %v4664 = vld [vmem:[%s4660 + $0xc] sm:$0xf]
        %v4665 = vlaneseq
        %v4666 = vshrl.u32 %v4665, 7
        %v4667 = vsub.s32 1, %v4666
        %v4668 = vrot.slane %v490, %v4667
        %v4673 = vunpack.c.l.b16 %v4661
        %v4674 = vunpack.c.l.b16 %v4662
        %v4675 = vunpack.c.l.b16 %v4663
        %v4676 = vunpack.c.l.b16 %v4664
        %v4677 = vpack.c.b16 %v4674, %v4673
        %v4678 = vpack.c.b16 %v4676, %v4675
        %v4682 = vsel %vm500, %v4656, 0
        %v4685 = vsel %vm500, %v4657, 0
        %v4688 = vsel %vm500, %v4658, 0
        %v4691 = vsel %vm500, %v4659, 0
        %4693 = vmatprep.subr.bf16.mxu0 0
        %4694 = vmatpush1.bf16.msra.mxu0 %v4677
        %4695 = vmatprep.subr.bf16.mxu0 0
        %4696 = vmatpush1.bf16.msra.mxu0 %v4678
        %4697 = vmatprep.subr.bf16.mxu0 0
        %4698 = vmatpush1.bf16.msra.mxu0 0
        %4699 = vmatprep.subr.bf16.mxu0 0
        %4700 = vmatpush1.bf16.msra.mxu0 0
        %4701 = vmatprep.subr.bf16.mxu0 0
        %4702 = vmatpush1.bf16.msra.mxu0 0
        %4703 = vmatprep.subr.bf16.mxu0 0
        %4704 = vmatpush1.bf16.msra.mxu0 0
        %4705 = vmatprep.subr.bf16.mxu0 0
        %4706 = vmatpush1.bf16.msra.mxu0 0
        %4707 = vmatprep.subr.bf16.mxu0 0
        %4708 = vmatpush1.bf16.msra.mxu0 0
        %4709 = vmatprep.subr.bf16.mxu0 0
        %4710 = vmatpush1.bf16.msra.mxu0 0
        %4711 = vmatprep.subr.bf16.mxu0 0
        %4712 = vmatpush1.bf16.msra.mxu0 0
        %4713 = vmatprep.subr.bf16.mxu0 0
        %4714 = vmatpush1.bf16.msra.mxu0 0
        %4715 = vmatprep.subr.bf16.mxu0 0
        %4716 = vmatpush1.bf16.msra.mxu0 0
        %4717 = vmatprep.subr.bf16.mxu0 0
        %4718 = vmatpush1.bf16.msra.mxu0 0
        %4719 = vmatprep.subr.bf16.mxu0 0
        %4720 = vmatpush1.bf16.msra.mxu0 0
        %4721 = vmatprep.subr.bf16.mxu0 0
        %4722 = vmatpush1.bf16.msra.mxu0 0
        %4723 = vmatprep.subr.bf16.mxu0 0
        %4724 = vmatpush1.bf16.msra.mxu0 0
        %4725 = vmatprep.mubr.bf16.mxu0 0
        %4726 = vmatmul.mubr.bf16.gmra.mrb[0].mxu0 %v4682
        %v4727 = vpop.f32.mrb[0].mxu0
        %v4728 = vadd.f32 %v4668, %v4727
        %v4729 = vpop.f32.mrb[0].mxu0
        %v4730 = vpop.f32.mrb[0].mxu0
        %v4731 = vadd.f32 %v4668, %v4730
        %v4732 = vpop.f32.mrb[0].mxu0
        %4733 = vmatprep.mubr.bf16.mxu0 0
        %4734 = vmatmul.mubr.bf16.gmra.mrb[0].mxu0 %v4685
        %v4735 = vpop.f32.mrb[0].mxu0
        %v4736 = vadd.f32 %v4668, %v4735
        %v4737 = vpop.f32.mrb[0].mxu0
        %v4738 = vpop.f32.mrb[0].mxu0
        %v4739 = vadd.f32 %v4668, %v4738
        %v4740 = vpop.f32.mrb[0].mxu0
        %4741 = vmatprep.mubr.bf16.mxu0 0
        %4742 = vmatmul.mubr.bf16.gmra.mrb[0].mxu0 %v4688
        %v4743 = vpop.f32.mrb[0].mxu0
        %v4744 = vadd.f32 %v4668, %v4743
        %v4745 = vpop.f32.mrb[0].mxu0
        %v4746 = vpop.f32.mrb[0].mxu0
        %v4747 = vadd.f32 %v4668, %v4746
        %v4748 = vpop.f32.mrb[0].mxu0
        %4749 = vmatprep.mubr.bf16.mxu0 0
        %4750 = vmatmul.mubr.bf16.gmra.mrb[0].mxu0 %v4691
        %v4751 = vpop.f32.mrb[0].mxu0
        %v4752 = vadd.f32 %v4668, %v4751
        %v4753 = vpop.f32.mrb[0].mxu0
        %v4754 = vpop.f32.mrb[0].mxu0
        %v4755 = vadd.f32 %v4668, %v4754
        %v4756 = vpop.f32.mrb[0].mxu0
        %4757 = vdwg.mxu0
        %v4758 = vmul.f32 %v4728, %v4728
        %v4759 = vmul.f32 %v4731, %v4731
        %v4760 = vmul.f32 %v4736, %v4736
        %v4761 = vmul.f32 %v4739, %v4739
        %v4762 = vmul.f32 %v4744, %v4744
        %v4763 = vmul.f32 %v4747, %v4747
        %v4764 = vmul.f32 %v4752, %v4752
        %v4765 = vmul.f32 %v4755, %v4755
        %v4766 = vmul.f32 %v4728, %v4758
        %v4767 = vmul.f32 %v4731, %v4759
        %v4768 = vmul.f32 %v4736, %v4760
        %v4769 = vmul.f32 %v4739, %v4761
        %v4770 = vmul.f32 %v4744, %v4762
        %v4771 = vmul.f32 %v4747, %v4763
        %v4772 = vmul.f32 %v4752, %v4764
        %v4773 = vmul.f32 %v4755, %v4765
        %v4774 = vmul.f32 %v4766, 0.044715
        %v4775 = vmul.f32 %v4767, 0.044715
        %v4776 = vmul.f32 %v4768, 0.044715
        %v4777 = vmul.f32 %v4769, 0.044715
        %v4778 = vmul.f32 %v4770, 0.044715
        %v4779 = vmul.f32 %v4771, 0.044715
        %v4780 = vmul.f32 %v4772, 0.044715
        %v4781 = vmul.f32 %v4773, 0.044715
        %v4782 = vadd.f32 %v4728, %v4774
        %v4783 = vadd.f32 %v4731, %v4775
        %v4784 = vadd.f32 %v4736, %v4776
        %v4785 = vadd.f32 %v4739, %v4777
        %v4786 = vadd.f32 %v4744, %v4778
        %v4787 = vadd.f32 %v4747, %v4779
        %v4788 = vadd.f32 %v4752, %v4780
        %v4789 = vadd.f32 %v4755, %v4781
        %v4790 = vmul.f32 %v4782, 0.7978846
        %v4791 = vmul.f32 %v4783, 0.7978846
        %v4792 = vmul.f32 %v4784, 0.7978846
        %v4793 = vmul.f32 %v4785, 0.7978846
        %v4794 = vmul.f32 %v4786, 0.7978846
        %v4795 = vmul.f32 %v4787, 0.7978846
        %v4796 = vmul.f32 %v4788, 0.7978846
        %v4797 = vmul.f32 %v4789, 0.7978846
        %v4798 = vtanh.pop %v4790
        %v4799 = vtanh.pop %v4791
        %v4800 = vtanh.pop %v4792
        %v4801 = vtanh.pop %v4793
        %v4802 = vtanh.pop %v4794
        %v4803 = vtanh.pop %v4795
        %v4804 = vtanh.pop %v4796
        %v4805 = vtanh.pop %v4797
        %v4806 = vadd.f32 %v4798, 1.0
        %v4807 = vadd.f32 %v4799, 1.0
        %v4808 = vadd.f32 %v4800, 1.0
        %v4809 = vadd.f32 %v4801, 1.0
        %v4810 = vadd.f32 %v4802, 1.0
        %v4811 = vadd.f32 %v4803, 1.0
        %v4812 = vadd.f32 %v4804, 1.0
        %v4813 = vadd.f32 %v4805, 1.0
        %v4814 = vmul.f32 %v4806, 0.5
        %v4815 = vmul.f32 %v4807, 0.5
        %v4816 = vmul.f32 %v4808, 0.5
        %v4817 = vmul.f32 %v4809, 0.5
        %v4818 = vmul.f32 %v4810, 0.5
        %v4819 = vmul.f32 %v4811, 0.5
        %v4820 = vmul.f32 %v4812, 0.5
        %v4821 = vmul.f32 %v4813, 0.5
        %v4822 = vmul.f32 %v4728, %v4814
        %v4823 = vmul.f32 %v4731, %v4815
        %v4824 = vmul.f32 %v4736, %v4816
        %v4825 = vmul.f32 %v4739, %v4817
        %v4826 = vmul.f32 %v4744, %v4818
        %v4827 = vmul.f32 %v4747, %v4819
        %v4828 = vmul.f32 %v4752, %v4820
        %v4829 = vmul.f32 %v4755, %v4821
        %v4830 = vpack.c.bf16 %v4823, %v4822
        %v4831 = vpack.c.bf16 %v4825, %v4824
        %v4832 = vpack.c.bf16 %v4827, %v4826
        %v4833 = vpack.c.bf16 %v4829, %v4828
        %s4834 = scalar_lea.vmem %s12, 64
        %v4835 = vld [vmem:[%s4834] sm:$0xf]
        %v4836 = vld [vmem:[%s4834 + $0x4] sm:$0xf]
        %v4837 = vld [vmem:[%s4834 + $0x8] sm:$0xf]
        %v4838 = vld [vmem:[%s4834 + $0xc] sm:$0xf]
        %v4839 = vld [vmem:[%s4834 + $0x10] sm:$0xf]
        %v4840 = vld [vmem:[%s4834 + $0x14] sm:$0xf]
        %v4841 = vld [vmem:[%s4834 + $0x18] sm:$0xf]
        %v4842 = vld [vmem:[%s4834 + $0x1c] sm:$0xf]
        %v4843 = vld [vmem:[%s4834 + $0x20] sm:$0xf]
        %v4844 = vld [vmem:[%s4834 + $0x24] sm:$0xf]
        %v4845 = vld [vmem:[%s4834 + $0x28] sm:$0xf]
        %v4846 = vld [vmem:[%s4834 + $0x2c] sm:$0xf]
        %v4847 = vld [vmem:[%s4834 + $0x30] sm:$0xf]
        %v4848 = vld [vmem:[%s4834 + $0x34] sm:$0xf]
        %v4849 = vld [vmem:[%s4834 + $0x38] sm:$0xf]
        %v4850 = vld [vmem:[%s4834 + $0x3c] sm:$0xf]
        %v4851 = vlaneseq
        %v4852 = vshrl.u32 %v4851, 7
        %v4853 = vsub.s32 1, %v4852
        %v4854 = vrot.slane %v491, %v4853
        %v4871 = vunpack.c.l.b16 %v4835
        %v4872 = vunpack.c.l.b16 %v4836
        %v4873 = vunpack.c.l.b16 %v4837
        %v4874 = vunpack.c.l.b16 %v4838
        %v4875 = vunpack.c.l.b16 %v4839
        %v4876 = vunpack.c.l.b16 %v4840
        %v4877 = vunpack.c.l.b16 %v4841
        %v4878 = vunpack.c.l.b16 %v4842
        %v4879 = vunpack.c.l.b16 %v4843
        %v4880 = vunpack.c.l.b16 %v4844
        %v4881 = vunpack.c.l.b16 %v4845
        %v4882 = vunpack.c.l.b16 %v4846
        %v4883 = vunpack.c.l.b16 %v4847
        %v4884 = vunpack.c.l.b16 %v4848
        %v4885 = vunpack.c.l.b16 %v4849
        %v4886 = vunpack.c.l.b16 %v4850
        %v4887 = vpack.c.b16 %v4872, %v4871
        %v4888 = vpack.c.b16 %v4874, %v4873
        %v4889 = vpack.c.b16 %v4876, %v4875
        %v4890 = vpack.c.b16 %v4878, %v4877
        %v4891 = vpack.c.b16 %v4880, %v4879
        %v4892 = vpack.c.b16 %v4882, %v4881
        %v4893 = vpack.c.b16 %v4884, %v4883
        %v4894 = vpack.c.b16 %v4886, %v4885
        %4903 = vmatprep.subr.bf16.mxu0 0
        %4904 = vmatpush1.bf16.msra.mxu0 %v4887
        %4905 = vmatprep.subr.bf16.mxu0 0
        %4906 = vmatpush1.bf16.msra.mxu0 %v4888
        %4907 = vmatprep.subr.bf16.mxu0 0
        %4908 = vmatpush1.bf16.msra.mxu0 %v4889
        %4909 = vmatprep.subr.bf16.mxu0 0
        %4910 = vmatpush1.bf16.msra.mxu0 %v4890
        %4911 = vmatprep.subr.bf16.mxu0 0
        %4912 = vmatpush1.bf16.msra.mxu0 %v4891
        %4913 = vmatprep.subr.bf16.mxu0 0
        %4914 = vmatpush1.bf16.msra.mxu0 %v4892
        %4915 = vmatprep.subr.bf16.mxu0 0
        %4916 = vmatpush1.bf16.msra.mxu0 %v4893
        %4917 = vmatprep.subr.bf16.mxu0 0
        %4918 = vmatpush1.bf16.msra.mxu0 %v4894
        %4919 = vmatprep.subr.bf16.mxu0 0
        %4920 = vmatpush1.bf16.msra.mxu0 0
        %4921 = vmatprep.subr.bf16.mxu0 0
        %4922 = vmatpush1.bf16.msra.mxu0 0
        %4923 = vmatprep.subr.bf16.mxu0 0
        %4924 = vmatpush1.bf16.msra.mxu0 0
        %4925 = vmatprep.subr.bf16.mxu0 0
        %4926 = vmatpush1.bf16.msra.mxu0 0
        %4927 = vmatprep.subr.bf16.mxu0 0
        %4928 = vmatpush1.bf16.msra.mxu0 0
        %4929 = vmatprep.subr.bf16.mxu0 0
        %4930 = vmatpush1.bf16.msra.mxu0 0
        %4931 = vmatprep.subr.bf16.mxu0 0
        %4932 = vmatpush1.bf16.msra.mxu0 0
        %4933 = vmatprep.subr.bf16.mxu0 0
        %4934 = vmatpush1.bf16.msra.mxu0 0
        %4935 = vmatprep.mubr.bf16.mxu0 0
        %4936 = vmatmul.mubr.bf16.gmra.mrb[0].mxu0 %v4830
        %v4937 = vpop.f32.mrb[0].mxu0
        %v4938 = vadd.f32 %v4854, %v4937
        %v4939 = vpop.f32.mrb[0].mxu0
        %v4940 = vpop.f32.mrb[0].mxu0
        %v4941 = vadd.f32 %v4854, %v4940
        %v4942 = vpop.f32.mrb[0].mxu0
        %4943 = vmatprep.mubr.bf16.mxu0 0
        %4944 = vmatmul.mubr.bf16.gmra.mrb[0].mxu0 %v4831
        %v4945 = vpop.f32.mrb[0].mxu0
        %v4946 = vadd.f32 %v4854, %v4945
        %v4947 = vpop.f32.mrb[0].mxu0
        %v4948 = vpop.f32.mrb[0].mxu0
        %v4949 = vadd.f32 %v4854, %v4948
        %v4950 = vpop.f32.mrb[0].mxu0
        %4951 = vmatprep.mubr.bf16.mxu0 0
        %4952 = vmatmul.mubr.bf16.gmra.mrb[0].mxu0 %v4832
        %v4953 = vpop.f32.mrb[0].mxu0
        %v4954 = vadd.f32 %v4854, %v4953
        %v4955 = vpop.f32.mrb[0].mxu0
        %v4956 = vpop.f32.mrb[0].mxu0
        %v4957 = vadd.f32 %v4854, %v4956
        %v4958 = vpop.f32.mrb[0].mxu0
        %4959 = vmatprep.mubr.bf16.mxu0 0
        %4960 = vmatmul.mubr.bf16.gmra.mrb[0].mxu0 %v4833
        %v4961 = vpop.f32.mrb[0].mxu0
        %v4962 = vadd.f32 %v4854, %v4961
        %v4963 = vpop.f32.mrb[0].mxu0
        %v4964 = vpop.f32.mrb[0].mxu0
        %v4965 = vadd.f32 %v4854, %v4964
        %v4966 = vpop.f32.mrb[0].mxu0
        %4967 = vdwg.mxu0
        %v4968 = vadd.f32 %v4520, %v4938
        %v4969 = vadd.f32 %v4521, %v4941
        %v4970 = vadd.f32 %v4522, %v4946
        %v4971 = vadd.f32 %v4523, %v4949
        %v4972 = vadd.f32 %v4524, %v4954
        %v4973 = vadd.f32 %v4525, %v4957
        %v4974 = vadd.f32 %v4526, %v4962
        %v4975 = vadd.f32 %v4527, %v4965
        %4976 = vst.msk [vmem:[%s482] sm:$0xff] %vm500, %v4968
        %4977 = vst.msk [vmem:[%s482 + $0x8] sm:$0xff] %vm500, %v4969
        %4978 = vst.msk [vmem:[%s482 + $0x10] sm:$0xff] %vm500, %v4970
        %4979 = vst.msk [vmem:[%s482 + $0x18] sm:$0xff] %vm500, %v4971
        %4980 = vst.msk [vmem:[%s482 + $0x20] sm:$0xff] %vm500, %v4972
        %4981 = vst.msk [vmem:[%s482 + $0x28] sm:$0xff] %vm500, %v4973
        %4982 = vst.msk [vmem:[%s482 + $0x30] sm:$0xff] %vm500, %v4974
        %4983 = vst.msk [vmem:[%s482 + $0x38] sm:$0xff] %vm500, %v4975
        %p4984 = scmp.lt.s32.totalorder %s26, 1
        %s4985 = scalar_select %p4984, %s26, 1
        %s4986 = smul.addr %s4985, 8
        %s4987 = smul.addr %s4986, 8
        %s4988 = scalar_lea.vmem %s14, %s4987
        // Predicated region
        $region81: #{tpu_custom_call.1} parent=75 // pred_check
          %p4989 = pneg %p343
        $region82: #{tpu_custom_call.1} parent=75 // pred_check_branch
          %4991 = sbr.rel (%p4989) target = $region84
        $region83: #{tpu_custom_call.1} parent=75 // pred_region
          _
        $region84: #{tpu_custom_call.1} parent=75 // pred_fallthru
          _
      $region76: #{tpu_custom_call.1} parent=5 // pred_fallthru
        _
      %p4992 = scmp.le.s32.totalorder 2, %s21
      // Predicated region
      $region85: #{tpu_custom_call.1} parent=5 // pred_check
        %p4993 = pneg %p4992
      $region86: #{tpu_custom_call.1} parent=5 // pred_check_branch
        %4995 = sbr.rel (%p4993) target = $region88
      $region87: #{tpu_custom_call.1} parent=5 // pred_region
        %s4996 = ssub.s32 %s21, 2
        // Predicated region
        $region89: #{tpu_custom_call.1} parent=87 // pred_check
          %p4997 = pneg %p349
        $region90: #{tpu_custom_call.1} parent=87 // pred_check_branch
          %4999 = sbr.rel (%p4997) target = $region92
        $region91: #{tpu_custom_call.1} parent=87 // pred_region
          %p5000 = scmp.lt.s32.totalorder %s27, 1
          %s5001 = scalar_select %p5000, %s27, 1
          %s5002 = smul.addr %s5001, 8
          %s5003 = smul.addr %s5002, 8
          %s5004 = scalar_lea.vmem %s14, %s5003
        $region92: #{tpu_custom_call.1} parent=87 // pred_fallthru
          _
      $region88: #{tpu_custom_call.1} parent=5 // pred_fallthru
        _
    $region6: #{tpu_custom_call.1} parent=1 // loop_footer
      %s25 = sadd.s32 1, %s21
    $region7: #{tpu_custom_call.1} parent=1 // loop_footer_branch
      %20 = sbr.rel target = $region3
    $region8: #{tpu_custom_call.1} parent=1 // loop_exit
      _
    %5005 = vsyncpa [#allocation3], 1
    %s5006 = scalar_lea.sflag [#allocation3], 1
    %5007 = vsyncpa %s5006, 1

</llo_original>
